<compile_context>
chip_gen: v5e
topology: v5e:2x2
jax: 0.10.0
libtpu: 0.0.40
codegen_flags: <defaults>
</compile_context>

<pallas_src>
import functools

import jax
import jax.numpy as jnp
from jax.experimental import pallas as pl
from jax.experimental.pallas import tpu as pltpu

_PADL = 8   # left W pad: keeps interior stores / center view sublane-aligned
_PADR = 1   # only 1 zero column is read on the right (physical tiling pads it)


def _pad_tail(a, tail):
    """Zero-pad the trailing len(tail) dims of `a` up to the sizes in `tail`."""
    pads = [(0, 0)] * (a.ndim - len(tail)) + [
        (0, t - s) for s, t in zip(a.shape[-len(tail):], tail)
    ]
    return jnp.pad(a, pads)


def _round_up(a, m):
    return (a + m - 1) // m * m


def _vmem_budget_bytes(B, H, W, C, Wp, n_stages):
    """Generous VMEM estimate (slab + live temporaries + io + weights), clamped
    so it is valid on v5e/v6e (128 MiB) and v7x (64 MiB) alike."""
    slab = B * (H + 2) * _round_up(Wp, 8) * C * 4
    act = B * (H + 2) * W * C * 4            # one W-shifted view / live stage act
    out = B * H * W * C * 2                  # bf16 head output block
    wts = n_stages * (C * C * 2 + 9 * C * 4 + C * 4)
    est = slab + 8 * act + 4 * out + 2 * wts + (4 << 20)
    return int(min(max(est, 32 << 20), 48 << 20))


def _iterative_rotation_fused_kernel(x_hbm, dw_ref, pw_ref, pbh_ref, gamma_ref,
                                     beta_ref, out_ref, pad_ref, dma_sem, *,
                                     n_stages, n_bn_stages, eps):
    """Fused forward: n_bn_stages x (SepConv+BN+Swish) then head SepConv.

    x_hbm     : (B, H, W, 128)  f32 input in HBM/ANY, channels zero-padded to 128
    dw_ref    : (n_stages, 3, 3, 128)   depthwise 3x3 weights (f32, zero-padded)
    pw_ref    : (n_stages, 128, 128)    pointwise weights (bf16, zero-padded)
    pbh_ref   : (1, 128)                head pointwise bias (BN stages need none)
    gamma_ref : (max(n_bn_stages,1), 1, 128)  BN gamma (only first n_bn_stages used)
    beta_ref  : (max(n_bn_stages,1), 1, 128)  BN beta
    out_ref   : (B, H, W, 128)  bf16 lane-dense head output (sliced outside)
    pad_ref   : (B, H+2, 8+W+1, 128) f32 VMEM slab for in-kernel 'same' padding
    dma_sem   : (1,) DMA semaphore for the input HBM->slab copy
    """
    B, H, W, C = out_ref.shape
    Wp = pad_ref.shape[2]
    zdt = pad_ref.dtype

    # Input goes straight from HBM into the slab interior (no VMEM input block,
    # no VMEM->VMEM staging copy).  Dst window is tile-aligned (offset 8, W%8==0).
    in_cp = pltpu.make_async_copy(
        x_hbm, pad_ref.at[:, 1:1 + H, _PADL:_PADL + W, :], dma_sem.at[0])
    in_cp.start()

    # Zero only the border strips (the interior is overwritten every stage and
    # is being filled by the DMA right now -- disjoint regions, so this overlaps
    # the copy instead of a full-slab zero sweep).
    pad_ref[:, 0:1, :, :] = jnp.zeros((B, 1, Wp, C), zdt)            # top row
    pad_ref[:, 1 + H:2 + H, :, :] = jnp.zeros((B, 1, Wp, C), zdt)    # bottom row
    pad_ref[:, :, 0:_PADL, :] = jnp.zeros((B, H + 2, _PADL, C), zdt)  # left band
    pad_ref[:, :, _PADL + W:Wp, :] = jnp.zeros(
        (B, H + 2, Wp - _PADL - W, C), zdt)                          # right col(s)

    in_cp.wait()

    inv_n = 1.0 / float(B * H * W)

    for i in range(n_stages):                  # static unroll (3 stages here)
        dw_i = dw_ref[i]                       # (3, 3, 128) f32

        # Three W-shifted views, loaded once per stage; kw=1 is sublane-aligned,
        # kw=0/2 relayouts happen once per stage (not per tap).
        xw = [pad_ref[:, :, _PADL - 1 + kw:_PADL - 1 + kw + W, :] for kw in range(3)]

        # Depthwise 3x3, stride 1, 'same' (slab borders are zero).  Accumulator
        # is initialized with the first tap (no zeros+add pass).
        acc = None
        for kh in range(3):
            for kw in range(3):
                tap = xw[kw][:, kh:kh + H, :, :]    # cheap slice on untiled H axis
                term = tap * dw_i[kh, kw]
                acc = term if acc is None else acc + term

        # Pointwise 1x1 conv == channel matmul on the MXU.  bf16 operands,
        # f32 accumulation.  W % 8 == 0 keeps the reshape sublane-tile aligned.
        acc2 = acc.reshape(B * H * W, C).astype(pw_ref.dtype)
        y = jnp.dot(acc2, pw_ref[i], preferred_element_type=jnp.float32)

        if i < n_bn_stages:
            # NOTE: pointwise bias intentionally omitted here -- BatchNorm with
            # batch statistics cancels a per-channel constant exactly.
            # One-pass stats (sum / sum-of-squares over the same live y value),
            # folded into a single scale/shift; rsqrt/sigmoid hit the EUP slot.
            mean = jnp.sum(y, axis=0, keepdims=True) * inv_n
            msq = jnp.sum(y * y, axis=0, keepdims=True) * inv_n
            var = jnp.maximum(msq - mean * mean, 0.0)
            scale = gamma_ref[i] * jax.lax.rsqrt(var + eps)
            shift = beta_ref[i] - mean * scale
            y = y * scale + shift
            y = y * jax.nn.sigmoid(y)           # MemoryEfficientSwish
            # Write back into the slab interior (aligned store) for next stage.
            pad_ref[:, 1:1 + H, _PADL:_PADL + W, :] = y.reshape(B, H, W, C)
        else:
            # Head stage: bias kept, lane-dense bf16 output store (halves the
            # head writeback HBM bytes vs f32).
            y = y + pbh_ref[...]
            out_ref[...] = y.reshape(B, H, W, C).astype(out_ref.dtype)


def iterative_rotation_subnet_forward_nhwc(feat_nhwc, params, iter_step_py):
    """Forward of IterativeRotationSubNet, NHWC in / NHWC out (no transposes)."""
    B, H, W, c_feat = feat_nhwc.shape
    num_layers = params["dw_w"].shape[0]
    num_iteration_steps = params["bn_gamma"].shape[0]
    # zip(range(num_layers), norm_layer, conv_list) iterates min(L, K) times;
    # bn used at loop i is norm_layer[i][iter_step_py].
    n_loop = min(num_layers, num_iteration_steps)
    co = params["head_pw"].shape[1]
    C = 128                                      # lane-padded channel slab width
    assert c_feat <= C and params["head_pw"].shape[0] <= C and co <= C
    # Sublane alignment of interior stores + tile-preserving (B*H*W, C) reshape.
    assert W % 8 == 0, "W must be a multiple of 8 (sublane tiling)"
    Wp = _PADL + W + _PADR

    # ---- wrapper-side layout glue (tiny, fused by XLA) ----------------------
    x = _pad_tail(feat_nhwc.astype(jnp.float32), (C,))               # 91 -> 128

    # Stack + zero-pad weights for all stages (n_loop SepConv+BN+Swish, + head).
    dw = jnp.concatenate(
        [_pad_tail(params["dw_w"][:n_loop], (C,)),
         _pad_tail(params["head_dw"], (C,))[None]], axis=0).astype(jnp.float32)
    pw = jnp.concatenate(
        [_pad_tail(params["pw_w"][:n_loop], (C, C)),
         _pad_tail(params["head_pw"], (C, C))[None]], axis=0).astype(jnp.bfloat16)
    # Only the head bias is needed (BN-with-batch-stats cancels the others).
    pb_head = _pad_tail(params["head_pb"].astype(jnp.float32), (C,)).reshape(1, C)

    if n_loop > 0:
        # Faithful to `bn = norm_layer[i]; bn[iter_step_py]` indexing.
        gamma = _pad_tail(params["bn_gamma"][:n_loop, iter_step_py], (C,))
        beta = _pad_tail(params["bn_beta"][:n_loop, iter_step_py], (C,))
    else:  # dummies (never read); avoids zero-sized pallas inputs
        gamma = jnp.ones((1, C), jnp.float32)
        beta = jnp.zeros((1, C), jnp.float32)
    gamma = gamma.reshape(-1, 1, C).astype(jnp.float32)
    beta = beta.reshape(-1, 1, C).astype(jnp.float32)

    vmem = pl.BlockSpec(memory_space=pltpu.MemorySpace.VMEM)
    kernel = functools.partial(_iterative_rotation_fused_kernel,
                               n_stages=n_loop + 1, n_bn_stages=n_loop, eps=1e-3)
    out128 = pl.pallas_call(
        kernel,
        out_shape=jax.ShapeDtypeStruct((B, H, W, C), jnp.bfloat16),
        in_specs=[pl.BlockSpec(memory_space=pl.ANY)] + [vmem] * 5,
        out_specs=vmem,
        scratch_shapes=[pltpu.VMEM((B, H + 2, Wp, C), jnp.float32),
                        pltpu.SemaphoreType.DMA((1,))],
        compiler_params=pltpu.CompilerParams(
            vmem_limit_bytes=_vmem_budget_bytes(B, H, W, C, Wp, n_loop + 1)),
    )(x, dw, pw, pb_head, gamma, beta)

    # feats = torch.cat([feat], dim=1) with one element == feat.
    return out128[..., :co].astype(jnp.float32)


def iterative_rotation_subnet_forward(feat_nchw, params, iter_step_py):
    """NCHW-convention wrapper (matches the PyTorch module's layout)."""
    x = jnp.transpose(feat_nchw, (0, 2, 3, 1))                       # NCHW->NHWC
    out = iterative_rotation_subnet_forward_nhwc(x, params, iter_step_py)
    return jnp.transpose(out, (0, 3, 1, 2))                          # NHWC->NCHW


def _reference_forward(feat_nchw, params, iter_step_py):
    """Pure-JAX f32 reference (same math incl. BN-stage bias) for validation."""
    x = jnp.transpose(feat_nchw, (0, 2, 3, 1))

    def sep(x, dw, pw, pb):
        B, H, W, C = x.shape
        xp = jnp.pad(x, ((0, 0), (1, 1), (1, 1), (0, 0)))
        acc = jnp.zeros((B, H, W, C), jnp.float32)
        for kh in range(3):
            for kw in range(3):
                acc = acc + xp[:, kh:kh + H, kw:kw + W, :] * dw[kh, kw, :]
        return jnp.einsum("bhwc,cd->bhwd", acc, pw) + pb

    num_layers = params["dw_w"].shape[0]
    num_iteration_steps = params["bn_gamma"].shape[0]
    for i in range(min(num_layers, num_iteration_steps)):
        x = sep(x, params["dw_w"][i], params["pw_w"][i], params["pw_b"][i])
        m = jnp.mean(x, axis=(0, 1, 2), keepdims=True)
        v = jnp.mean((x - m) ** 2, axis=(0, 1, 2), keepdims=True)
        x = (x - m) * jax.lax.rsqrt(v + 1e-3)
        x = x * params["bn_gamma"][i, iter_step_py] + params["bn_beta"][i, iter_step_py]
        x = x * jax.nn.sigmoid(x)
    x = sep(x, params["head_dw"], params["head_pw"], params["head_pb"])
    return jnp.transpose(x, (0, 3, 1, 2))


if __name__ == "__main__":
    # Module hyper-parameters.  conv_list = SeparableConvBlock(91, in_channels),
    # so chaining num_layers > 1 requires in_channels == 91 (and feat has 91 ch).
    in_channels = 91
    num_anchors = 3
    num_classes = 4              # unused in forward
    num_layers = 2
    num_rotation_parameters = 3
    num_iteration_steps = 2
    B, H, W = 2, 8, 8
    C_in_feat = 91
    Co = num_anchors * num_rotation_parameters
    iter_step_py = 1             # python int, used as list index (compile-time)

    key = jax.random.PRNGKey(0)
    ks = jax.random.split(key, 9)
    params = {
        # depthwise weights laid out as (3, 3, C); pointwise as (Cin, Cout)
        "dw_w": 0.1 * jax.random.normal(ks[0], (num_layers, 3, 3, C_in_feat), jnp.float32),
        "pw_w": 0.1 * jax.random.normal(ks[1], (num_layers, C_in_feat, in_channels), jnp.float32),
        "pw_b": 0.05 * jax.random.normal(ks[2], (num_layers, in_channels), jnp.float32),
        # norm_layer[k][j]: outer k = num_iteration_steps, inner j = num_layers
        "bn_gamma": 1.0 + 0.1 * jax.random.normal(
            ks[3], (num_iteration_steps, num_layers, in_channels), jnp.float32),
        "bn_beta": 0.1 * jax.random.normal(
            ks[4], (num_iteration_steps, num_layers, in_channels), jnp.float32),
        "head_dw": 0.1 * jax.random.normal(ks[5], (3, 3, in_channels), jnp.float32),
        "head_pw": 0.1 * jax.random.normal(ks[6], (in_channels, Co), jnp.float32),
        "head_pb": 0.05 * jax.random.normal(ks[7], (Co,), jnp.float32),
    }
    feat = jax.random.normal(ks[8], (B, C_in_feat, H, W), jnp.float32)  # NCHW

    fwd = jax.jit(lambda f: iterative_rotation_subnet_forward(f, params, iter_step_py))
    out = jax.block_until_ready(fwd(feat))

    ref = jax.block_until_ready(_reference_forward(feat, params, iter_step_py))

    assert out.shape == (B, Co, H, W)
    assert bool(jnp.all(jnp.isfinite(out)))
    # Tolerance reflects bf16 MXU operands for the pointwise matmuls (f32
    # accumulation) plus the bf16 head-output store; the f32 reference differs
    # by O(1e-2) at most at these magnitudes.
    assert float(jnp.max(jnp.abs(out - ref))) < 5e-2

    print("KERNEL_OK")
</pallas_src>

<mosaic_0001>
module attributes {stable_mosaic.version = 11 : i64} {
  func.func @_iterative_rotation_fused_kernel(%arg0: memref<2x8x8x128xf32, #tpu.memory_space<any>>, %arg1: memref<3x3x3x128xf32, #tpu.memory_space<vmem>>, %arg2: memref<3x128x128xbf16, #tpu.memory_space<vmem>>, %arg3: memref<1x128xf32, #tpu.memory_space<vmem>>, %arg4: memref<2x1x128xf32, #tpu.memory_space<vmem>>, %arg5: memref<2x1x128xf32, #tpu.memory_space<vmem>>, %arg6: memref<2x8x8x128xbf16, #tpu.memory_space<vmem>>, %arg7: memref<2x10x17x128xf32, #tpu.memory_space<vmem>>, %arg8: memref<1x!tpu.dma_semaphore, #tpu.memory_space<semaphore_mem>>) attributes {dimension_semantics = [], scalar_prefetch = 0 : i64, scratch_operands = 2 : i64, tpu.core_type = #tpu.core_type<tc>} {
    %c0_i32 = arith.constant 0 : i32
    %c0_i32_0 = arith.constant 0 : i32
    %c1_i32 = arith.constant 1 : i32
    %c8_i32 = arith.constant 8 : i32
    %c0_i32_1 = arith.constant 0 : i32
    %0 = tpu.memref_slice %arg7[%c0_i32_0, %c1_i32, %c8_i32, %c0_i32_1] : memref<2x10x17x128xf32, #tpu.memory_space<vmem>> -> memref<2x8x8x128xf32, #tpu.memory_space<vmem>>
    %1 = tpu.memref_slice %arg8[%c0_i32] : memref<1x!tpu.dma_semaphore, #tpu.memory_space<semaphore_mem>> -> memref<1x!tpu.dma_semaphore, #tpu.memory_space<semaphore_mem>>
    %2 = tpu.memref_squeeze %1 : memref<1x!tpu.dma_semaphore, #tpu.memory_space<semaphore_mem>> -> memref<!tpu.dma_semaphore, #tpu.memory_space<semaphore_mem>>
    tpu.enqueue_dma source(%arg0 : memref<2x8x8x128xf32, #tpu.memory_space<any>>) target(%0 : memref<2x8x8x128xf32, #tpu.memory_space<vmem>>) target_semaphore(%2 : memref<!tpu.dma_semaphore, #tpu.memory_space<semaphore_mem>>)
    %cst = arith.constant 0.000000e+00 : f32
    %3 = vector.broadcast %cst : f32 to vector<2x1x17x128xf32>
    %c0 = arith.constant 0 : index
    %c0_2 = arith.constant 0 : index
    %c0_3 = arith.constant 0 : index
    %c0_4 = arith.constant 0 : index
    %4 = vector.load %arg7[%c0, %c0_2, %c0_3, %c0_4] : memref<2x10x17x128xf32, #tpu.memory_space<vmem>>, vector<2x1x17x128xf32>
    tpu.vector_store %arg7[%c0, %c0_2, %c0_3, %c0_4], %3 {strides = array<i32>} : memref<2x10x17x128xf32, #tpu.memory_space<vmem>>, vector<2x1x17x128xf32>,
    %cst_5 = arith.constant 0.000000e+00 : f32
    %5 = vector.broadcast %cst_5 : f32 to vector<2x1x17x128xf32>
    %c0_6 = arith.constant 0 : index
    %c9 = arith.constant 9 : index
    %c0_7 = arith.constant 0 : index
    %c0_8 = arith.constant 0 : index
    %6 = vector.load %arg7[%c0_6, %c9, %c0_7, %c0_8] : memref<2x10x17x128xf32, #tpu.memory_space<vmem>>, vector<2x1x17x128xf32>
    tpu.vector_store %arg7[%c0_6, %c9, %c0_7, %c0_8], %5 {strides = array<i32>} : memref<2x10x17x128xf32, #tpu.memory_space<vmem>>, vector<2x1x17x128xf32>,
    %cst_9 = arith.constant 0.000000e+00 : f32
    %7 = vector.broadcast %cst_9 : f32 to vector<2x10x8x128xf32>
    %c0_10 = arith.constant 0 : index
    %c0_11 = arith.constant 0 : index
    %c0_12 = arith.constant 0 : index
    %c0_13 = arith.constant 0 : index
    %8 = vector.load %arg7[%c0_10, %c0_11, %c0_12, %c0_13] : memref<2x10x17x128xf32, #tpu.memory_space<vmem>>, vector<2x10x8x128xf32>
    tpu.vector_store %arg7[%c0_10, %c0_11, %c0_12, %c0_13], %7 {strides = array<i32>} : memref<2x10x17x128xf32, #tpu.memory_space<vmem>>, vector<2x10x8x128xf32>,
    %cst_14 = arith.constant 0.000000e+00 : f32
    %9 = vector.broadcast %cst_14 : f32 to vector<2x10x1x128xf32>
    %c0_15 = arith.constant 0 : index
    %c0_16 = arith.constant 0 : index
    %c16 = arith.constant 16 : index
    %c0_17 = arith.constant 0 : index
    %10 = vector.load %arg7[%c0_15, %c0_16, %c16, %c0_17] : memref<2x10x17x128xf32, #tpu.memory_space<vmem>>, vector<2x10x1x128xf32>
    tpu.vector_store %arg7[%c0_15, %c0_16, %c16, %c0_17], %9 {strides = array<i32>} : memref<2x10x17x128xf32, #tpu.memory_space<vmem>>, vector<2x10x1x128xf32>,
    %c0_i32_18 = arith.constant 0 : i32
    %c0_i32_19 = arith.constant 0 : i32
    %c1_i32_20 = arith.constant 1 : i32
    %c8_i32_21 = arith.constant 8 : i32
    %c0_i32_22 = arith.constant 0 : i32
    %11 = tpu.memref_slice %arg7[%c0_i32_19, %c1_i32_20, %c8_i32_21, %c0_i32_22] : memref<2x10x17x128xf32, #tpu.memory_space<vmem>> -> memref<2x8x8x128xf32, #tpu.memory_space<vmem>>
    %12 = tpu.memref_slice %arg8[%c0_i32_18] : memref<1x!tpu.dma_semaphore, #tpu.memory_space<semaphore_mem>> -> memref<1x!tpu.dma_semaphore, #tpu.memory_space<semaphore_mem>>
    %13 = tpu.memref_squeeze %12 : memref<1x!tpu.dma_semaphore, #tpu.memory_space<semaphore_mem>> -> memref<!tpu.dma_semaphore, #tpu.memory_space<semaphore_mem>>
    tpu.wait_dma2 semaphore(%13 : memref<!tpu.dma_semaphore, #tpu.memory_space<semaphore_mem>>) src(%arg0 : memref<2x8x8x128xf32, #tpu.memory_space<any>>) dst(%11 : memref<2x8x8x128xf32, #tpu.memory_space<vmem>>)
    %c0_23 = arith.constant 0 : index
    %c0_24 = arith.constant 0 : index
    %c0_25 = arith.constant 0 : index
    %c0_26 = arith.constant 0 : index
    %14 = vector.load %arg1[%c0_23, %c0_24, %c0_25, %c0_26] : memref<3x3x3x128xf32, #tpu.memory_space<vmem>>, vector<1x3x3x128xf32>
    %15 = vector.shape_cast %14 : vector<1x3x3x128xf32> to vector<3x3x128xf32>
    %c0_27 = arith.constant 0 : index
    %c0_28 = arith.constant 0 : index
    %c7 = arith.constant 7 : index
    %c0_29 = arith.constant 0 : index
    %16 = vector.load %arg7[%c0_27, %c0_28, %c7, %c0_29] : memref<2x10x17x128xf32, #tpu.memory_space<vmem>>, vector<2x10x8x128xf32>
    %c0_30 = arith.constant 0 : index
    %c0_31 = arith.constant 0 : index
    %c8 = arith.constant 8 : index
    %c0_32 = arith.constant 0 : index
    %17 = vector.load %arg7[%c0_30, %c0_31, %c8, %c0_32] : memref<2x10x17x128xf32, #tpu.memory_space<vmem>>, vector<2x10x8x128xf32>
    %c0_33 = arith.constant 0 : index
    %c0_34 = arith.constant 0 : index
    %c9_35 = arith.constant 9 : index
    %c0_36 = arith.constant 0 : index
    %18 = vector.load %arg7[%c0_33, %c0_34, %c9_35, %c0_36] : memref<2x10x17x128xf32, #tpu.memory_space<vmem>>, vector<2x10x8x128xf32>
    %19 = vector.extract_strided_slice %16 {offsets = [0, 0, 0, 0], sizes = [2, 8, 8, 128], strides = [1, 1, 1, 1]} : vector<2x10x8x128xf32> to vector<2x8x8x128xf32>
    %20 = vector.extract_strided_slice %15 {offsets = [0, 0, 0], sizes = [1, 1, 128], strides = [1, 1, 1]} : vector<3x3x128xf32> to vector<1x1x128xf32>
    %21 = vector.shape_cast %20 : vector<1x1x128xf32> to vector<128xf32>
    %22 = vector.shape_cast %21 : vector<128xf32> to vector<1x1x1x128xf32>
    %23 = vector.broadcast %22 : vector<1x1x1x128xf32> to vector<2x8x8x128xf32>
    %24 = arith.mulf %19, %23 : vector<2x8x8x128xf32>
    %25 = vector.extract_strided_slice %17 {offsets = [0, 0, 0, 0], sizes = [2, 8, 8, 128], strides = [1, 1, 1, 1]} : vector<2x10x8x128xf32> to vector<2x8x8x128xf32>
    %26 = vector.extract_strided_slice %15 {offsets = [0, 1, 0], sizes = [1, 1, 128], strides = [1, 1, 1]} : vector<3x3x128xf32> to vector<1x1x128xf32>
    %27 = vector.shape_cast %26 : vector<1x1x128xf32> to vector<128xf32>
    %28 = vector.shape_cast %27 : vector<128xf32> to vector<1x1x1x128xf32>
    %29 = vector.broadcast %28 : vector<1x1x1x128xf32> to vector<2x8x8x128xf32>
    %30 = arith.mulf %25, %29 : vector<2x8x8x128xf32>
    %31 = arith.addf %24, %30 : vector<2x8x8x128xf32>
    %32 = vector.extract_strided_slice %18 {offsets = [0, 0, 0, 0], sizes = [2, 8, 8, 128], strides = [1, 1, 1, 1]} : vector<2x10x8x128xf32> to vector<2x8x8x128xf32>
    %33 = vector.extract_strided_slice %15 {offsets = [0, 2, 0], sizes = [1, 1, 128], strides = [1, 1, 1]} : vector<3x3x128xf32> to vector<1x1x128xf32>
    %34 = vector.shape_cast %33 : vector<1x1x128xf32> to vector<128xf32>
    %35 = vector.shape_cast %34 : vector<128xf32> to vector<1x1x1x128xf32>
    %36 = vector.broadcast %35 : vector<1x1x1x128xf32> to vector<2x8x8x128xf32>
    %37 = arith.mulf %32, %36 : vector<2x8x8x128xf32>
    %38 = arith.addf %31, %37 : vector<2x8x8x128xf32>
    %39 = vector.extract_strided_slice %16 {offsets = [0, 1, 0, 0], sizes = [2, 8, 8, 128], strides = [1, 1, 1, 1]} : vector<2x10x8x128xf32> to vector<2x8x8x128xf32>
    %40 = vector.extract_strided_slice %15 {offsets = [1, 0, 0], sizes = [1, 1, 128], strides = [1, 1, 1]} : vector<3x3x128xf32> to vector<1x1x128xf32>
    %41 = vector.shape_cast %40 : vector<1x1x128xf32> to vector<128xf32>
    %42 = vector.shape_cast %41 : vector<128xf32> to vector<1x1x1x128xf32>
    %43 = vector.broadcast %42 : vector<1x1x1x128xf32> to vector<2x8x8x128xf32>
    %44 = arith.mulf %39, %43 : vector<2x8x8x128xf32>
    %45 = arith.addf %38, %44 : vector<2x8x8x128xf32>
    %46 = vector.extract_strided_slice %17 {offsets = [0, 1, 0, 0], sizes = [2, 8, 8, 128], strides = [1, 1, 1, 1]} : vector<2x10x8x128xf32> to vector<2x8x8x128xf32>
    %47 = vector.extract_strided_slice %15 {offsets = [1, 1, 0], sizes = [1, 1, 128], strides = [1, 1, 1]} : vector<3x3x128xf32> to vector<1x1x128xf32>
    %48 = vector.shape_cast %47 : vector<1x1x128xf32> to vector<128xf32>
    %49 = vector.shape_cast %48 : vector<128xf32> to vector<1x1x1x128xf32>
    %50 = vector.broadcast %49 : vector<1x1x1x128xf32> to vector<2x8x8x128xf32>
    %51 = arith.mulf %46, %50 : vector<2x8x8x128xf32>
    %52 = arith.addf %45, %51 : vector<2x8x8x128xf32>
    %53 = vector.extract_strided_slice %18 {offsets = [0, 1, 0, 0], sizes = [2, 8, 8, 128], strides = [1, 1, 1, 1]} : vector<2x10x8x128xf32> to vector<2x8x8x128xf32>
    %54 = vector.extract_strided_slice %15 {offsets = [1, 2, 0], sizes = [1, 1, 128], strides = [1, 1, 1]} : vector<3x3x128xf32> to vector<1x1x128xf32>
    %55 = vector.shape_cast %54 : vector<1x1x128xf32> to vector<128xf32>
    %56 = vector.shape_cast %55 : vector<128xf32> to vector<1x1x1x128xf32>
    %57 = vector.broadcast %56 : vector<1x1x1x128xf32> to vector<2x8x8x128xf32>
    %58 = arith.mulf %53, %57 : vector<2x8x8x128xf32>
    %59 = arith.addf %52, %58 : vector<2x8x8x128xf32>
    %60 = vector.extract_strided_slice %16 {offsets = [0, 2, 0, 0], sizes = [2, 8, 8, 128], strides = [1, 1, 1, 1]} : vector<2x10x8x128xf32> to vector<2x8x8x128xf32>
    %61 = vector.extract_strided_slice %15 {offsets = [2, 0, 0], sizes = [1, 1, 128], strides = [1, 1, 1]} : vector<3x3x128xf32> to vector<1x1x128xf32>
    %62 = vector.shape_cast %61 : vector<1x1x128xf32> to vector<128xf32>
    %63 = vector.shape_cast %62 : vector<128xf32> to vector<1x1x1x128xf32>
    %64 = vector.broadcast %63 : vector<1x1x1x128xf32> to vector<2x8x8x128xf32>
    %65 = arith.mulf %60, %64 : vector<2x8x8x128xf32>
    %66 = arith.addf %59, %65 : vector<2x8x8x128xf32>
    %67 = vector.extract_strided_slice %17 {offsets = [0, 2, 0, 0], sizes = [2, 8, 8, 128], strides = [1, 1, 1, 1]} : vector<2x10x8x128xf32> to vector<2x8x8x128xf32>
    %68 = vector.extract_strided_slice %15 {offsets = [2, 1, 0], sizes = [1, 1, 128], strides = [1, 1, 1]} : vector<3x3x128xf32> to vector<1x1x128xf32>
    %69 = vector.shape_cast %68 : vector<1x1x128xf32> to vector<128xf32>
    %70 = vector.shape_cast %69 : vector<128xf32> to vector<1x1x1x128xf32>
    %71 = vector.broadcast %70 : vector<1x1x1x128xf32> to vector<2x8x8x128xf32>
    %72 = arith.mulf %67, %71 : vector<2x8x8x128xf32>
    %73 = arith.addf %66, %72 : vector<2x8x8x128xf32>
    %74 = vector.extract_strided_slice %18 {offsets = [0, 2, 0, 0], sizes = [2, 8, 8, 128], strides = [1, 1, 1, 1]} : vector<2x10x8x128xf32> to vector<2x8x8x128xf32>
    %75 = vector.extract_strided_slice %15 {offsets = [2, 2, 0], sizes = [1, 1, 128], strides = [1, 1, 1]} : vector<3x3x128xf32> to vector<1x1x128xf32>
    %76 = vector.shape_cast %75 : vector<1x1x128xf32> to vector<128xf32>
    %77 = vector.shape_cast %76 : vector<128xf32> to vector<1x1x1x128xf32>
    %78 = vector.broadcast %77 : vector<1x1x1x128xf32> to vector<2x8x8x128xf32>
    %79 = arith.mulf %74, %78 : vector<2x8x8x128xf32>
    %80 = arith.addf %73, %79 : vector<2x8x8x128xf32>
    %81 = vector.shape_cast %80 : vector<2x8x8x128xf32> to vector<128x128xf32>
    %82 = arith.truncf %81 : vector<128x128xf32> to vector<128x128xbf16>
    %c0_37 = arith.constant 0 : index
    %c0_38 = arith.constant 0 : index
    %c0_39 = arith.constant 0 : index
    %83 = vector.load %arg2[%c0_37, %c0_38, %c0_39] : memref<3x128x128xbf16, #tpu.memory_space<vmem>>, vector<1x128x128xbf16>
    %84 = vector.shape_cast %83 : vector<1x128x128xbf16> to vector<128x128xbf16>
    %cst_40 = arith.constant dense<0.000000e+00> : vector<128x128xf32>
    %85 = tpu.matmul %82, %84, %cst_40 {dimension_numbers = #tpu.dot_dimension_numbers<[1], [0], [0], [1], [0, 0, 1, 1], [], []>} : vector<128x128xbf16>, vector<128x128xbf16>, vector<128x128xf32> -> vector<128x128xf32>
    %cst_41 = arith.constant dense<0.000000e+00> : vector<128xf32>
    %86 = vector.multi_reduction <add>, %85, %cst_41 [0] : vector<128x128xf32> to vector<128xf32>
    %87 = vector.shape_cast %86 : vector<128xf32> to vector<1x128xf32>
    %cst_42 = arith.constant 7.812500e-03 : f32
    %88 = vector.broadcast %cst_42 : f32 to vector<1x128xf32>
    %89 = arith.mulf %87, %88 : vector<1x128xf32>
    %90 = arith.mulf %85, %85 : vector<128x128xf32>
    %cst_43 = arith.constant dense<0.000000e+00> : vector<128xf32>
    %91 = vector.multi_reduction <add>, %90, %cst_43 [0] : vector<128x128xf32> to vector<128xf32>
    %92 = vector.shape_cast %91 : vector<128xf32> to vector<1x128xf32>
    %cst_44 = arith.constant 7.812500e-03 : f32
    %93 = vector.broadcast %cst_44 : f32 to vector<1x128xf32>
    %94 = arith.mulf %92, %93 : vector<1x128xf32>
    %95 = arith.mulf %89, %89 : vector<1x128xf32>
    %96 = arith.subf %94, %95 : vector<1x128xf32>
    %cst_45 = arith.constant 0.000000e+00 : f32
    %97 = vector.broadcast %cst_45 : f32 to vector<1x128xf32>
    %98 = arith.maximumf %96, %97 : vector<1x128xf32>
    %c0_46 = arith.constant 0 : index
    %c0_47 = arith.constant 0 : index
    %c0_48 = arith.constant 0 : index
    %99 = vector.load %arg4[%c0_46, %c0_47, %c0_48] : memref<2x1x128xf32, #tpu.memory_space<vmem>>, vector<1x1x128xf32>
    %100 = vector.shape_cast %99 : vector<1x1x128xf32> to vector<1x128xf32>
    %cst_49 = arith.constant 1.000000e-03 : f32
    %101 = vector.broadcast %cst_49 : f32 to vector<1x128xf32>
    %102 = arith.addf %98, %101 : vector<1x128xf32>
    %103 = math.rsqrt %102 : vector<1x128xf32>
    %104 = arith.mulf %100, %103 : vector<1x128xf32>
    %c0_50 = arith.constant 0 : index
    %c0_51 = arith.constant 0 : index
    %c0_52 = arith.constant 0 : index
    %105 = vector.load %arg5[%c0_50, %c0_51, %c0_52] : memref<2x1x128xf32, #tpu.memory_space<vmem>>, vector<1x1x128xf32>
    %106 = vector.shape_cast %105 : vector<1x1x128xf32> to vector<1x128xf32>
    %107 = arith.mulf %89, %104 : vector<1x128xf32>
    %108 = arith.subf %106, %107 : vector<1x128xf32>
    %109 = vector.broadcast %104 : vector<1x128xf32> to vector<128x128xf32>
    %110 = arith.mulf %85, %109 : vector<128x128xf32>
    %111 = vector.broadcast %108 : vector<1x128xf32> to vector<128x128xf32>
    %112 = arith.addf %110, %111 : vector<128x128xf32>
    %113 = arith.negf %112 : vector<128x128xf32>
    %114 = math.exp %113 : vector<128x128xf32>
    %cst_53 = arith.constant 1.000000e+00 : f32
    %115 = vector.broadcast %cst_53 : f32 to vector<128x128xf32>
    %116 = arith.addf %115, %114 : vector<128x128xf32>
    %117 = arith.divf %115, %116 : vector<128x128xf32>
    %118 = arith.mulf %112, %117 : vector<128x128xf32>
    %119 = vector.shape_cast %118 : vector<128x128xf32> to vector<2x8x8x128xf32>
    %c0_54 = arith.constant 0 : index
    %c1 = arith.constant 1 : index
    %c8_55 = arith.constant 8 : index
    %c0_56 = arith.constant 0 : index
    %120 = vector.load %arg7[%c0_54, %c1, %c8_55, %c0_56] : memref<2x10x17x128xf32, #tpu.memory_space<vmem>>, vector<2x8x8x128xf32>
    tpu.vector_store %arg7[%c0_54, %c1, %c8_55, %c0_56], %119 {strides = array<i32>} : memref<2x10x17x128xf32, #tpu.memory_space<vmem>>, vector<2x8x8x128xf32>,
    %c1_57 = arith.constant 1 : index
    %c0_58 = arith.constant 0 : index
    %c0_59 = arith.constant 0 : index
    %c0_60 = arith.constant 0 : index
    %121 = vector.load %arg1[%c1_57, %c0_58, %c0_59, %c0_60] : memref<3x3x3x128xf32, #tpu.memory_space<vmem>>, vector<1x3x3x128xf32>
    %122 = vector.shape_cast %121 : vector<1x3x3x128xf32> to vector<3x3x128xf32>
    %c0_61 = arith.constant 0 : index
    %c0_62 = arith.constant 0 : index
    %c7_63 = arith.constant 7 : index
    %c0_64 = arith.constant 0 : index
    %123 = vector.load %arg7[%c0_61, %c0_62, %c7_63, %c0_64] : memref<2x10x17x128xf32, #tpu.memory_space<vmem>>, vector<2x10x8x128xf32>
    %c0_65 = arith.constant 0 : index
    %c0_66 = arith.constant 0 : index
    %c8_67 = arith.constant 8 : index
    %c0_68 = arith.constant 0 : index
    %124 = vector.load %arg7[%c0_65, %c0_66, %c8_67, %c0_68] : memref<2x10x17x128xf32, #tpu.memory_space<vmem>>, vector<2x10x8x128xf32>
    %c0_69 = arith.constant 0 : index
    %c0_70 = arith.constant 0 : index
    %c9_71 = arith.constant 9 : index
    %c0_72 = arith.constant 0 : index
    %125 = vector.load %arg7[%c0_69, %c0_70, %c9_71, %c0_72] : memref<2x10x17x128xf32, #tpu.memory_space<vmem>>, vector<2x10x8x128xf32>
    %126 = vector.extract_strided_slice %123 {offsets = [0, 0, 0, 0], sizes = [2, 8, 8, 128], strides = [1, 1, 1, 1]} : vector<2x10x8x128xf32> to vector<2x8x8x128xf32>
    %127 = vector.extract_strided_slice %122 {offsets = [0, 0, 0], sizes = [1, 1, 128], strides = [1, 1, 1]} : vector<3x3x128xf32> to vector<1x1x128xf32>
    %128 = vector.shape_cast %127 : vector<1x1x128xf32> to vector<128xf32>
    %129 = vector.shape_cast %128 : vector<128xf32> to vector<1x1x1x128xf32>
    %130 = vector.broadcast %129 : vector<1x1x1x128xf32> to vector<2x8x8x128xf32>
    %131 = arith.mulf %126, %130 : vector<2x8x8x128xf32>
    %132 = vector.extract_strided_slice %124 {offsets = [0, 0, 0, 0], sizes = [2, 8, 8, 128], strides = [1, 1, 1, 1]} : vector<2x10x8x128xf32> to vector<2x8x8x128xf32>
    %133 = vector.extract_strided_slice %122 {offsets = [0, 1, 0], sizes = [1, 1, 128], strides = [1, 1, 1]} : vector<3x3x128xf32> to vector<1x1x128xf32>
    %134 = vector.shape_cast %133 : vector<1x1x128xf32> to vector<128xf32>
    %135 = vector.shape_cast %134 : vector<128xf32> to vector<1x1x1x128xf32>
    %136 = vector.broadcast %135 : vector<1x1x1x128xf32> to vector<2x8x8x128xf32>
    %137 = arith.mulf %132, %136 : vector<2x8x8x128xf32>
    %138 = arith.addf %131, %137 : vector<2x8x8x128xf32>
    %139 = vector.extract_strided_slice %125 {offsets = [0, 0, 0, 0], sizes = [2, 8, 8, 128], strides = [1, 1, 1, 1]} : vector<2x10x8x128xf32> to vector<2x8x8x128xf32>
    %140 = vector.extract_strided_slice %122 {offsets = [0, 2, 0], sizes = [1, 1, 128], strides = [1, 1, 1]} : vector<3x3x128xf32> to vector<1x1x128xf32>
    %141 = vector.shape_cast %140 : vector<1x1x128xf32> to vector<128xf32>
    %142 = vector.shape_cast %141 : vector<128xf32> to vector<1x1x1x128xf32>
    %143 = vector.broadcast %142 : vector<1x1x1x128xf32> to vector<2x8x8x128xf32>
    %144 = arith.mulf %139, %143 : vector<2x8x8x128xf32>
    %145 = arith.addf %138, %144 : vector<2x8x8x128xf32>
    %146 = vector.extract_strided_slice %123 {offsets = [0, 1, 0, 0], sizes = [2, 8, 8, 128], strides = [1, 1, 1, 1]} : vector<2x10x8x128xf32> to vector<2x8x8x128xf32>
    %147 = vector.extract_strided_slice %122 {offsets = [1, 0, 0], sizes = [1, 1, 128], strides = [1, 1, 1]} : vector<3x3x128xf32> to vector<1x1x128xf32>
    %148 = vector.shape_cast %147 : vector<1x1x128xf32> to vector<128xf32>
    %149 = vector.shape_cast %148 : vector<128xf32> to vector<1x1x1x128xf32>
    %150 = vector.broadcast %149 : vector<1x1x1x128xf32> to vector<2x8x8x128xf32>
    %151 = arith.mulf %146, %150 : vector<2x8x8x128xf32>
    %152 = arith.addf %145, %151 : vector<2x8x8x128xf32>
    %153 = vector.extract_strided_slice %124 {offsets = [0, 1, 0, 0], sizes = [2, 8, 8, 128], strides = [1, 1, 1, 1]} : vector<2x10x8x128xf32> to vector<2x8x8x128xf32>
    %154 = vector.extract_strided_slice %122 {offsets = [1, 1, 0], sizes = [1, 1, 128], strides = [1, 1, 1]} : vector<3x3x128xf32> to vector<1x1x128xf32>
    %155 = vector.shape_cast %154 : vector<1x1x128xf32> to vector<128xf32>
    %156 = vector.shape_cast %155 : vector<128xf32> to vector<1x1x1x128xf32>
    %157 = vector.broadcast %156 : vector<1x1x1x128xf32> to vector<2x8x8x128xf32>
    %158 = arith.mulf %153, %157 : vector<2x8x8x128xf32>
    %159 = arith.addf %152, %158 : vector<2x8x8x128xf32>
    %160 = vector.extract_strided_slice %125 {offsets = [0, 1, 0, 0], sizes = [2, 8, 8, 128], strides = [1, 1, 1, 1]} : vector<2x10x8x128xf32> to vector<2x8x8x128xf32>
    %161 = vector.extract_strided_slice %122 {offsets = [1, 2, 0], sizes = [1, 1, 128], strides = [1, 1, 1]} : vector<3x3x128xf32> to vector<1x1x128xf32>
    %162 = vector.shape_cast %161 : vector<1x1x128xf32> to vector<128xf32>
    %163 = vector.shape_cast %162 : vector<128xf32> to vector<1x1x1x128xf32>
    %164 = vector.broadcast %163 : vector<1x1x1x128xf32> to vector<2x8x8x128xf32>
    %165 = arith.mulf %160, %164 : vector<2x8x8x128xf32>
    %166 = arith.addf %159, %165 : vector<2x8x8x128xf32>
    %167 = vector.extract_strided_slice %123 {offsets = [0, 2, 0, 0], sizes = [2, 8, 8, 128], strides = [1, 1, 1, 1]} : vector<2x10x8x128xf32> to vector<2x8x8x128xf32>
    %168 = vector.extract_strided_slice %122 {offsets = [2, 0, 0], sizes = [1, 1, 128], strides = [1, 1, 1]} : vector<3x3x128xf32> to vector<1x1x128xf32>
    %169 = vector.shape_cast %168 : vector<1x1x128xf32> to vector<128xf32>
    %170 = vector.shape_cast %169 : vector<128xf32> to vector<1x1x1x128xf32>
    %171 = vector.broadcast %170 : vector<1x1x1x128xf32> to vector<2x8x8x128xf32>
    %172 = arith.mulf %167, %171 : vector<2x8x8x128xf32>
    %173 = arith.addf %166, %172 : vector<2x8x8x128xf32>
    %174 = vector.extract_strided_slice %124 {offsets = [0, 2, 0, 0], sizes = [2, 8, 8, 128], strides = [1, 1, 1, 1]} : vector<2x10x8x128xf32> to vector<2x8x8x128xf32>
    %175 = vector.extract_strided_slice %122 {offsets = [2, 1, 0], sizes = [1, 1, 128], strides = [1, 1, 1]} : vector<3x3x128xf32> to vector<1x1x128xf32>
    %176 = vector.shape_cast %175 : vector<1x1x128xf32> to vector<128xf32>
    %177 = vector.shape_cast %176 : vector<128xf32> to vector<1x1x1x128xf32>
    %178 = vector.broadcast %177 : vector<1x1x1x128xf32> to vector<2x8x8x128xf32>
    %179 = arith.mulf %174, %178 : vector<2x8x8x128xf32>
    %180 = arith.addf %173, %179 : vector<2x8x8x128xf32>
    %181 = vector.extract_strided_slice %125 {offsets = [0, 2, 0, 0], sizes = [2, 8, 8, 128], strides = [1, 1, 1, 1]} : vector<2x10x8x128xf32> to vector<2x8x8x128xf32>
    %182 = vector.extract_strided_slice %122 {offsets = [2, 2, 0], sizes = [1, 1, 128], strides = [1, 1, 1]} : vector<3x3x128xf32> to vector<1x1x128xf32>
    %183 = vector.shape_cast %182 : vector<1x1x128xf32> to vector<128xf32>
    %184 = vector.shape_cast %183 : vector<128xf32> to vector<1x1x1x128xf32>
    %185 = vector.broadcast %184 : vector<1x1x1x128xf32> to vector<2x8x8x128xf32>
    %186 = arith.mulf %181, %185 : vector<2x8x8x128xf32>
    %187 = arith.addf %180, %186 : vector<2x8x8x128xf32>
    %188 = vector.shape_cast %187 : vector<2x8x8x128xf32> to vector<128x128xf32>
    %189 = arith.truncf %188 : vector<128x128xf32> to vector<128x128xbf16>
    %c1_73 = arith.constant 1 : index
    %c0_74 = arith.constant 0 : index
    %c0_75 = arith.constant 0 : index
    %190 = vector.load %arg2[%c1_73, %c0_74, %c0_75] : memref<3x128x128xbf16, #tpu.memory_space<vmem>>, vector<1x128x128xbf16>
    %191 = vector.shape_cast %190 : vector<1x128x128xbf16> to vector<128x128xbf16>
    %cst_76 = arith.constant dense<0.000000e+00> : vector<128x128xf32>
    %192 = tpu.matmul %189, %191, %cst_76 {dimension_numbers = #tpu.dot_dimension_numbers<[1], [0], [0], [1], [0, 0, 1, 1], [], []>} : vector<128x128xbf16>, vector<128x128xbf16>, vector<128x128xf32> -> vector<128x128xf32>
    %cst_77 = arith.constant dense<0.000000e+00> : vector<128xf32>
    %193 = vector.multi_reduction <add>, %192, %cst_77 [0] : vector<128x128xf32> to vector<128xf32>
    %194 = vector.shape_cast %193 : vector<128xf32> to vector<1x128xf32>
    %cst_78 = arith.constant 7.812500e-03 : f32
    %195 = vector.broadcast %cst_78 : f32 to vector<1x128xf32>
    %196 = arith.mulf %194, %195 : vector<1x128xf32>
    %197 = arith.mulf %192, %192 : vector<128x128xf32>
    %cst_79 = arith.constant dense<0.000000e+00> : vector<128xf32>
    %198 = vector.multi_reduction <add>, %197, %cst_79 [0] : vector<128x128xf32> to vector<128xf32>
    %199 = vector.shape_cast %198 : vector<128xf32> to vector<1x128xf32>
    %cst_80 = arith.constant 7.812500e-03 : f32
    %200 = vector.broadcast %cst_80 : f32 to vector<1x128xf32>
    %201 = arith.mulf %199, %200 : vector<1x128xf32>
    %202 = arith.mulf %196, %196 : vector<1x128xf32>
    %203 = arith.subf %201, %202 : vector<1x128xf32>
    %cst_81 = arith.constant 0.000000e+00 : f32
    %204 = vector.broadcast %cst_81 : f32 to vector<1x128xf32>
    %205 = arith.maximumf %203, %204 : vector<1x128xf32>
    %c1_82 = arith.constant 1 : index
    %c0_83 = arith.constant 0 : index
    %c0_84 = arith.constant 0 : index
    %206 = vector.load %arg4[%c1_82, %c0_83, %c0_84] : memref<2x1x128xf32, #tpu.memory_space<vmem>>, vector<1x1x128xf32>
    %207 = vector.shape_cast %206 : vector<1x1x128xf32> to vector<1x128xf32>
    %cst_85 = arith.constant 1.000000e-03 : f32
    %208 = vector.broadcast %cst_85 : f32 to vector<1x128xf32>
    %209 = arith.addf %205, %208 : vector<1x128xf32>
    %210 = math.rsqrt %209 : vector<1x128xf32>
    %211 = arith.mulf %207, %210 : vector<1x128xf32>
    %c1_86 = arith.constant 1 : index
    %c0_87 = arith.constant 0 : index
    %c0_88 = arith.constant 0 : index
    %212 = vector.load %arg5[%c1_86, %c0_87, %c0_88] : memref<2x1x128xf32, #tpu.memory_space<vmem>>, vector<1x1x128xf32>
    %213 = vector.shape_cast %212 : vector<1x1x128xf32> to vector<1x128xf32>
    %214 = arith.mulf %196, %211 : vector<1x128xf32>
    %215 = arith.subf %213, %214 : vector<1x128xf32>
    %216 = vector.broadcast %211 : vector<1x128xf32> to vector<128x128xf32>
    %217 = arith.mulf %192, %216 : vector<128x128xf32>
    %218 = vector.broadcast %215 : vector<1x128xf32> to vector<128x128xf32>
    %219 = arith.addf %217, %218 : vector<128x128xf32>
    %220 = arith.negf %219 : vector<128x128xf32>
    %221 = math.exp %220 : vector<128x128xf32>
    %cst_89 = arith.constant 1.000000e+00 : f32
    %222 = vector.broadcast %cst_89 : f32 to vector<128x128xf32>
    %223 = arith.addf %222, %221 : vector<128x128xf32>
    %224 = arith.divf %222, %223 : vector<128x128xf32>
    %225 = arith.mulf %219, %224 : vector<128x128xf32>
    %226 = vector.shape_cast %225 : vector<128x128xf32> to vector<2x8x8x128xf32>
    %c0_90 = arith.constant 0 : index
    %c1_91 = arith.constant 1 : index
    %c8_92 = arith.constant 8 : index
    %c0_93 = arith.constant 0 : index
    %227 = vector.load %arg7[%c0_90, %c1_91, %c8_92, %c0_93] : memref<2x10x17x128xf32, #tpu.memory_space<vmem>>, vector<2x8x8x128xf32>
    tpu.vector_store %arg7[%c0_90, %c1_91, %c8_92, %c0_93], %226 {strides = array<i32>} : memref<2x10x17x128xf32, #tpu.memory_space<vmem>>, vector<2x8x8x128xf32>,
    %c2 = arith.constant 2 : index
    %c0_94 = arith.constant 0 : index
    %c0_95 = arith.constant 0 : index
    %c0_96 = arith.constant 0 : index
    %228 = vector.load %arg1[%c2, %c0_94, %c0_95, %c0_96] : memref<3x3x3x128xf32, #tpu.memory_space<vmem>>, vector<1x3x3x128xf32>
    %229 = vector.shape_cast %228 : vector<1x3x3x128xf32> to vector<3x3x128xf32>
    %c0_97 = arith.constant 0 : index
    %c0_98 = arith.constant 0 : index
    %c7_99 = arith.constant 7 : index
    %c0_100 = arith.constant 0 : index
    %230 = vector.load %arg7[%c0_97, %c0_98, %c7_99, %c0_100] : memref<2x10x17x128xf32, #tpu.memory_space<vmem>>, vector<2x10x8x128xf32>
    %c0_101 = arith.constant 0 : index
    %c0_102 = arith.constant 0 : index
    %c8_103 = arith.constant 8 : index
    %c0_104 = arith.constant 0 : index
    %231 = vector.load %arg7[%c0_101, %c0_102, %c8_103, %c0_104] : memref<2x10x17x128xf32, #tpu.memory_space<vmem>>, vector<2x10x8x128xf32>
    %c0_105 = arith.constant 0 : index
    %c0_106 = arith.constant 0 : index
    %c9_107 = arith.constant 9 : index
    %c0_108 = arith.constant 0 : index
    %232 = vector.load %arg7[%c0_105, %c0_106, %c9_107, %c0_108] : memref<2x10x17x128xf32, #tpu.memory_space<vmem>>, vector<2x10x8x128xf32>
    %233 = vector.extract_strided_slice %230 {offsets = [0, 0, 0, 0], sizes = [2, 8, 8, 128], strides = [1, 1, 1, 1]} : vector<2x10x8x128xf32> to vector<2x8x8x128xf32>
    %234 = vector.extract_strided_slice %229 {offsets = [0, 0, 0], sizes = [1, 1, 128], strides = [1, 1, 1]} : vector<3x3x128xf32> to vector<1x1x128xf32>
    %235 = vector.shape_cast %234 : vector<1x1x128xf32> to vector<128xf32>
    %236 = vector.shape_cast %235 : vector<128xf32> to vector<1x1x1x128xf32>
    %237 = vector.broadcast %236 : vector<1x1x1x128xf32> to vector<2x8x8x128xf32>
    %238 = arith.mulf %233, %237 : vector<2x8x8x128xf32>
    %239 = vector.extract_strided_slice %231 {offsets = [0, 0, 0, 0], sizes = [2, 8, 8, 128], strides = [1, 1, 1, 1]} : vector<2x10x8x128xf32> to vector<2x8x8x128xf32>
    %240 = vector.extract_strided_slice %229 {offsets = [0, 1, 0], sizes = [1, 1, 128], strides = [1, 1, 1]} : vector<3x3x128xf32> to vector<1x1x128xf32>
    %241 = vector.shape_cast %240 : vector<1x1x128xf32> to vector<128xf32>
    %242 = vector.shape_cast %241 : vector<128xf32> to vector<1x1x1x128xf32>
    %243 = vector.broadcast %242 : vector<1x1x1x128xf32> to vector<2x8x8x128xf32>
    %244 = arith.mulf %239, %243 : vector<2x8x8x128xf32>
    %245 = arith.addf %238, %244 : vector<2x8x8x128xf32>
    %246 = vector.extract_strided_slice %232 {offsets = [0, 0, 0, 0], sizes = [2, 8, 8, 128], strides = [1, 1, 1, 1]} : vector<2x10x8x128xf32> to vector<2x8x8x128xf32>
    %247 = vector.extract_strided_slice %229 {offsets = [0, 2, 0], sizes = [1, 1, 128], strides = [1, 1, 1]} : vector<3x3x128xf32> to vector<1x1x128xf32>
    %248 = vector.shape_cast %247 : vector<1x1x128xf32> to vector<128xf32>
    %249 = vector.shape_cast %248 : vector<128xf32> to vector<1x1x1x128xf32>
    %250 = vector.broadcast %249 : vector<1x1x1x128xf32> to vector<2x8x8x128xf32>
    %251 = arith.mulf %246, %250 : vector<2x8x8x128xf32>
    %252 = arith.addf %245, %251 : vector<2x8x8x128xf32>
    %253 = vector.extract_strided_slice %230 {offsets = [0, 1, 0, 0], sizes = [2, 8, 8, 128], strides = [1, 1, 1, 1]} : vector<2x10x8x128xf32> to vector<2x8x8x128xf32>
    %254 = vector.extract_strided_slice %229 {offsets = [1, 0, 0], sizes = [1, 1, 128], strides = [1, 1, 1]} : vector<3x3x128xf32> to vector<1x1x128xf32>
    %255 = vector.shape_cast %254 : vector<1x1x128xf32> to vector<128xf32>
    %256 = vector.shape_cast %255 : vector<128xf32> to vector<1x1x1x128xf32>
    %257 = vector.broadcast %256 : vector<1x1x1x128xf32> to vector<2x8x8x128xf32>
    %258 = arith.mulf %253, %257 : vector<2x8x8x128xf32>
    %259 = arith.addf %252, %258 : vector<2x8x8x128xf32>
    %260 = vector.extract_strided_slice %231 {offsets = [0, 1, 0, 0], sizes = [2, 8, 8, 128], strides = [1, 1, 1, 1]} : vector<2x10x8x128xf32> to vector<2x8x8x128xf32>
    %261 = vector.extract_strided_slice %229 {offsets = [1, 1, 0], sizes = [1, 1, 128], strides = [1, 1, 1]} : vector<3x3x128xf32> to vector<1x1x128xf32>
    %262 = vector.shape_cast %261 : vector<1x1x128xf32> to vector<128xf32>
    %263 = vector.shape_cast %262 : vector<128xf32> to vector<1x1x1x128xf32>
    %264 = vector.broadcast %263 : vector<1x1x1x128xf32> to vector<2x8x8x128xf32>
    %265 = arith.mulf %260, %264 : vector<2x8x8x128xf32>
    %266 = arith.addf %259, %265 : vector<2x8x8x128xf32>
    %267 = vector.extract_strided_slice %232 {offsets = [0, 1, 0, 0], sizes = [2, 8, 8, 128], strides = [1, 1, 1, 1]} : vector<2x10x8x128xf32> to vector<2x8x8x128xf32>
    %268 = vector.extract_strided_slice %229 {offsets = [1, 2, 0], sizes = [1, 1, 128], strides = [1, 1, 1]} : vector<3x3x128xf32> to vector<1x1x128xf32>
    %269 = vector.shape_cast %268 : vector<1x1x128xf32> to vector<128xf32>
    %270 = vector.shape_cast %269 : vector<128xf32> to vector<1x1x1x128xf32>
    %271 = vector.broadcast %270 : vector<1x1x1x128xf32> to vector<2x8x8x128xf32>
    %272 = arith.mulf %267, %271 : vector<2x8x8x128xf32>
    %273 = arith.addf %266, %272 : vector<2x8x8x128xf32>
    %274 = vector.extract_strided_slice %230 {offsets = [0, 2, 0, 0], sizes = [2, 8, 8, 128], strides = [1, 1, 1, 1]} : vector<2x10x8x128xf32> to vector<2x8x8x128xf32>
    %275 = vector.extract_strided_slice %229 {offsets = [2, 0, 0], sizes = [1, 1, 128], strides = [1, 1, 1]} : vector<3x3x128xf32> to vector<1x1x128xf32>
    %276 = vector.shape_cast %275 : vector<1x1x128xf32> to vector<128xf32>
    %277 = vector.shape_cast %276 : vector<128xf32> to vector<1x1x1x128xf32>
    %278 = vector.broadcast %277 : vector<1x1x1x128xf32> to vector<2x8x8x128xf32>
    %279 = arith.mulf %274, %278 : vector<2x8x8x128xf32>
    %280 = arith.addf %273, %279 : vector<2x8x8x128xf32>
    %281 = vector.extract_strided_slice %231 {offsets = [0, 2, 0, 0], sizes = [2, 8, 8, 128], strides = [1, 1, 1, 1]} : vector<2x10x8x128xf32> to vector<2x8x8x128xf32>
    %282 = vector.extract_strided_slice %229 {offsets = [2, 1, 0], sizes = [1, 1, 128], strides = [1, 1, 1]} : vector<3x3x128xf32> to vector<1x1x128xf32>
    %283 = vector.shape_cast %282 : vector<1x1x128xf32> to vector<128xf32>
    %284 = vector.shape_cast %283 : vector<128xf32> to vector<1x1x1x128xf32>
    %285 = vector.broadcast %284 : vector<1x1x1x128xf32> to vector<2x8x8x128xf32>
    %286 = arith.mulf %281, %285 : vector<2x8x8x128xf32>
    %287 = arith.addf %280, %286 : vector<2x8x8x128xf32>
    %288 = vector.extract_strided_slice %232 {offsets = [0, 2, 0, 0], sizes = [2, 8, 8, 128], strides = [1, 1, 1, 1]} : vector<2x10x8x128xf32> to vector<2x8x8x128xf32>
    %289 = vector.extract_strided_slice %229 {offsets = [2, 2, 0], sizes = [1, 1, 128], strides = [1, 1, 1]} : vector<3x3x128xf32> to vector<1x1x128xf32>
    %290 = vector.shape_cast %289 : vector<1x1x128xf32> to vector<128xf32>
    %291 = vector.shape_cast %290 : vector<128xf32> to vector<1x1x1x128xf32>
    %292 = vector.broadcast %291 : vector<1x1x1x128xf32> to vector<2x8x8x128xf32>
    %293 = arith.mulf %288, %292 : vector<2x8x8x128xf32>
    %294 = arith.addf %287, %293 : vector<2x8x8x128xf32>
    %295 = vector.shape_cast %294 : vector<2x8x8x128xf32> to vector<128x128xf32>
    %296 = arith.truncf %295 : vector<128x128xf32> to vector<128x128xbf16>
    %c2_109 = arith.constant 2 : index
    %c0_110 = arith.constant 0 : index
    %c0_111 = arith.constant 0 : index
    %297 = vector.load %arg2[%c2_109, %c0_110, %c0_111] : memref<3x128x128xbf16, #tpu.memory_space<vmem>>, vector<1x128x128xbf16>
    %298 = vector.shape_cast %297 : vector<1x128x128xbf16> to vector<128x128xbf16>
    %cst_112 = arith.constant dense<0.000000e+00> : vector<128x128xf32>
    %299 = tpu.matmul %296, %298, %cst_112 {dimension_numbers = #tpu.dot_dimension_numbers<[1], [0], [0], [1], [0, 0, 1, 1], [], []>} : vector<128x128xbf16>, vector<128x128xbf16>, vector<128x128xf32> -> vector<128x128xf32>
    %c0_113 = arith.constant 0 : index
    %c0_114 = arith.constant 0 : index
    %300 = vector.load %arg3[%c0_113, %c0_114] : memref<1x128xf32, #tpu.memory_space<vmem>>, vector<1x128xf32>
    %301 = vector.broadcast %300 : vector<1x128xf32> to vector<128x128xf32>
    %302 = arith.addf %299, %301 : vector<128x128xf32>
    %303 = vector.shape_cast %302 : vector<128x128xf32> to vector<2x8x8x128xf32>
    %304 = arith.truncf %303 : vector<2x8x8x128xf32> to vector<2x8x8x128xbf16>
    %c0_115 = arith.constant 0 : index
    %c0_116 = arith.constant 0 : index
    %c0_117 = arith.constant 0 : index
    %c0_118 = arith.constant 0 : index
    %305 = vector.load %arg6[%c0_115, %c0_116, %c0_117, %c0_118] : memref<2x8x8x128xbf16, #tpu.memory_space<vmem>>, vector<2x8x8x128xbf16>
    tpu.vector_store %arg6[%c0_115, %c0_116, %c0_117, %c0_118], %304 {strides = array<i32>} : memref<2x8x8x128xbf16, #tpu.memory_space<vmem>>, vector<2x8x8x128xbf16>,
    return
  }
}

</mosaic_0001>

<llo_original>
// kernel: _lambda_.1
$region0: #{_lambda_.1}
  #allocation0 [shape = 'u32[]', space=smem, size = 0x4, offset = 0x4, fixed_abs, tag = 'smem constant byte address 0x4 - core index']
  #allocation1 [shape = 'u32[72,128]{1,0:T(1,128)}', space=vmem, size = 0x9000, scoped, tag = 'internal scratch']
  #allocation2 [shape = 'f32[2,10,17,128]{3,2,1,0:T(8,128)}', space=vmem, size = 0x3c000, scoped, tag = 'scratch operand']
  #allocation3 [shape = 's32[1]{0}', space=sflag, size = 0x4, scoped, tag = 'scratch operand']
  #allocation4 [shape = 's32[]', space=sflag, size = 0x4, offset = 0, fixed_abs, tag = 'sflag constant byte address 0x0 - dummy sync flag']
  %s0 = inlined_call_operand.vmem [shape: f32[2,8,8,128], index: 0, kind: input, shape index: {}]
  %s1 = inlined_call_operand.vmem [shape: f32[3,3,3,128], index: 1, kind: input, shape index: {}]
  %s2 = inlined_call_operand.vmem [shape: bf16[3,128,128], index: 2, kind: input, shape index: {}]
  %s3 = inlined_call_operand.vmem [shape: f32[1,128], index: 3, kind: input, shape index: {}]
  %s4 = inlined_call_operand.vmem [shape: f32[2,1,128], index: 4, kind: input, shape index: {}]
  %s5 = inlined_call_operand.vmem [shape: f32[2,1,128], index: 5, kind: input, shape index: {}]
  %s6 = inlined_call_operand.vmem [shape: bf16[2,8,8,128], index: 6, kind: output, shape index: {}]
  %s7 = sld [smem:[#allocation0]]
  $region64: #{_lambda_.1} parent=0
    _
  %s9 = ssub.s32 1, %s7
  %s10 = scalar_select 0, %s9, %s7
  // Predicated region
  $region2: #{_lambda_.1} parent=0 // pred_check
    _
  $region3: #{_lambda_.1} parent=0 // pred_check_branch
    %12 = sbr.rel (0) target = $region5
  $region4: #{_lambda_.1} parent=0 // pred_region
    _
  $region5: #{_lambda_.1} parent=0 // pred_fallthru
    _
  // Predicated region
  $region6: #{_lambda_.1} parent=0 // pred_check
    _
  $region7: #{_lambda_.1} parent=0 // pred_check_branch
    %14 = sbr.rel (0) target = $region9
  $region8: #{_lambda_.1} parent=0 // pred_region
    _
  $region9: #{_lambda_.1} parent=0 // pred_fallthru
    _
  // Predicated region
  $region10: #{_lambda_.1} parent=0 // pred_check
    _
  $region11: #{_lambda_.1} parent=0 // pred_check_branch
    %16 = sbr.rel (0) target = $region13
  $region12: #{_lambda_.1} parent=0 // pred_region
    _
  $region13: #{_lambda_.1} parent=0 // pred_fallthru
    _
  // Predicated region
  $region14: #{_lambda_.1} parent=0 // pred_check
    _
  $region15: #{_lambda_.1} parent=0 // pred_check_branch
    %18 = sbr.rel (0) target = $region17
  $region16: #{_lambda_.1} parent=0 // pred_region
    _
  $region17: #{_lambda_.1} parent=0 // pred_fallthru
    _
  // Predicated region
  $region18: #{_lambda_.1} parent=0 // pred_check
    _
  $region19: #{_lambda_.1} parent=0 // pred_check_branch
    %20 = sbr.rel (0) target = $region21
  $region20: #{_lambda_.1} parent=0 // pred_region
    _
  $region21: #{_lambda_.1} parent=0 // pred_fallthru
    _
  %s21 = scalar_lea.vmem [#allocation2], 32
  // Predicated region
  $region22: #{_lambda_.1} parent=0 // pred_check
    _
  $region23: #{_lambda_.1} parent=0 // pred_check_branch
    %23 = sbr.rel (0) target = $region25
  $region24: #{_lambda_.1} parent=0 // pred_region
    // Predicated region
    $region37: #{_lambda_.1} parent=24 // pred_check
      _
    $region38: #{_lambda_.1} parent=24 // pred_check_branch
      %69 = sbr.rel (0) target = $region40
    $region39: #{_lambda_.1} parent=24 // pred_region
      loop: start=0, step=1, limit=1
      $region41: #{_lambda_.1} parent=39 // loop_pre_header
        _
      $region42: #{_lambda_.1} parent=39 // loop_header
        %s71 = sphi 0, %s75
        %p72 = scmp.ge.s32.totalorder %s71, 1
        %s76 = sphi %s0, %s0
        %s77 = sphi %s21, %s21
      $region43: #{_lambda_.1} parent=39 // loop_header_branch
        %74 = sbr.rel (%p72) target = $region47
      $region44: #{_lambda_.1} parent=39 // loop_body
        %v78 = vld [vmem:[%s76] sm:$0xff]
        %79 = vst [vmem:[%s77] sm:$0xff] %v78
        %v80 = vld [vmem:[%s76 + $0x8] sm:$0xff]
        %81 = vst [vmem:[%s77 + $0x18] sm:$0xff] %v80
        %v82 = vld [vmem:[%s76 + $0x10] sm:$0xff]
        %83 = vst [vmem:[%s77 + $0x30] sm:$0xff] %v82
        %v84 = vld [vmem:[%s76 + $0x18] sm:$0xff]
        %85 = vst [vmem:[%s77 + $0x48] sm:$0xff] %v84
        %v86 = vld [vmem:[%s76 + $0x20] sm:$0xff]
        %87 = vst [vmem:[%s77 + $0x60] sm:$0xff] %v86
        %v88 = vld [vmem:[%s76 + $0x28] sm:$0xff]
        %89 = vst [vmem:[%s77 + $0x78] sm:$0xff] %v88
        %v90 = vld [vmem:[%s76 + $0x30] sm:$0xff]
        %91 = vst [vmem:[%s77 + $0x90] sm:$0xff] %v90
        %v92 = vld [vmem:[%s76 + $0x38] sm:$0xff]
        %93 = vst [vmem:[%s77 + $0xa8] sm:$0xff] %v92
        %v94 = vld [vmem:[%s76 + $0x40] sm:$0xff]
        %95 = vst [vmem:[%s77 + $0xf0] sm:$0xff] %v94
        %v96 = vld [vmem:[%s76 + $0x48] sm:$0xff]
        %97 = vst [vmem:[%s77 + $0x108] sm:$0xff] %v96
        %v98 = vld [vmem:[%s76 + $0x50] sm:$0xff]
        %99 = vst [vmem:[%s77 + $0x120] sm:$0xff] %v98
        %v100 = vld [vmem:[%s76 + $0x58] sm:$0xff]
        %101 = vst [vmem:[%s77 + $0x138] sm:$0xff] %v100
        %v102 = vld [vmem:[%s76 + $0x60] sm:$0xff]
        %103 = vst [vmem:[%s77 + $0x150] sm:$0xff] %v102
        %v104 = vld [vmem:[%s76 + $0x68] sm:$0xff]
        %105 = vst [vmem:[%s77 + $0x168] sm:$0xff] %v104
        %v106 = vld [vmem:[%s76 + $0x70] sm:$0xff]
        %107 = vst [vmem:[%s77 + $0x180] sm:$0xff] %v106
        %v108 = vld [vmem:[%s76 + $0x78] sm:$0xff]
        %109 = vst [vmem:[%s77 + $0x198] sm:$0xff] %v108
      $region45: #{_lambda_.1} parent=39 // loop_footer
        %s75 = sadd.s32 1, %s71
      $region46: #{_lambda_.1} parent=39 // loop_footer_branch
        %70 = sbr.rel target = $region42
      $region47: #{_lambda_.1} parent=39 // loop_exit
        _
    $region40: #{_lambda_.1} parent=24 // pred_fallthru
      _
    // Predicated region
    $region48: #{_lambda_.1} parent=24 // pred_check
      _
    $region49: #{_lambda_.1} parent=24 // pred_check_branch
      %111 = sbr.rel target = $region51
    $region50: #{_lambda_.1} parent=24 // pred_region
      _
    $region51: #{_lambda_.1} parent=24 // pred_fallthru
      _
  $region25: #{_lambda_.1} parent=0 // pred_fallthru
    _
  // Predicated region
  $region26: #{_lambda_.1} parent=0 // pred_check
    _
  $region27: #{_lambda_.1} parent=0 // pred_check_branch
    %25 = sbr.rel target = $region29
  $region28: #{_lambda_.1} parent=0 // pred_region
    %s27 = ssub.s32 256, 1
    loop: start=0, step=1, limit=1
    $region30: #{_lambda_.1} parent=28 // loop_pre_header
      _
    $region31: #{_lambda_.1} parent=28 // loop_header
      %s29 = sphi 0, %s33
      %p30 = scmp.ge.s32.totalorder %s29, 1
      %s34 = sphi %s0, %s0
      %s35 = sphi %s21, %s21
    $region32: #{_lambda_.1} parent=28 // loop_header_branch
      %32 = sbr.rel (%p30) target = $region36
    $region33: #{_lambda_.1} parent=28 // loop_body
      %v36 = vld [vmem:[%s34] sm:%s27]
      %37 = vst [vmem:[%s35] sm:%s27] %v36
      %v38 = vld [vmem:[%s34 + $0x8] sm:%s27]
      %39 = vst [vmem:[%s35 + $0x18] sm:%s27] %v38
      %v40 = vld [vmem:[%s34 + $0x10] sm:%s27]
      %41 = vst [vmem:[%s35 + $0x30] sm:%s27] %v40
      %v42 = vld [vmem:[%s34 + $0x18] sm:%s27]
      %43 = vst [vmem:[%s35 + $0x48] sm:%s27] %v42
      %v44 = vld [vmem:[%s34 + $0x20] sm:%s27]
      %45 = vst [vmem:[%s35 + $0x60] sm:%s27] %v44
      %v46 = vld [vmem:[%s34 + $0x28] sm:%s27]
      %47 = vst [vmem:[%s35 + $0x78] sm:%s27] %v46
      %v48 = vld [vmem:[%s34 + $0x30] sm:%s27]
      %49 = vst [vmem:[%s35 + $0x90] sm:%s27] %v48
      %v50 = vld [vmem:[%s34 + $0x38] sm:%s27]
      %51 = vst [vmem:[%s35 + $0xa8] sm:%s27] %v50
      %v52 = vld [vmem:[%s34 + $0x40] sm:%s27]
      %53 = vst [vmem:[%s35 + $0xf0] sm:%s27] %v52
      %v54 = vld [vmem:[%s34 + $0x48] sm:%s27]
      %55 = vst [vmem:[%s35 + $0x108] sm:%s27] %v54
      %v56 = vld [vmem:[%s34 + $0x50] sm:%s27]
      %57 = vst [vmem:[%s35 + $0x120] sm:%s27] %v56
      %v58 = vld [vmem:[%s34 + $0x58] sm:%s27]
      %59 = vst [vmem:[%s35 + $0x138] sm:%s27] %v58
      %v60 = vld [vmem:[%s34 + $0x60] sm:%s27]
      %61 = vst [vmem:[%s35 + $0x150] sm:%s27] %v60
      %v62 = vld [vmem:[%s34 + $0x68] sm:%s27]
      %63 = vst [vmem:[%s35 + $0x168] sm:%s27] %v62
      %v64 = vld [vmem:[%s34 + $0x70] sm:%s27]
      %65 = vst [vmem:[%s35 + $0x180] sm:%s27] %v64
      %v66 = vld [vmem:[%s34 + $0x78] sm:%s27]
      %67 = vst [vmem:[%s35 + $0x198] sm:%s27] %v66
    $region34: #{_lambda_.1} parent=28 // loop_footer
      %s33 = sadd.s32 1, %s29
    $region35: #{_lambda_.1} parent=28 // loop_footer_branch
      %28 = sbr.rel target = $region31
    $region36: #{_lambda_.1} parent=28 // loop_exit
      _
  $region29: #{_lambda_.1} parent=0 // pred_fallthru
    _
  // Predicated region
  $region52: #{_lambda_.1} parent=0 // pred_check
    _
  $region53: #{_lambda_.1} parent=0 // pred_check_branch
    %114 = sbr.rel (0) target = $region55
  $region54: #{_lambda_.1} parent=0 // pred_region
    %115 = vsyncadd [#allocation3], 2048
  $region55: #{_lambda_.1} parent=0 // pred_fallthru
    _
  %116 = vst [vmem:[#allocation2] sm:$0xff] 0.0
  %117 = vst [vmem:[#allocation2 + $0x8] sm:$0xff] 0.0
  %118 = vst [vmem:[#allocation2 + $0x10] sm:$0x1] 0.0
  %119 = vst [vmem:[#allocation2 + $0xf0] sm:$0xff] 0.0
  %120 = vst [vmem:[#allocation2 + $0xf8] sm:$0xff] 0.0
  %121 = vst [vmem:[#allocation2 + $0x100] sm:$0x1] 0.0
  %s122 = scalar_lea.vmem [#allocation2], 216
  %123 = vst [vmem:[%s122] sm:$0xff] 0.0
  %124 = vst [vmem:[%s122 + $0x8] sm:$0xff] 0.0
  %125 = vst [vmem:[%s122 + $0x10] sm:$0x1] 0.0
  %126 = vst [vmem:[%s122 + $0xf0] sm:$0xff] 0.0
  %127 = vst [vmem:[%s122 + $0xf8] sm:$0xff] 0.0
  %128 = vst [vmem:[%s122 + $0x100] sm:$0x1] 0.0
  %129 = vst [vmem:[#allocation2] sm:$0xff] 0.0
  %130 = vst [vmem:[#allocation2 + $0x18] sm:$0xff] 0.0
  %131 = vst [vmem:[#allocation2 + $0x30] sm:$0xff] 0.0
  %132 = vst [vmem:[#allocation2 + $0x48] sm:$0xff] 0.0
  %133 = vst [vmem:[#allocation2 + $0x60] sm:$0xff] 0.0
  %134 = vst [vmem:[#allocation2 + $0x78] sm:$0xff] 0.0
  %135 = vst [vmem:[#allocation2 + $0x90] sm:$0xff] 0.0
  %136 = vst [vmem:[#allocation2 + $0xa8] sm:$0xff] 0.0
  %137 = vst [vmem:[#allocation2 + $0xc0] sm:$0xff] 0.0
  %138 = vst [vmem:[#allocation2 + $0xd8] sm:$0xff] 0.0
  %139 = vst [vmem:[#allocation2 + $0xf0] sm:$0xff] 0.0
  %140 = vst [vmem:[#allocation2 + $0x108] sm:$0xff] 0.0
  %141 = vst [vmem:[#allocation2 + $0x120] sm:$0xff] 0.0
  %142 = vst [vmem:[#allocation2 + $0x138] sm:$0xff] 0.0
  %143 = vst [vmem:[#allocation2 + $0x150] sm:$0xff] 0.0
  %144 = vst [vmem:[#allocation2 + $0x168] sm:$0xff] 0.0
  %145 = vst [vmem:[#allocation2 + $0x180] sm:$0xff] 0.0
  %146 = vst [vmem:[#allocation2 + $0x198] sm:$0xff] 0.0
  %147 = vst [vmem:[#allocation2 + $0x1b0] sm:$0xff] 0.0
  %148 = vst [vmem:[#allocation2 + $0x1c8] sm:$0xff] 0.0
  %149 = vst [vmem:[#allocation2 + $0x10] sm:$0x1] 0.0
  %150 = vst [vmem:[#allocation2 + $0x28] sm:$0x1] 0.0
  %151 = vst [vmem:[#allocation2 + $0x40] sm:$0x1] 0.0
  %152 = vst [vmem:[#allocation2 + $0x58] sm:$0x1] 0.0
  %153 = vst [vmem:[#allocation2 + $0x70] sm:$0x1] 0.0
  %154 = vst [vmem:[#allocation2 + $0x88] sm:$0x1] 0.0
  %155 = vst [vmem:[#allocation2 + $0xa0] sm:$0x1] 0.0
  %156 = vst [vmem:[#allocation2 + $0xb8] sm:$0x1] 0.0
  %157 = vst [vmem:[#allocation2 + $0xd0] sm:$0x1] 0.0
  %158 = vst [vmem:[#allocation2 + $0xe8] sm:$0x1] 0.0
  %159 = vst [vmem:[#allocation2 + $0x100] sm:$0x1] 0.0
  %160 = vst [vmem:[#allocation2 + $0x118] sm:$0x1] 0.0
  %161 = vst [vmem:[#allocation2 + $0x130] sm:$0x1] 0.0
  %162 = vst [vmem:[#allocation2 + $0x148] sm:$0x1] 0.0
  %163 = vst [vmem:[#allocation2 + $0x160] sm:$0x1] 0.0
  %164 = vst [vmem:[#allocation2 + $0x178] sm:$0x1] 0.0
  %165 = vst [vmem:[#allocation2 + $0x190] sm:$0x1] 0.0
  %166 = vst [vmem:[#allocation2 + $0x1a8] sm:$0x1] 0.0
  %167 = vst [vmem:[#allocation2 + $0x1c0] sm:$0x1] 0.0
  %168 = vst [vmem:[#allocation2 + $0x1d8] sm:$0x1] 0.0
  %s169 = smul.u32 2, 8
  %s170 = smul.u32 %s169, 8
  %s171 = smul.u32 %s170, 1
  %s172 = sshll.u32 %s171, 4
  %173 = dma.done [#allocation3], %s172
  %v174 = vld [vmem:[%s1] sm:$0x7]
  %v175 = vld [vmem:[%s1 + $0x4] sm:$0x7]
  %v176 = vld [vmem:[%s1 + $0x8] sm:$0x7]
  %v177 = vld [vmem:[#allocation2 + $0x7] sm:$0xff]
  %v178 = vld [vmem:[#allocation2 + $0x1f] sm:$0xff]
  %v179 = vld [vmem:[#allocation2 + $0x37] sm:$0xff]
  %v180 = vld [vmem:[#allocation2 + $0x4f] sm:$0xff]
  %v181 = vld [vmem:[#allocation2 + $0x67] sm:$0xff]
  %v182 = vld [vmem:[#allocation2 + $0x7f] sm:$0xff]
  %v183 = vld [vmem:[#allocation2 + $0x97] sm:$0xff]
  %v184 = vld [vmem:[#allocation2 + $0xaf] sm:$0xff]
  %v185 = vld [vmem:[#allocation2 + $0xc7] sm:$0xff]
  %v186 = vld [vmem:[#allocation2 + $0xdf] sm:$0xff]
  %v187 = vld [vmem:[#allocation2 + $0xf7] sm:$0xff]
  %v188 = vld [vmem:[#allocation2 + $0x10f] sm:$0xff]
  %v189 = vld [vmem:[#allocation2 + $0x127] sm:$0xff]
  %v190 = vld [vmem:[#allocation2 + $0x13f] sm:$0xff]
  %v191 = vld [vmem:[#allocation2 + $0x157] sm:$0xff]
  %v192 = vld [vmem:[#allocation2 + $0x16f] sm:$0xff]
  %v193 = vld [vmem:[#allocation2 + $0x187] sm:$0xff]
  %v194 = vld [vmem:[#allocation2 + $0x19f] sm:$0xff]
  %v195 = vld [vmem:[#allocation2 + $0x1b7] sm:$0xff]
  %v196 = vld [vmem:[#allocation2 + $0x1cf] sm:$0xff]
  %v197 = vld [vmem:[#allocation2 + $0x8] sm:$0xff]
  %v198 = vld [vmem:[#allocation2 + $0x20] sm:$0xff]
  %v199 = vld [vmem:[#allocation2 + $0x38] sm:$0xff]
  %v200 = vld [vmem:[#allocation2 + $0x50] sm:$0xff]
  %v201 = vld [vmem:[#allocation2 + $0x68] sm:$0xff]
  %v202 = vld [vmem:[#allocation2 + $0x80] sm:$0xff]
  %v203 = vld [vmem:[#allocation2 + $0x98] sm:$0xff]
  %v204 = vld [vmem:[#allocation2 + $0xb0] sm:$0xff]
  %v205 = vld [vmem:[#allocation2 + $0xc8] sm:$0xff]
  %v206 = vld [vmem:[#allocation2 + $0xe0] sm:$0xff]
  %v207 = vld [vmem:[#allocation2 + $0xf8] sm:$0xff]
  %v208 = vld [vmem:[#allocation2 + $0x110] sm:$0xff]
  %v209 = vld [vmem:[#allocation2 + $0x128] sm:$0xff]
  %v210 = vld [vmem:[#allocation2 + $0x140] sm:$0xff]
  %v211 = vld [vmem:[#allocation2 + $0x158] sm:$0xff]
  %v212 = vld [vmem:[#allocation2 + $0x170] sm:$0xff]
  %v213 = vld [vmem:[#allocation2 + $0x188] sm:$0xff]
  %v214 = vld [vmem:[#allocation2 + $0x1a0] sm:$0xff]
  %v215 = vld [vmem:[#allocation2 + $0x1b8] sm:$0xff]
  %v216 = vld [vmem:[#allocation2 + $0x1d0] sm:$0xff]
  %v217 = vld [vmem:[#allocation2 + $0x9] sm:$0xff]
  %v218 = vld [vmem:[#allocation2 + $0x21] sm:$0xff]
  %v219 = vld [vmem:[#allocation2 + $0x39] sm:$0xff]
  %v220 = vld [vmem:[#allocation2 + $0x51] sm:$0xff]
  %v221 = vld [vmem:[#allocation2 + $0x69] sm:$0xff]
  %v222 = vld [vmem:[#allocation2 + $0x81] sm:$0xff]
  %v223 = vld [vmem:[#allocation2 + $0x99] sm:$0xff]
  %v224 = vld [vmem:[#allocation2 + $0xb1] sm:$0xff]
  %v225 = vld [vmem:[#allocation2 + $0xc9] sm:$0xff]
  %v226 = vld [vmem:[#allocation2 + $0xe1] sm:$0xff]
  %v227 = vld [vmem:[#allocation2 + $0xf9] sm:$0xff]
  %v228 = vld [vmem:[#allocation2 + $0x111] sm:$0xff]
  %v229 = vld [vmem:[#allocation2 + $0x129] sm:$0xff]
  %v230 = vld [vmem:[#allocation2 + $0x141] sm:$0xff]
  %v231 = vld [vmem:[#allocation2 + $0x159] sm:$0xff]
  %v232 = vld [vmem:[#allocation2 + $0x171] sm:$0xff]
  %v233 = vld [vmem:[#allocation2 + $0x189] sm:$0xff]
  %v234 = vld [vmem:[#allocation2 + $0x1a1] sm:$0xff]
  %v235 = vld [vmem:[#allocation2 + $0x1b9] sm:$0xff]
  %v236 = vld [vmem:[#allocation2 + $0x1d1] sm:$0xff]
  %v237 = vperm.slane %v174, 0
  %v238 = vmul.f32 %v177, %v237
  %v239 = vmul.f32 %v178, %v237
  %v240 = vmul.f32 %v179, %v237
  %v241 = vmul.f32 %v180, %v237
  %v242 = vmul.f32 %v181, %v237
  %v243 = vmul.f32 %v182, %v237
  %v244 = vmul.f32 %v183, %v237
  %v245 = vmul.f32 %v184, %v237
  %v246 = vmul.f32 %v187, %v237
  %v247 = vmul.f32 %v188, %v237
  %v248 = vmul.f32 %v189, %v237
  %v249 = vmul.f32 %v190, %v237
  %v250 = vmul.f32 %v191, %v237
  %v251 = vmul.f32 %v192, %v237
  %v252 = vmul.f32 %v193, %v237
  %v253 = vmul.f32 %v194, %v237
  %v254 = vperm.slane %v174, 1
  %v255 = vmul.f32 %v197, %v254
  %v256 = vmul.f32 %v198, %v254
  %v257 = vmul.f32 %v199, %v254
  %v258 = vmul.f32 %v200, %v254
  %v259 = vmul.f32 %v201, %v254
  %v260 = vmul.f32 %v202, %v254
  %v261 = vmul.f32 %v203, %v254
  %v262 = vmul.f32 %v204, %v254
  %v263 = vmul.f32 %v207, %v254
  %v264 = vmul.f32 %v208, %v254
  %v265 = vmul.f32 %v209, %v254
  %v266 = vmul.f32 %v210, %v254
  %v267 = vmul.f32 %v211, %v254
  %v268 = vmul.f32 %v212, %v254
  %v269 = vmul.f32 %v213, %v254
  %v270 = vmul.f32 %v214, %v254
  %v271 = vadd.f32 %v238, %v255
  %v272 = vadd.f32 %v239, %v256
  %v273 = vadd.f32 %v240, %v257
  %v274 = vadd.f32 %v241, %v258
  %v275 = vadd.f32 %v242, %v259
  %v276 = vadd.f32 %v243, %v260
  %v277 = vadd.f32 %v244, %v261
  %v278 = vadd.f32 %v245, %v262
  %v279 = vadd.f32 %v246, %v263
  %v280 = vadd.f32 %v247, %v264
  %v281 = vadd.f32 %v248, %v265
  %v282 = vadd.f32 %v249, %v266
  %v283 = vadd.f32 %v250, %v267
  %v284 = vadd.f32 %v251, %v268
  %v285 = vadd.f32 %v252, %v269
  %v286 = vadd.f32 %v253, %v270
  %v287 = vperm.slane %v174, 2
  %v288 = vmul.f32 %v217, %v287
  %v289 = vmul.f32 %v218, %v287
  %v290 = vmul.f32 %v219, %v287
  %v291 = vmul.f32 %v220, %v287
  %v292 = vmul.f32 %v221, %v287
  %v293 = vmul.f32 %v222, %v287
  %v294 = vmul.f32 %v223, %v287
  %v295 = vmul.f32 %v224, %v287
  %v296 = vmul.f32 %v227, %v287
  %v297 = vmul.f32 %v228, %v287
  %v298 = vmul.f32 %v229, %v287
  %v299 = vmul.f32 %v230, %v287
  %v300 = vmul.f32 %v231, %v287
  %v301 = vmul.f32 %v232, %v287
  %v302 = vmul.f32 %v233, %v287
  %v303 = vmul.f32 %v234, %v287
  %v304 = vadd.f32 %v271, %v288
  %v305 = vadd.f32 %v272, %v289
  %v306 = vadd.f32 %v273, %v290
  %v307 = vadd.f32 %v274, %v291
  %v308 = vadd.f32 %v275, %v292
  %v309 = vadd.f32 %v276, %v293
  %v310 = vadd.f32 %v277, %v294
  %v311 = vadd.f32 %v278, %v295
  %v312 = vadd.f32 %v279, %v296
  %v313 = vadd.f32 %v280, %v297
  %v314 = vadd.f32 %v281, %v298
  %v315 = vadd.f32 %v282, %v299
  %v316 = vadd.f32 %v283, %v300
  %v317 = vadd.f32 %v284, %v301
  %v318 = vadd.f32 %v285, %v302
  %v319 = vadd.f32 %v286, %v303
  %v320 = vperm.slane %v175, 0
  %v321 = vmul.f32 %v178, %v320
  %v322 = vmul.f32 %v179, %v320
  %v323 = vmul.f32 %v180, %v320
  %v324 = vmul.f32 %v181, %v320
  %v325 = vmul.f32 %v182, %v320
  %v326 = vmul.f32 %v183, %v320
  %v327 = vmul.f32 %v184, %v320
  %v328 = vmul.f32 %v185, %v320
  %v329 = vmul.f32 %v188, %v320
  %v330 = vmul.f32 %v189, %v320
  %v331 = vmul.f32 %v190, %v320
  %v332 = vmul.f32 %v191, %v320
  %v333 = vmul.f32 %v192, %v320
  %v334 = vmul.f32 %v193, %v320
  %v335 = vmul.f32 %v194, %v320
  %v336 = vmul.f32 %v195, %v320
  %v337 = vadd.f32 %v304, %v321
  %v338 = vadd.f32 %v305, %v322
  %v339 = vadd.f32 %v306, %v323
  %v340 = vadd.f32 %v307, %v324
  %v341 = vadd.f32 %v308, %v325
  %v342 = vadd.f32 %v309, %v326
  %v343 = vadd.f32 %v310, %v327
  %v344 = vadd.f32 %v311, %v328
  %v345 = vadd.f32 %v312, %v329
  %v346 = vadd.f32 %v313, %v330
  %v347 = vadd.f32 %v314, %v331
  %v348 = vadd.f32 %v315, %v332
  %v349 = vadd.f32 %v316, %v333
  %v350 = vadd.f32 %v317, %v334
  %v351 = vadd.f32 %v318, %v335
  %v352 = vadd.f32 %v319, %v336
  %v353 = vperm.slane %v175, 1
  %v354 = vmul.f32 %v198, %v353
  %v355 = vmul.f32 %v199, %v353
  %v356 = vmul.f32 %v200, %v353
  %v357 = vmul.f32 %v201, %v353
  %v358 = vmul.f32 %v202, %v353
  %v359 = vmul.f32 %v203, %v353
  %v360 = vmul.f32 %v204, %v353
  %v361 = vmul.f32 %v205, %v353
  %v362 = vmul.f32 %v208, %v353
  %v363 = vmul.f32 %v209, %v353
  %v364 = vmul.f32 %v210, %v353
  %v365 = vmul.f32 %v211, %v353
  %v366 = vmul.f32 %v212, %v353
  %v367 = vmul.f32 %v213, %v353
  %v368 = vmul.f32 %v214, %v353
  %v369 = vmul.f32 %v215, %v353
  %v370 = vadd.f32 %v337, %v354
  %v371 = vadd.f32 %v338, %v355
  %v372 = vadd.f32 %v339, %v356
  %v373 = vadd.f32 %v340, %v357
  %v374 = vadd.f32 %v341, %v358
  %v375 = vadd.f32 %v342, %v359
  %v376 = vadd.f32 %v343, %v360
  %v377 = vadd.f32 %v344, %v361
  %v378 = vadd.f32 %v345, %v362
  %v379 = vadd.f32 %v346, %v363
  %v380 = vadd.f32 %v347, %v364
  %v381 = vadd.f32 %v348, %v365
  %v382 = vadd.f32 %v349, %v366
  %v383 = vadd.f32 %v350, %v367
  %v384 = vadd.f32 %v351, %v368
  %v385 = vadd.f32 %v352, %v369
  %v386 = vperm.slane %v175, 2
  %v387 = vmul.f32 %v218, %v386
  %v388 = vmul.f32 %v219, %v386
  %v389 = vmul.f32 %v220, %v386
  %v390 = vmul.f32 %v221, %v386
  %v391 = vmul.f32 %v222, %v386
  %v392 = vmul.f32 %v223, %v386
  %v393 = vmul.f32 %v224, %v386
  %v394 = vmul.f32 %v225, %v386
  %v395 = vmul.f32 %v228, %v386
  %v396 = vmul.f32 %v229, %v386
  %v397 = vmul.f32 %v230, %v386
  %v398 = vmul.f32 %v231, %v386
  %v399 = vmul.f32 %v232, %v386
  %v400 = vmul.f32 %v233, %v386
  %v401 = vmul.f32 %v234, %v386
  %v402 = vmul.f32 %v235, %v386
  %v403 = vadd.f32 %v370, %v387
  %v404 = vadd.f32 %v371, %v388
  %v405 = vadd.f32 %v372, %v389
  %v406 = vadd.f32 %v373, %v390
  %v407 = vadd.f32 %v374, %v391
  %v408 = vadd.f32 %v375, %v392
  %v409 = vadd.f32 %v376, %v393
  %v410 = vadd.f32 %v377, %v394
  %v411 = vadd.f32 %v378, %v395
  %v412 = vadd.f32 %v379, %v396
  %v413 = vadd.f32 %v380, %v397
  %v414 = vadd.f32 %v381, %v398
  %v415 = vadd.f32 %v382, %v399
  %v416 = vadd.f32 %v383, %v400
  %v417 = vadd.f32 %v384, %v401
  %v418 = vadd.f32 %v385, %v402
  %v419 = vperm.slane %v176, 0
  %v420 = vmul.f32 %v179, %v419
  %v421 = vmul.f32 %v180, %v419
  %v422 = vmul.f32 %v181, %v419
  %v423 = vmul.f32 %v182, %v419
  %v424 = vmul.f32 %v183, %v419
  %v425 = vmul.f32 %v184, %v419
  %v426 = vmul.f32 %v185, %v419
  %v427 = vmul.f32 %v186, %v419
  %v428 = vmul.f32 %v189, %v419
  %v429 = vmul.f32 %v190, %v419
  %v430 = vmul.f32 %v191, %v419
  %v431 = vmul.f32 %v192, %v419
  %v432 = vmul.f32 %v193, %v419
  %v433 = vmul.f32 %v194, %v419
  %v434 = vmul.f32 %v195, %v419
  %v435 = vmul.f32 %v196, %v419
  %v436 = vadd.f32 %v403, %v420
  %v437 = vadd.f32 %v404, %v421
  %v438 = vadd.f32 %v405, %v422
  %v439 = vadd.f32 %v406, %v423
  %v440 = vadd.f32 %v407, %v424
  %v441 = vadd.f32 %v408, %v425
  %v442 = vadd.f32 %v409, %v426
  %v443 = vadd.f32 %v410, %v427
  %v444 = vadd.f32 %v411, %v428
  %v445 = vadd.f32 %v412, %v429
  %v446 = vadd.f32 %v413, %v430
  %v447 = vadd.f32 %v414, %v431
  %v448 = vadd.f32 %v415, %v432
  %v449 = vadd.f32 %v416, %v433
  %v450 = vadd.f32 %v417, %v434
  %v451 = vadd.f32 %v418, %v435
  %v452 = vperm.slane %v176, 1
  %v453 = vmul.f32 %v199, %v452
  %v454 = vmul.f32 %v200, %v452
  %v455 = vmul.f32 %v201, %v452
  %v456 = vmul.f32 %v202, %v452
  %v457 = vmul.f32 %v203, %v452
  %v458 = vmul.f32 %v204, %v452
  %v459 = vmul.f32 %v205, %v452
  %v460 = vmul.f32 %v206, %v452
  %v461 = vmul.f32 %v209, %v452
  %v462 = vmul.f32 %v210, %v452
  %v463 = vmul.f32 %v211, %v452
  %v464 = vmul.f32 %v212, %v452
  %v465 = vmul.f32 %v213, %v452
  %v466 = vmul.f32 %v214, %v452
  %v467 = vmul.f32 %v215, %v452
  %v468 = vmul.f32 %v216, %v452
  %v469 = vadd.f32 %v436, %v453
  %v470 = vadd.f32 %v437, %v454
  %v471 = vadd.f32 %v438, %v455
  %v472 = vadd.f32 %v439, %v456
  %v473 = vadd.f32 %v440, %v457
  %v474 = vadd.f32 %v441, %v458
  %v475 = vadd.f32 %v442, %v459
  %v476 = vadd.f32 %v443, %v460
  %v477 = vadd.f32 %v444, %v461
  %v478 = vadd.f32 %v445, %v462
  %v479 = vadd.f32 %v446, %v463
  %v480 = vadd.f32 %v447, %v464
  %v481 = vadd.f32 %v448, %v465
  %v482 = vadd.f32 %v449, %v466
  %v483 = vadd.f32 %v450, %v467
  %v484 = vadd.f32 %v451, %v468
  %v485 = vperm.slane %v176, 2
  %v486 = vmul.f32 %v219, %v485
  %v487 = vmul.f32 %v220, %v485
  %v488 = vmul.f32 %v221, %v485
  %v489 = vmul.f32 %v222, %v485
  %v490 = vmul.f32 %v223, %v485
  %v491 = vmul.f32 %v224, %v485
  %v492 = vmul.f32 %v225, %v485
  %v493 = vmul.f32 %v226, %v485
  %v494 = vmul.f32 %v229, %v485
  %v495 = vmul.f32 %v230, %v485
  %v496 = vmul.f32 %v231, %v485
  %v497 = vmul.f32 %v232, %v485
  %v498 = vmul.f32 %v233, %v485
  %v499 = vmul.f32 %v234, %v485
  %v500 = vmul.f32 %v235, %v485
  %v501 = vmul.f32 %v236, %v485
  %v502 = vadd.f32 %v469, %v486
  %v503 = vadd.f32 %v470, %v487
  %v504 = vadd.f32 %v471, %v488
  %v505 = vadd.f32 %v472, %v489
  %v506 = vadd.f32 %v473, %v490
  %v507 = vadd.f32 %v474, %v491
  %v508 = vadd.f32 %v475, %v492
  %v509 = vadd.f32 %v476, %v493
  %v510 = vadd.f32 %v477, %v494
  %v511 = vadd.f32 %v478, %v495
  %v512 = vadd.f32 %v479, %v496
  %v513 = vadd.f32 %v480, %v497
  %v514 = vadd.f32 %v481, %v498
  %v515 = vadd.f32 %v482, %v499
  %v516 = vadd.f32 %v483, %v500
  %v517 = vadd.f32 %v484, %v501
  %v518 = vpack.c.bf16 %v503, %v502
  %v519 = vpack.c.bf16 %v505, %v504
  %v520 = vpack.c.bf16 %v507, %v506
  %v521 = vpack.c.bf16 %v509, %v508
  %v522 = vpack.c.bf16 %v511, %v510
  %v523 = vpack.c.bf16 %v513, %v512
  %v524 = vpack.c.bf16 %v515, %v514
  %v525 = vpack.c.bf16 %v517, %v516
  %v526 = vld [vmem:[%s2] sm:$0xf]
  %v527 = vld [vmem:[%s2 + $0x4] sm:$0xf]
  %v528 = vld [vmem:[%s2 + $0x8] sm:$0xf]
  %v529 = vld [vmem:[%s2 + $0xc] sm:$0xf]
  %v530 = vld [vmem:[%s2 + $0x10] sm:$0xf]
  %v531 = vld [vmem:[%s2 + $0x14] sm:$0xf]
  %v532 = vld [vmem:[%s2 + $0x18] sm:$0xf]
  %v533 = vld [vmem:[%s2 + $0x1c] sm:$0xf]
  %v534 = vld [vmem:[%s2 + $0x20] sm:$0xf]
  %v535 = vld [vmem:[%s2 + $0x24] sm:$0xf]
  %v536 = vld [vmem:[%s2 + $0x28] sm:$0xf]
  %v537 = vld [vmem:[%s2 + $0x2c] sm:$0xf]
  %v538 = vld [vmem:[%s2 + $0x30] sm:$0xf]
  %v539 = vld [vmem:[%s2 + $0x34] sm:$0xf]
  %v540 = vld [vmem:[%s2 + $0x38] sm:$0xf]
  %v541 = vld [vmem:[%s2 + $0x3c] sm:$0xf]
  %v558 = vunpack.c.l.b16 %v526
  %v559 = vunpack.c.l.b16 %v527
  %v560 = vunpack.c.l.b16 %v528
  %v561 = vunpack.c.l.b16 %v529
  %v562 = vunpack.c.l.b16 %v530
  %v563 = vunpack.c.l.b16 %v531
  %v564 = vunpack.c.l.b16 %v532
  %v565 = vunpack.c.l.b16 %v533
  %v566 = vunpack.c.l.b16 %v534
  %v567 = vunpack.c.l.b16 %v535
  %v568 = vunpack.c.l.b16 %v536
  %v569 = vunpack.c.l.b16 %v537
  %v570 = vunpack.c.l.b16 %v538
  %v571 = vunpack.c.l.b16 %v539
  %v572 = vunpack.c.l.b16 %v540
  %v573 = vunpack.c.l.b16 %v541
  %v574 = vpack.c.b16 %v559, %v558
  %v575 = vpack.c.b16 %v561, %v560
  %v576 = vpack.c.b16 %v563, %v562
  %v577 = vpack.c.b16 %v565, %v564
  %v578 = vpack.c.b16 %v567, %v566
  %v579 = vpack.c.b16 %v569, %v568
  %v580 = vpack.c.b16 %v571, %v570
  %v581 = vpack.c.b16 %v573, %v572
  %590 = vmatpush.bf16.msra.mxu0 %v581
  %591 = vmatpush.bf16.msra.mxu0 %v580
  %592 = vmatpush.bf16.msra.mxu0 %v579
  %593 = vmatpush.bf16.msra.mxu0 %v578
  %594 = vmatpush.bf16.msra.mxu0 %v577
  %595 = vmatpush.bf16.msra.mxu0 %v576
  %596 = vmatpush.bf16.msra.mxu0 %v575
  %597 = vmatpush.bf16.msra.mxu0 %v574
  %598 = vmatmul.bf16.gmra.mxu0 %v518
  %v599 = vpop.f32.mrf.mxu0
  %v600 = vadd.f32 0.0, %v599
  %v601 = vpop.f32.mrf.mxu0
  %v602 = vadd.f32 0.0, %v601
  %603 = vmatmul.bf16.gmra.mxu0 %v519
  %v604 = vpop.f32.mrf.mxu0
  %v605 = vadd.f32 0.0, %v604
  %v606 = vpop.f32.mrf.mxu0
  %v607 = vadd.f32 0.0, %v606
  %608 = vmatmul.bf16.gmra.mxu0 %v520
  %v609 = vpop.f32.mrf.mxu0
  %v610 = vadd.f32 0.0, %v609
  %v611 = vpop.f32.mrf.mxu0
  %v612 = vadd.f32 0.0, %v611
  %613 = vmatmul.bf16.gmra.mxu0 %v521
  %v614 = vpop.f32.mrf.mxu0
  %v615 = vadd.f32 0.0, %v614
  %v616 = vpop.f32.mrf.mxu0
  %v617 = vadd.f32 0.0, %v616
  %618 = vmatmul.bf16.gmra.mxu0 %v522
  %v619 = vpop.f32.mrf.mxu0
  %v620 = vadd.f32 0.0, %v619
  %v621 = vpop.f32.mrf.mxu0
  %v622 = vadd.f32 0.0, %v621
  %623 = vmatmul.bf16.gmra.mxu0 %v523
  %v624 = vpop.f32.mrf.mxu0
  %v625 = vadd.f32 0.0, %v624
  %v626 = vpop.f32.mrf.mxu0
  %v627 = vadd.f32 0.0, %v626
  %628 = vmatmul.bf16.gmra.mxu0 %v524
  %v629 = vpop.f32.mrf.mxu0
  %v630 = vadd.f32 0.0, %v629
  %v631 = vpop.f32.mrf.mxu0
  %v632 = vadd.f32 0.0, %v631
  %633 = vmatmul.bf16.gmra.mxu0 %v525
  %v634 = vpop.f32.mrf.mxu0
  %v635 = vadd.f32 0.0, %v634
  %v636 = vpop.f32.mrf.mxu0
  %v637 = vadd.f32 0.0, %v636
  %638 = vdwg.mxu0
  %v639 = vadd.f32 %v600, %v602
  %v640 = vadd.f32 %v639, %v605
  %v641 = vadd.f32 %v640, %v607
  %v642 = vadd.f32 %v641, %v610
  %v643 = vadd.f32 %v642, %v612
  %v644 = vadd.f32 %v643, %v615
  %v645 = vadd.f32 %v644, %v617
  %v646 = vadd.f32 %v645, %v620
  %v647 = vadd.f32 %v646, %v622
  %v648 = vadd.f32 %v647, %v625
  %v649 = vadd.f32 %v648, %v627
  %v650 = vadd.f32 %v649, %v630
  %v651 = vadd.f32 %v650, %v632
  %v652 = vadd.f32 %v651, %v635
  %v653 = vadd.f32 %v652, %v637
  %v654 = vrot.slane %v653, 4
  %v655 = vadd.f32 %v653, %v654
  %v656 = vrot.slane %v655, 2
  %v657 = vadd.f32 %v655, %v656
  %v658 = vrot.slane %v657, 1
  %v659 = vadd.f32 %v657, %v658
  %v660 = vmul.f32 %v659, 0.0078125
  %v661 = vmul.f32 %v600, %v600
  %v662 = vmul.f32 %v602, %v602
  %v663 = vmul.f32 %v605, %v605
  %v664 = vmul.f32 %v607, %v607
  %v665 = vmul.f32 %v610, %v610
  %v666 = vmul.f32 %v612, %v612
  %v667 = vmul.f32 %v615, %v615
  %v668 = vmul.f32 %v617, %v617
  %v669 = vmul.f32 %v620, %v620
  %v670 = vmul.f32 %v622, %v622
  %v671 = vmul.f32 %v625, %v625
  %v672 = vmul.f32 %v627, %v627
  %v673 = vmul.f32 %v630, %v630
  %v674 = vmul.f32 %v632, %v632
  %v675 = vmul.f32 %v635, %v635
  %v676 = vmul.f32 %v637, %v637
  %v677 = vadd.f32 %v661, %v662
  %v678 = vadd.f32 %v677, %v663
  %v679 = vadd.f32 %v678, %v664
  %v680 = vadd.f32 %v679, %v665
  %v681 = vadd.f32 %v680, %v666
  %v682 = vadd.f32 %v681, %v667
  %v683 = vadd.f32 %v682, %v668
  %v684 = vadd.f32 %v683, %v669
  %v685 = vadd.f32 %v684, %v670
  %v686 = vadd.f32 %v685, %v671
  %v687 = vadd.f32 %v686, %v672
  %v688 = vadd.f32 %v687, %v673
  %v689 = vadd.f32 %v688, %v674
  %v690 = vadd.f32 %v689, %v675
  %v691 = vadd.f32 %v690, %v676
  %v692 = vrot.slane %v691, 4
  %v693 = vadd.f32 %v691, %v692
  %v694 = vrot.slane %v693, 2
  %v695 = vadd.f32 %v693, %v694
  %v696 = vrot.slane %v695, 1
  %v697 = vadd.f32 %v695, %v696
  %v698 = vmul.f32 %v697, 0.0078125
  %v699 = vmul.f32 %v660, %v660
  %v700 = vsub.f32 %v698, %v699
  %v701 = vmax.f32 %v700, 0.0
  %v702 = vld [vmem:[%s4] sm:$0x1]
  %v703 = vadd.f32 %v701, 0.001
  %v704 = vrsqrt.pop %v703
  %v705 = vmul.f32 %v704, %v703
  %v706 = vmul.f32 %v705, %v704
  %v707 = vmul.f32 0.5, %v706
  %v708 = vsub.f32 1.5, %v707
  %v709 = vmul.f32 %v704, %v708
  %vm710 = vweird.f32 %v703
  %vm711 = vweird.f32 %v704
  %vm712 = vmor %vm710, %vm711
  %v713 = vsel %vm712, %v704, %v709
  %v714 = vmul.f32 %v702, %v713
  %v715 = vld [vmem:[%s5] sm:$0x1]
  %v716 = vmul.f32 %v660, %v714
  %v717 = vsub.f32 %v715, %v716
  %v719 = vperm.slane %v714, 0
  %v721 = vmul.f32 %v600, %v719
  %v722 = vmul.f32 %v602, %v719
  %v723 = vmul.f32 %v605, %v719
  %v724 = vmul.f32 %v607, %v719
  %v725 = vmul.f32 %v610, %v719
  %v726 = vmul.f32 %v612, %v719
  %v727 = vmul.f32 %v615, %v719
  %v728 = vmul.f32 %v617, %v719
  %v729 = vmul.f32 %v620, %v719
  %v730 = vmul.f32 %v622, %v719
  %v731 = vmul.f32 %v625, %v719
  %v732 = vmul.f32 %v627, %v719
  %v733 = vmul.f32 %v630, %v719
  %v734 = vmul.f32 %v632, %v719
  %v735 = vmul.f32 %v635, %v719
  %v736 = vmul.f32 %v637, %v719
  %v738 = vperm.slane %v717, 0
  %v740 = vadd.f32 %v721, %v738
  %v741 = vadd.f32 %v722, %v738
  %v742 = vadd.f32 %v723, %v738
  %v743 = vadd.f32 %v724, %v738
  %v744 = vadd.f32 %v725, %v738
  %v745 = vadd.f32 %v726, %v738
  %v746 = vadd.f32 %v727, %v738
  %v747 = vadd.f32 %v728, %v738
  %v748 = vadd.f32 %v729, %v738
  %v749 = vadd.f32 %v730, %v738
  %v750 = vadd.f32 %v731, %v738
  %v751 = vadd.f32 %v732, %v738
  %v752 = vadd.f32 %v733, %v738
  %v753 = vadd.f32 %v734, %v738
  %v754 = vadd.f32 %v735, %v738
  %v755 = vadd.f32 %v736, %v738
  %v756 = vxor.u32 %v740, 2147483648
  %v757 = vxor.u32 %v741, 2147483648
  %v758 = vxor.u32 %v742, 2147483648
  %v759 = vxor.u32 %v743, 2147483648
  %v760 = vxor.u32 %v744, 2147483648
  %v761 = vxor.u32 %v745, 2147483648
  %v762 = vxor.u32 %v746, 2147483648
  %v763 = vxor.u32 %v747, 2147483648
  %v764 = vxor.u32 %v748, 2147483648
  %v765 = vxor.u32 %v749, 2147483648
  %v766 = vxor.u32 %v750, 2147483648
  %v767 = vxor.u32 %v751, 2147483648
  %v768 = vxor.u32 %v752, 2147483648
  %v769 = vxor.u32 %v753, 2147483648
  %v770 = vxor.u32 %v754, 2147483648
  %v771 = vxor.u32 %v755, 2147483648
  %v772 = vmul.f32 %v756, 1.442695
  %v773 = vpow.pop %v772
  %v774 = vmul.f32 %v757, 1.442695
  %v775 = vpow.pop %v774
  %v776 = vmul.f32 %v758, 1.442695
  %v777 = vpow.pop %v776
  %v778 = vmul.f32 %v759, 1.442695
  %v779 = vpow.pop %v778
  %v780 = vmul.f32 %v760, 1.442695
  %v781 = vpow.pop %v780
  %v782 = vmul.f32 %v761, 1.442695
  %v783 = vpow.pop %v782
  %v784 = vmul.f32 %v762, 1.442695
  %v785 = vpow.pop %v784
  %v786 = vmul.f32 %v763, 1.442695
  %v787 = vpow.pop %v786
  %v788 = vmul.f32 %v764, 1.442695
  %v789 = vpow.pop %v788
  %v790 = vmul.f32 %v765, 1.442695
  %v791 = vpow.pop %v790
  %v792 = vmul.f32 %v766, 1.442695
  %v793 = vpow.pop %v792
  %v794 = vmul.f32 %v767, 1.442695
  %v795 = vpow.pop %v794
  %v796 = vmul.f32 %v768, 1.442695
  %v797 = vpow.pop %v796
  %v798 = vmul.f32 %v769, 1.442695
  %v799 = vpow.pop %v798
  %v800 = vmul.f32 %v770, 1.442695
  %v801 = vpow.pop %v800
  %v802 = vmul.f32 %v771, 1.442695
  %v803 = vpow.pop %v802
  %v804 = vadd.f32 %v773, 1.0
  %v805 = vadd.f32 %v775, 1.0
  %v806 = vadd.f32 %v777, 1.0
  %v807 = vadd.f32 %v779, 1.0
  %v808 = vadd.f32 %v781, 1.0
  %v809 = vadd.f32 %v783, 1.0
  %v810 = vadd.f32 %v785, 1.0
  %v811 = vadd.f32 %v787, 1.0
  %v812 = vadd.f32 %v789, 1.0
  %v813 = vadd.f32 %v791, 1.0
  %v814 = vadd.f32 %v793, 1.0
  %v815 = vadd.f32 %v795, 1.0
  %v816 = vadd.f32 %v797, 1.0
  %v817 = vadd.f32 %v799, 1.0
  %v818 = vadd.f32 %v801, 1.0
  %v819 = vadd.f32 %v803, 1.0
  %v820 = vrcp.pop %v804
  %v821 = vmul.f32 %v804, %v820
  %v822 = vsub.f32 1.0, %v821
  %v823 = vmul.f32 %v820, %v822
  %v824 = vadd.f32 %v820, %v823
  %vm825 = vweird.f32 %v804
  %vm826 = vweird.f32 %v820
  %vm827 = vmor %vm825, %vm826
  %v828 = vsel %vm827, %v820, %v824
  %v829 = vand.u32 2147483647, %v804
  %vm830 = vcmp.eq.f32.partialorder %v829, 8.507059e+37
  %v831 = vand.u32 %v804, 2147483648
  %v832 = vor.u32 1.1754944e-38, %v831
  %v833 = vsel %vm830, %v832, %v828
  %v834 = vmul.f32 1.0, %v833
  %v835 = vrcp.pop %v805
  %v836 = vmul.f32 %v805, %v835
  %v837 = vsub.f32 1.0, %v836
  %v838 = vmul.f32 %v835, %v837
  %v839 = vadd.f32 %v835, %v838
  %vm840 = vweird.f32 %v805
  %vm841 = vweird.f32 %v835
  %vm842 = vmor %vm840, %vm841
  %v843 = vsel %vm842, %v835, %v839
  %v844 = vand.u32 2147483647, %v805
  %vm845 = vcmp.eq.f32.partialorder %v844, 8.507059e+37
  %v846 = vand.u32 %v805, 2147483648
  %v847 = vor.u32 1.1754944e-38, %v846
  %v848 = vsel %vm845, %v847, %v843
  %v849 = vmul.f32 1.0, %v848
  %v850 = vrcp.pop %v806
  %v851 = vmul.f32 %v806, %v850
  %v852 = vsub.f32 1.0, %v851
  %v853 = vmul.f32 %v850, %v852
  %v854 = vadd.f32 %v850, %v853
  %vm855 = vweird.f32 %v806
  %vm856 = vweird.f32 %v850
  %vm857 = vmor %vm855, %vm856
  %v858 = vsel %vm857, %v850, %v854
  %v859 = vand.u32 2147483647, %v806
  %vm860 = vcmp.eq.f32.partialorder %v859, 8.507059e+37
  %v861 = vand.u32 %v806, 2147483648
  %v862 = vor.u32 1.1754944e-38, %v861
  %v863 = vsel %vm860, %v862, %v858
  %v864 = vmul.f32 1.0, %v863
  %v865 = vrcp.pop %v807
  %v866 = vmul.f32 %v807, %v865
  %v867 = vsub.f32 1.0, %v866
  %v868 = vmul.f32 %v865, %v867
  %v869 = vadd.f32 %v865, %v868
  %vm870 = vweird.f32 %v807
  %vm871 = vweird.f32 %v865
  %vm872 = vmor %vm870, %vm871
  %v873 = vsel %vm872, %v865, %v869
  %v874 = vand.u32 2147483647, %v807
  %vm875 = vcmp.eq.f32.partialorder %v874, 8.507059e+37
  %v876 = vand.u32 %v807, 2147483648
  %v877 = vor.u32 1.1754944e-38, %v876
  %v878 = vsel %vm875, %v877, %v873
  %v879 = vmul.f32 1.0, %v878
  %v880 = vrcp.pop %v808
  %v881 = vmul.f32 %v808, %v880
  %v882 = vsub.f32 1.0, %v881
  %v883 = vmul.f32 %v880, %v882
  %v884 = vadd.f32 %v880, %v883
  %vm885 = vweird.f32 %v808
  %vm886 = vweird.f32 %v880
  %vm887 = vmor %vm885, %vm886
  %v888 = vsel %vm887, %v880, %v884
  %v889 = vand.u32 2147483647, %v808
  %vm890 = vcmp.eq.f32.partialorder %v889, 8.507059e+37
  %v891 = vand.u32 %v808, 2147483648
  %v892 = vor.u32 1.1754944e-38, %v891
  %v893 = vsel %vm890, %v892, %v888
  %v894 = vmul.f32 1.0, %v893
  %v895 = vrcp.pop %v809
  %v896 = vmul.f32 %v809, %v895
  %v897 = vsub.f32 1.0, %v896
  %v898 = vmul.f32 %v895, %v897
  %v899 = vadd.f32 %v895, %v898
  %vm900 = vweird.f32 %v809
  %vm901 = vweird.f32 %v895
  %vm902 = vmor %vm900, %vm901
  %v903 = vsel %vm902, %v895, %v899
  %v904 = vand.u32 2147483647, %v809
  %vm905 = vcmp.eq.f32.partialorder %v904, 8.507059e+37
  %v906 = vand.u32 %v809, 2147483648
  %v907 = vor.u32 1.1754944e-38, %v906
  %v908 = vsel %vm905, %v907, %v903
  %v909 = vmul.f32 1.0, %v908
  %v910 = vrcp.pop %v810
  %v911 = vmul.f32 %v810, %v910
  %v912 = vsub.f32 1.0, %v911
  %v913 = vmul.f32 %v910, %v912
  %v914 = vadd.f32 %v910, %v913
  %vm915 = vweird.f32 %v810
  %vm916 = vweird.f32 %v910
  %vm917 = vmor %vm915, %vm916
  %v918 = vsel %vm917, %v910, %v914
  %v919 = vand.u32 2147483647, %v810
  %vm920 = vcmp.eq.f32.partialorder %v919, 8.507059e+37
  %v921 = vand.u32 %v810, 2147483648
  %v922 = vor.u32 1.1754944e-38, %v921
  %v923 = vsel %vm920, %v922, %v918
  %v924 = vmul.f32 1.0, %v923
  %v925 = vrcp.pop %v811
  %v926 = vmul.f32 %v811, %v925
  %v927 = vsub.f32 1.0, %v926
  %v928 = vmul.f32 %v925, %v927
  %v929 = vadd.f32 %v925, %v928
  %vm930 = vweird.f32 %v811
  %vm931 = vweird.f32 %v925
  %vm932 = vmor %vm930, %vm931
  %v933 = vsel %vm932, %v925, %v929
  %v934 = vand.u32 2147483647, %v811
  %vm935 = vcmp.eq.f32.partialorder %v934, 8.507059e+37
  %v936 = vand.u32 %v811, 2147483648
  %v937 = vor.u32 1.1754944e-38, %v936
  %v938 = vsel %vm935, %v937, %v933
  %v939 = vmul.f32 1.0, %v938
  %v940 = vrcp.pop %v812
  %v941 = vmul.f32 %v812, %v940
  %v942 = vsub.f32 1.0, %v941
  %v943 = vmul.f32 %v940, %v942
  %v944 = vadd.f32 %v940, %v943
  %vm945 = vweird.f32 %v812
  %vm946 = vweird.f32 %v940
  %vm947 = vmor %vm945, %vm946
  %v948 = vsel %vm947, %v940, %v944
  %v949 = vand.u32 2147483647, %v812
  %vm950 = vcmp.eq.f32.partialorder %v949, 8.507059e+37
  %v951 = vand.u32 %v812, 2147483648
  %v952 = vor.u32 1.1754944e-38, %v951
  %v953 = vsel %vm950, %v952, %v948
  %v954 = vmul.f32 1.0, %v953
  %v955 = vrcp.pop %v813
  %v956 = vmul.f32 %v813, %v955
  %v957 = vsub.f32 1.0, %v956
  %v958 = vmul.f32 %v955, %v957
  %v959 = vadd.f32 %v955, %v958
  %vm960 = vweird.f32 %v813
  %vm961 = vweird.f32 %v955
  %vm962 = vmor %vm960, %vm961
  %v963 = vsel %vm962, %v955, %v959
  %v964 = vand.u32 2147483647, %v813
  %vm965 = vcmp.eq.f32.partialorder %v964, 8.507059e+37
  %v966 = vand.u32 %v813, 2147483648
  %v967 = vor.u32 1.1754944e-38, %v966
  %v968 = vsel %vm965, %v967, %v963
  %v969 = vmul.f32 1.0, %v968
  %v970 = vrcp.pop %v814
  %v971 = vmul.f32 %v814, %v970
  %v972 = vsub.f32 1.0, %v971
  %v973 = vmul.f32 %v970, %v972
  %v974 = vadd.f32 %v970, %v973
  %vm975 = vweird.f32 %v814
  %vm976 = vweird.f32 %v970
  %vm977 = vmor %vm975, %vm976
  %v978 = vsel %vm977, %v970, %v974
  %v979 = vand.u32 2147483647, %v814
  %vm980 = vcmp.eq.f32.partialorder %v979, 8.507059e+37
  %v981 = vand.u32 %v814, 2147483648
  %v982 = vor.u32 1.1754944e-38, %v981
  %v983 = vsel %vm980, %v982, %v978
  %v984 = vmul.f32 1.0, %v983
  %v985 = vrcp.pop %v815
  %v986 = vmul.f32 %v815, %v985
  %v987 = vsub.f32 1.0, %v986
  %v988 = vmul.f32 %v985, %v987
  %v989 = vadd.f32 %v985, %v988
  %vm990 = vweird.f32 %v815
  %vm991 = vweird.f32 %v985
  %vm992 = vmor %vm990, %vm991
  %v993 = vsel %vm992, %v985, %v989
  %v994 = vand.u32 2147483647, %v815
  %vm995 = vcmp.eq.f32.partialorder %v994, 8.507059e+37
  %v996 = vand.u32 %v815, 2147483648
  %v997 = vor.u32 1.1754944e-38, %v996
  %v998 = vsel %vm995, %v997, %v993
  %v999 = vmul.f32 1.0, %v998
  %v1000 = vrcp.pop %v816
  %v1001 = vmul.f32 %v816, %v1000
  %v1002 = vsub.f32 1.0, %v1001
  %v1003 = vmul.f32 %v1000, %v1002
  %v1004 = vadd.f32 %v1000, %v1003
  %vm1005 = vweird.f32 %v816
  %vm1006 = vweird.f32 %v1000
  %vm1007 = vmor %vm1005, %vm1006
  %v1008 = vsel %vm1007, %v1000, %v1004
  %v1009 = vand.u32 2147483647, %v816
  %vm1010 = vcmp.eq.f32.partialorder %v1009, 8.507059e+37
  %v1011 = vand.u32 %v816, 2147483648
  %v1012 = vor.u32 1.1754944e-38, %v1011
  %v1013 = vsel %vm1010, %v1012, %v1008
  %v1014 = vmul.f32 1.0, %v1013
  %v1015 = vrcp.pop %v817
  %v1016 = vmul.f32 %v817, %v1015
  %v1017 = vsub.f32 1.0, %v1016
  %v1018 = vmul.f32 %v1015, %v1017
  %v1019 = vadd.f32 %v1015, %v1018
  %vm1020 = vweird.f32 %v817
  %vm1021 = vweird.f32 %v1015
  %vm1022 = vmor %vm1020, %vm1021
  %v1023 = vsel %vm1022, %v1015, %v1019
  %v1024 = vand.u32 2147483647, %v817
  %vm1025 = vcmp.eq.f32.partialorder %v1024, 8.507059e+37
  %v1026 = vand.u32 %v817, 2147483648
  %v1027 = vor.u32 1.1754944e-38, %v1026
  %v1028 = vsel %vm1025, %v1027, %v1023
  %v1029 = vmul.f32 1.0, %v1028
  %v1030 = vrcp.pop %v818
  %v1031 = vmul.f32 %v818, %v1030
  %v1032 = vsub.f32 1.0, %v1031
  %v1033 = vmul.f32 %v1030, %v1032
  %v1034 = vadd.f32 %v1030, %v1033
  %vm1035 = vweird.f32 %v818
  %vm1036 = vweird.f32 %v1030
  %vm1037 = vmor %vm1035, %vm1036
  %v1038 = vsel %vm1037, %v1030, %v1034
  %v1039 = vand.u32 2147483647, %v818
  %vm1040 = vcmp.eq.f32.partialorder %v1039, 8.507059e+37
  %v1041 = vand.u32 %v818, 2147483648
  %v1042 = vor.u32 1.1754944e-38, %v1041
  %v1043 = vsel %vm1040, %v1042, %v1038
  %v1044 = vmul.f32 1.0, %v1043
  %v1045 = vrcp.pop %v819
  %v1046 = vmul.f32 %v819, %v1045
  %v1047 = vsub.f32 1.0, %v1046
  %v1048 = vmul.f32 %v1045, %v1047
  %v1049 = vadd.f32 %v1045, %v1048
  %vm1050 = vweird.f32 %v819
  %vm1051 = vweird.f32 %v1045
  %vm1052 = vmor %vm1050, %vm1051
  %v1053 = vsel %vm1052, %v1045, %v1049
  %v1054 = vand.u32 2147483647, %v819
  %vm1055 = vcmp.eq.f32.partialorder %v1054, 8.507059e+37
  %v1056 = vand.u32 %v819, 2147483648
  %v1057 = vor.u32 1.1754944e-38, %v1056
  %v1058 = vsel %vm1055, %v1057, %v1053
  %v1059 = vmul.f32 1.0, %v1058
  %v1060 = vmul.f32 %v740, %v834
  %v1061 = vmul.f32 %v741, %v849
  %v1062 = vmul.f32 %v742, %v864
  %v1063 = vmul.f32 %v743, %v879
  %v1064 = vmul.f32 %v744, %v894
  %v1065 = vmul.f32 %v745, %v909
  %v1066 = vmul.f32 %v746, %v924
  %v1067 = vmul.f32 %v747, %v939
  %v1068 = vmul.f32 %v748, %v954
  %v1069 = vmul.f32 %v749, %v969
  %v1070 = vmul.f32 %v750, %v984
  %v1071 = vmul.f32 %v751, %v999
  %v1072 = vmul.f32 %v752, %v1014
  %v1073 = vmul.f32 %v753, %v1029
  %v1074 = vmul.f32 %v754, %v1044
  %v1075 = vmul.f32 %v755, %v1059
  %s1076 = scalar_lea.vmem [#allocation2], 24
  %1077 = vst [vmem:[%s1076 + $0x8] sm:$0xff] %v1060
  %1078 = vst [vmem:[%s1076 + $0x20] sm:$0xff] %v1061
  %1079 = vst [vmem:[%s1076 + $0x38] sm:$0xff] %v1062
  %1080 = vst [vmem:[%s1076 + $0x50] sm:$0xff] %v1063
  %1081 = vst [vmem:[%s1076 + $0x68] sm:$0xff] %v1064
  %1082 = vst [vmem:[%s1076 + $0x80] sm:$0xff] %v1065
  %1083 = vst [vmem:[%s1076 + $0x98] sm:$0xff] %v1066
  %1084 = vst [vmem:[%s1076 + $0xb0] sm:$0xff] %v1067
  %1085 = vst [vmem:[%s1076 + $0xf8] sm:$0xff] %v1068
  %1086 = vst [vmem:[%s1076 + $0x110] sm:$0xff] %v1069
  %1087 = vst [vmem:[%s1076 + $0x128] sm:$0xff] %v1070
  %1088 = vst [vmem:[%s1076 + $0x140] sm:$0xff] %v1071
  %1089 = vst [vmem:[%s1076 + $0x158] sm:$0xff] %v1072
  %1090 = vst [vmem:[%s1076 + $0x170] sm:$0xff] %v1073
  %1091 = vst [vmem:[%s1076 + $0x188] sm:$0xff] %v1074
  %1092 = vst [vmem:[%s1076 + $0x1a0] sm:$0xff] %v1075
  %s1093 = scalar_lea.vmem %s1, 12
  %v1094 = vld [vmem:[%s1093] sm:$0x7]
  %v1095 = vld [vmem:[%s1093 + $0x4] sm:$0x7]
  %v1096 = vld [vmem:[%s1093 + $0x8] sm:$0x7]
  %v1097 = vld [vmem:[#allocation2 + $0x7] sm:$0xff]
  %v1098 = vld [vmem:[#allocation2 + $0x1f] sm:$0xff]
  %v1099 = vld [vmem:[#allocation2 + $0x37] sm:$0xff]
  %v1100 = vld [vmem:[#allocation2 + $0x4f] sm:$0xff]
  %v1101 = vld [vmem:[#allocation2 + $0x67] sm:$0xff]
  %v1102 = vld [vmem:[#allocation2 + $0x7f] sm:$0xff]
  %v1103 = vld [vmem:[#allocation2 + $0x97] sm:$0xff]
  %v1104 = vld [vmem:[#allocation2 + $0xaf] sm:$0xff]
  %v1105 = vld [vmem:[#allocation2 + $0xc7] sm:$0xff]
  %v1106 = vld [vmem:[#allocation2 + $0xdf] sm:$0xff]
  %v1107 = vld [vmem:[#allocation2 + $0xf7] sm:$0xff]
  %v1108 = vld [vmem:[#allocation2 + $0x10f] sm:$0xff]
  %v1109 = vld [vmem:[#allocation2 + $0x127] sm:$0xff]
  %v1110 = vld [vmem:[#allocation2 + $0x13f] sm:$0xff]
  %v1111 = vld [vmem:[#allocation2 + $0x157] sm:$0xff]
  %v1112 = vld [vmem:[#allocation2 + $0x16f] sm:$0xff]
  %v1113 = vld [vmem:[#allocation2 + $0x187] sm:$0xff]
  %v1114 = vld [vmem:[#allocation2 + $0x19f] sm:$0xff]
  %v1115 = vld [vmem:[#allocation2 + $0x1b7] sm:$0xff]
  %v1116 = vld [vmem:[#allocation2 + $0x1cf] sm:$0xff]
  %v1117 = vld [vmem:[#allocation2 + $0x8] sm:$0xff]
  %v1118 = vld [vmem:[#allocation2 + $0x20] sm:$0xff]
  %v1119 = vld [vmem:[#allocation2 + $0x38] sm:$0xff]
  %v1120 = vld [vmem:[#allocation2 + $0x50] sm:$0xff]
  %v1121 = vld [vmem:[#allocation2 + $0x68] sm:$0xff]
  %v1122 = vld [vmem:[#allocation2 + $0x80] sm:$0xff]
  %v1123 = vld [vmem:[#allocation2 + $0x98] sm:$0xff]
  %v1124 = vld [vmem:[#allocation2 + $0xb0] sm:$0xff]
  %v1125 = vld [vmem:[#allocation2 + $0xc8] sm:$0xff]
  %v1126 = vld [vmem:[#allocation2 + $0xe0] sm:$0xff]
  %v1127 = vld [vmem:[#allocation2 + $0xf8] sm:$0xff]
  %v1128 = vld [vmem:[#allocation2 + $0x110] sm:$0xff]
  %v1129 = vld [vmem:[#allocation2 + $0x128] sm:$0xff]
  %v1130 = vld [vmem:[#allocation2 + $0x140] sm:$0xff]
  %v1131 = vld [vmem:[#allocation2 + $0x158] sm:$0xff]
  %v1132 = vld [vmem:[#allocation2 + $0x170] sm:$0xff]
  %v1133 = vld [vmem:[#allocation2 + $0x188] sm:$0xff]
  %v1134 = vld [vmem:[#allocation2 + $0x1a0] sm:$0xff]
  %v1135 = vld [vmem:[#allocation2 + $0x1b8] sm:$0xff]
  %v1136 = vld [vmem:[#allocation2 + $0x1d0] sm:$0xff]
  %v1137 = vld [vmem:[#allocation2 + $0x9] sm:$0xff]
  %v1138 = vld [vmem:[#allocation2 + $0x21] sm:$0xff]
  %v1139 = vld [vmem:[#allocation2 + $0x39] sm:$0xff]
  %v1140 = vld [vmem:[#allocation2 + $0x51] sm:$0xff]
  %v1141 = vld [vmem:[#allocation2 + $0x69] sm:$0xff]
  %v1142 = vld [vmem:[#allocation2 + $0x81] sm:$0xff]
  %v1143 = vld [vmem:[#allocation2 + $0x99] sm:$0xff]
  %v1144 = vld [vmem:[#allocation2 + $0xb1] sm:$0xff]
  %v1145 = vld [vmem:[#allocation2 + $0xc9] sm:$0xff]
  %v1146 = vld [vmem:[#allocation2 + $0xe1] sm:$0xff]
  %v1147 = vld [vmem:[#allocation2 + $0xf9] sm:$0xff]
  %v1148 = vld [vmem:[#allocation2 + $0x111] sm:$0xff]
  %v1149 = vld [vmem:[#allocation2 + $0x129] sm:$0xff]
  %v1150 = vld [vmem:[#allocation2 + $0x141] sm:$0xff]
  %v1151 = vld [vmem:[#allocation2 + $0x159] sm:$0xff]
  %v1152 = vld [vmem:[#allocation2 + $0x171] sm:$0xff]
  %v1153 = vld [vmem:[#allocation2 + $0x189] sm:$0xff]
  %v1154 = vld [vmem:[#allocation2 + $0x1a1] sm:$0xff]
  %v1155 = vld [vmem:[#allocation2 + $0x1b9] sm:$0xff]
  %v1156 = vld [vmem:[#allocation2 + $0x1d1] sm:$0xff]
  %v1157 = vperm.slane %v1094, 0
  %v1158 = vmul.f32 %v1097, %v1157
  %v1159 = vmul.f32 %v1098, %v1157
  %v1160 = vmul.f32 %v1099, %v1157
  %v1161 = vmul.f32 %v1100, %v1157
  %v1162 = vmul.f32 %v1101, %v1157
  %v1163 = vmul.f32 %v1102, %v1157
  %v1164 = vmul.f32 %v1103, %v1157
  %v1165 = vmul.f32 %v1104, %v1157
  %v1166 = vmul.f32 %v1107, %v1157
  %v1167 = vmul.f32 %v1108, %v1157
  %v1168 = vmul.f32 %v1109, %v1157
  %v1169 = vmul.f32 %v1110, %v1157
  %v1170 = vmul.f32 %v1111, %v1157
  %v1171 = vmul.f32 %v1112, %v1157
  %v1172 = vmul.f32 %v1113, %v1157
  %v1173 = vmul.f32 %v1114, %v1157
  %v1174 = vperm.slane %v1094, 1
  %v1175 = vmul.f32 %v1117, %v1174
  %v1176 = vmul.f32 %v1118, %v1174
  %v1177 = vmul.f32 %v1119, %v1174
  %v1178 = vmul.f32 %v1120, %v1174
  %v1179 = vmul.f32 %v1121, %v1174
  %v1180 = vmul.f32 %v1122, %v1174
  %v1181 = vmul.f32 %v1123, %v1174
  %v1182 = vmul.f32 %v1124, %v1174
  %v1183 = vmul.f32 %v1127, %v1174
  %v1184 = vmul.f32 %v1128, %v1174
  %v1185 = vmul.f32 %v1129, %v1174
  %v1186 = vmul.f32 %v1130, %v1174
  %v1187 = vmul.f32 %v1131, %v1174
  %v1188 = vmul.f32 %v1132, %v1174
  %v1189 = vmul.f32 %v1133, %v1174
  %v1190 = vmul.f32 %v1134, %v1174
  %v1191 = vadd.f32 %v1158, %v1175
  %v1192 = vadd.f32 %v1159, %v1176
  %v1193 = vadd.f32 %v1160, %v1177
  %v1194 = vadd.f32 %v1161, %v1178
  %v1195 = vadd.f32 %v1162, %v1179
  %v1196 = vadd.f32 %v1163, %v1180
  %v1197 = vadd.f32 %v1164, %v1181
  %v1198 = vadd.f32 %v1165, %v1182
  %v1199 = vadd.f32 %v1166, %v1183
  %v1200 = vadd.f32 %v1167, %v1184
  %v1201 = vadd.f32 %v1168, %v1185
  %v1202 = vadd.f32 %v1169, %v1186
  %v1203 = vadd.f32 %v1170, %v1187
  %v1204 = vadd.f32 %v1171, %v1188
  %v1205 = vadd.f32 %v1172, %v1189
  %v1206 = vadd.f32 %v1173, %v1190
  %v1207 = vperm.slane %v1094, 2
  %v1208 = vmul.f32 %v1137, %v1207
  %v1209 = vmul.f32 %v1138, %v1207
  %v1210 = vmul.f32 %v1139, %v1207
  %v1211 = vmul.f32 %v1140, %v1207
  %v1212 = vmul.f32 %v1141, %v1207
  %v1213 = vmul.f32 %v1142, %v1207
  %v1214 = vmul.f32 %v1143, %v1207
  %v1215 = vmul.f32 %v1144, %v1207
  %v1216 = vmul.f32 %v1147, %v1207
  %v1217 = vmul.f32 %v1148, %v1207
  %v1218 = vmul.f32 %v1149, %v1207
  %v1219 = vmul.f32 %v1150, %v1207
  %v1220 = vmul.f32 %v1151, %v1207
  %v1221 = vmul.f32 %v1152, %v1207
  %v1222 = vmul.f32 %v1153, %v1207
  %v1223 = vmul.f32 %v1154, %v1207
  %v1224 = vadd.f32 %v1191, %v1208
  %v1225 = vadd.f32 %v1192, %v1209
  %v1226 = vadd.f32 %v1193, %v1210
  %v1227 = vadd.f32 %v1194, %v1211
  %v1228 = vadd.f32 %v1195, %v1212
  %v1229 = vadd.f32 %v1196, %v1213
  %v1230 = vadd.f32 %v1197, %v1214
  %v1231 = vadd.f32 %v1198, %v1215
  %v1232 = vadd.f32 %v1199, %v1216
  %v1233 = vadd.f32 %v1200, %v1217
  %v1234 = vadd.f32 %v1201, %v1218
  %v1235 = vadd.f32 %v1202, %v1219
  %v1236 = vadd.f32 %v1203, %v1220
  %v1237 = vadd.f32 %v1204, %v1221
  %v1238 = vadd.f32 %v1205, %v1222
  %v1239 = vadd.f32 %v1206, %v1223
  %v1240 = vperm.slane %v1095, 0
  %v1241 = vmul.f32 %v1098, %v1240
  %v1242 = vmul.f32 %v1099, %v1240
  %v1243 = vmul.f32 %v1100, %v1240
  %v1244 = vmul.f32 %v1101, %v1240
  %v1245 = vmul.f32 %v1102, %v1240
  %v1246 = vmul.f32 %v1103, %v1240
  %v1247 = vmul.f32 %v1104, %v1240
  %v1248 = vmul.f32 %v1105, %v1240
  %v1249 = vmul.f32 %v1108, %v1240
  %v1250 = vmul.f32 %v1109, %v1240
  %v1251 = vmul.f32 %v1110, %v1240
  %v1252 = vmul.f32 %v1111, %v1240
  %v1253 = vmul.f32 %v1112, %v1240
  %v1254 = vmul.f32 %v1113, %v1240
  %v1255 = vmul.f32 %v1114, %v1240
  %v1256 = vmul.f32 %v1115, %v1240
  %v1257 = vadd.f32 %v1224, %v1241
  %v1258 = vadd.f32 %v1225, %v1242
  %v1259 = vadd.f32 %v1226, %v1243
  %v1260 = vadd.f32 %v1227, %v1244
  %v1261 = vadd.f32 %v1228, %v1245
  %v1262 = vadd.f32 %v1229, %v1246
  %v1263 = vadd.f32 %v1230, %v1247
  %v1264 = vadd.f32 %v1231, %v1248
  %v1265 = vadd.f32 %v1232, %v1249
  %v1266 = vadd.f32 %v1233, %v1250
  %v1267 = vadd.f32 %v1234, %v1251
  %v1268 = vadd.f32 %v1235, %v1252
  %v1269 = vadd.f32 %v1236, %v1253
  %v1270 = vadd.f32 %v1237, %v1254
  %v1271 = vadd.f32 %v1238, %v1255
  %v1272 = vadd.f32 %v1239, %v1256
  %v1273 = vperm.slane %v1095, 1
  %v1274 = vmul.f32 %v1118, %v1273
  %v1275 = vmul.f32 %v1119, %v1273
  %v1276 = vmul.f32 %v1120, %v1273
  %v1277 = vmul.f32 %v1121, %v1273
  %v1278 = vmul.f32 %v1122, %v1273
  %v1279 = vmul.f32 %v1123, %v1273
  %v1280 = vmul.f32 %v1124, %v1273
  %v1281 = vmul.f32 %v1125, %v1273
  %v1282 = vmul.f32 %v1128, %v1273
  %v1283 = vmul.f32 %v1129, %v1273
  %v1284 = vmul.f32 %v1130, %v1273
  %v1285 = vmul.f32 %v1131, %v1273
  %v1286 = vmul.f32 %v1132, %v1273
  %v1287 = vmul.f32 %v1133, %v1273
  %v1288 = vmul.f32 %v1134, %v1273
  %v1289 = vmul.f32 %v1135, %v1273
  %v1290 = vadd.f32 %v1257, %v1274
  %v1291 = vadd.f32 %v1258, %v1275
  %v1292 = vadd.f32 %v1259, %v1276
  %v1293 = vadd.f32 %v1260, %v1277
  %v1294 = vadd.f32 %v1261, %v1278
  %v1295 = vadd.f32 %v1262, %v1279
  %v1296 = vadd.f32 %v1263, %v1280
  %v1297 = vadd.f32 %v1264, %v1281
  %v1298 = vadd.f32 %v1265, %v1282
  %v1299 = vadd.f32 %v1266, %v1283
  %v1300 = vadd.f32 %v1267, %v1284
  %v1301 = vadd.f32 %v1268, %v1285
  %v1302 = vadd.f32 %v1269, %v1286
  %v1303 = vadd.f32 %v1270, %v1287
  %v1304 = vadd.f32 %v1271, %v1288
  %v1305 = vadd.f32 %v1272, %v1289
  %v1306 = vperm.slane %v1095, 2
  %v1307 = vmul.f32 %v1138, %v1306
  %v1308 = vmul.f32 %v1139, %v1306
  %v1309 = vmul.f32 %v1140, %v1306
  %v1310 = vmul.f32 %v1141, %v1306
  %v1311 = vmul.f32 %v1142, %v1306
  %v1312 = vmul.f32 %v1143, %v1306
  %v1313 = vmul.f32 %v1144, %v1306
  %v1314 = vmul.f32 %v1145, %v1306
  %v1315 = vmul.f32 %v1148, %v1306
  %v1316 = vmul.f32 %v1149, %v1306
  %v1317 = vmul.f32 %v1150, %v1306
  %v1318 = vmul.f32 %v1151, %v1306
  %v1319 = vmul.f32 %v1152, %v1306
  %v1320 = vmul.f32 %v1153, %v1306
  %v1321 = vmul.f32 %v1154, %v1306
  %v1322 = vmul.f32 %v1155, %v1306
  %v1323 = vadd.f32 %v1290, %v1307
  %v1324 = vadd.f32 %v1291, %v1308
  %v1325 = vadd.f32 %v1292, %v1309
  %v1326 = vadd.f32 %v1293, %v1310
  %v1327 = vadd.f32 %v1294, %v1311
  %v1328 = vadd.f32 %v1295, %v1312
  %v1329 = vadd.f32 %v1296, %v1313
  %v1330 = vadd.f32 %v1297, %v1314
  %v1331 = vadd.f32 %v1298, %v1315
  %v1332 = vadd.f32 %v1299, %v1316
  %v1333 = vadd.f32 %v1300, %v1317
  %v1334 = vadd.f32 %v1301, %v1318
  %v1335 = vadd.f32 %v1302, %v1319
  %v1336 = vadd.f32 %v1303, %v1320
  %v1337 = vadd.f32 %v1304, %v1321
  %v1338 = vadd.f32 %v1305, %v1322
  %v1339 = vperm.slane %v1096, 0
  %v1340 = vmul.f32 %v1099, %v1339
  %v1341 = vmul.f32 %v1100, %v1339
  %v1342 = vmul.f32 %v1101, %v1339
  %v1343 = vmul.f32 %v1102, %v1339
  %v1344 = vmul.f32 %v1103, %v1339
  %v1345 = vmul.f32 %v1104, %v1339
  %v1346 = vmul.f32 %v1105, %v1339
  %v1347 = vmul.f32 %v1106, %v1339
  %v1348 = vmul.f32 %v1109, %v1339
  %v1349 = vmul.f32 %v1110, %v1339
  %v1350 = vmul.f32 %v1111, %v1339
  %v1351 = vmul.f32 %v1112, %v1339
  %v1352 = vmul.f32 %v1113, %v1339
  %v1353 = vmul.f32 %v1114, %v1339
  %v1354 = vmul.f32 %v1115, %v1339
  %v1355 = vmul.f32 %v1116, %v1339
  %v1356 = vadd.f32 %v1323, %v1340
  %v1357 = vadd.f32 %v1324, %v1341
  %v1358 = vadd.f32 %v1325, %v1342
  %v1359 = vadd.f32 %v1326, %v1343
  %v1360 = vadd.f32 %v1327, %v1344
  %v1361 = vadd.f32 %v1328, %v1345
  %v1362 = vadd.f32 %v1329, %v1346
  %v1363 = vadd.f32 %v1330, %v1347
  %v1364 = vadd.f32 %v1331, %v1348
  %v1365 = vadd.f32 %v1332, %v1349
  %v1366 = vadd.f32 %v1333, %v1350
  %v1367 = vadd.f32 %v1334, %v1351
  %v1368 = vadd.f32 %v1335, %v1352
  %v1369 = vadd.f32 %v1336, %v1353
  %v1370 = vadd.f32 %v1337, %v1354
  %v1371 = vadd.f32 %v1338, %v1355
  %v1372 = vperm.slane %v1096, 1
  %v1373 = vmul.f32 %v1119, %v1372
  %v1374 = vmul.f32 %v1120, %v1372
  %v1375 = vmul.f32 %v1121, %v1372
  %v1376 = vmul.f32 %v1122, %v1372
  %v1377 = vmul.f32 %v1123, %v1372
  %v1378 = vmul.f32 %v1124, %v1372
  %v1379 = vmul.f32 %v1125, %v1372
  %v1380 = vmul.f32 %v1126, %v1372
  %v1381 = vmul.f32 %v1129, %v1372
  %v1382 = vmul.f32 %v1130, %v1372
  %v1383 = vmul.f32 %v1131, %v1372
  %v1384 = vmul.f32 %v1132, %v1372
  %v1385 = vmul.f32 %v1133, %v1372
  %v1386 = vmul.f32 %v1134, %v1372
  %v1387 = vmul.f32 %v1135, %v1372
  %v1388 = vmul.f32 %v1136, %v1372
  %v1389 = vadd.f32 %v1356, %v1373
  %v1390 = vadd.f32 %v1357, %v1374
  %v1391 = vadd.f32 %v1358, %v1375
  %v1392 = vadd.f32 %v1359, %v1376
  %v1393 = vadd.f32 %v1360, %v1377
  %v1394 = vadd.f32 %v1361, %v1378
  %v1395 = vadd.f32 %v1362, %v1379
  %v1396 = vadd.f32 %v1363, %v1380
  %v1397 = vadd.f32 %v1364, %v1381
  %v1398 = vadd.f32 %v1365, %v1382
  %v1399 = vadd.f32 %v1366, %v1383
  %v1400 = vadd.f32 %v1367, %v1384
  %v1401 = vadd.f32 %v1368, %v1385
  %v1402 = vadd.f32 %v1369, %v1386
  %v1403 = vadd.f32 %v1370, %v1387
  %v1404 = vadd.f32 %v1371, %v1388
  %v1405 = vperm.slane %v1096, 2
  %v1406 = vmul.f32 %v1139, %v1405
  %v1407 = vmul.f32 %v1140, %v1405
  %v1408 = vmul.f32 %v1141, %v1405
  %v1409 = vmul.f32 %v1142, %v1405
  %v1410 = vmul.f32 %v1143, %v1405
  %v1411 = vmul.f32 %v1144, %v1405
  %v1412 = vmul.f32 %v1145, %v1405
  %v1413 = vmul.f32 %v1146, %v1405
  %v1414 = vmul.f32 %v1149, %v1405
  %v1415 = vmul.f32 %v1150, %v1405
  %v1416 = vmul.f32 %v1151, %v1405
  %v1417 = vmul.f32 %v1152, %v1405
  %v1418 = vmul.f32 %v1153, %v1405
  %v1419 = vmul.f32 %v1154, %v1405
  %v1420 = vmul.f32 %v1155, %v1405
  %v1421 = vmul.f32 %v1156, %v1405
  %v1422 = vadd.f32 %v1389, %v1406
  %v1423 = vadd.f32 %v1390, %v1407
  %v1424 = vadd.f32 %v1391, %v1408
  %v1425 = vadd.f32 %v1392, %v1409
  %v1426 = vadd.f32 %v1393, %v1410
  %v1427 = vadd.f32 %v1394, %v1411
  %v1428 = vadd.f32 %v1395, %v1412
  %v1429 = vadd.f32 %v1396, %v1413
  %v1430 = vadd.f32 %v1397, %v1414
  %v1431 = vadd.f32 %v1398, %v1415
  %v1432 = vadd.f32 %v1399, %v1416
  %v1433 = vadd.f32 %v1400, %v1417
  %v1434 = vadd.f32 %v1401, %v1418
  %v1435 = vadd.f32 %v1402, %v1419
  %v1436 = vadd.f32 %v1403, %v1420
  %v1437 = vadd.f32 %v1404, %v1421
  %v1438 = vpack.c.bf16 %v1423, %v1422
  %v1439 = vpack.c.bf16 %v1425, %v1424
  %v1440 = vpack.c.bf16 %v1427, %v1426
  %v1441 = vpack.c.bf16 %v1429, %v1428
  %v1442 = vpack.c.bf16 %v1431, %v1430
  %v1443 = vpack.c.bf16 %v1433, %v1432
  %v1444 = vpack.c.bf16 %v1435, %v1434
  %v1445 = vpack.c.bf16 %v1437, %v1436
  %s1446 = scalar_lea.vmem %s2, 64
  %v1447 = vld [vmem:[%s1446] sm:$0xf]
  %v1448 = vld [vmem:[%s1446 + $0x4] sm:$0xf]
  %v1449 = vld [vmem:[%s1446 + $0x8] sm:$0xf]
  %v1450 = vld [vmem:[%s1446 + $0xc] sm:$0xf]
  %v1451 = vld [vmem:[%s1446 + $0x10] sm:$0xf]
  %v1452 = vld [vmem:[%s1446 + $0x14] sm:$0xf]
  %v1453 = vld [vmem:[%s1446 + $0x18] sm:$0xf]
  %v1454 = vld [vmem:[%s1446 + $0x1c] sm:$0xf]
  %v1455 = vld [vmem:[%s1446 + $0x20] sm:$0xf]
  %v1456 = vld [vmem:[%s1446 + $0x24] sm:$0xf]
  %v1457 = vld [vmem:[%s1446 + $0x28] sm:$0xf]
  %v1458 = vld [vmem:[%s1446 + $0x2c] sm:$0xf]
  %v1459 = vld [vmem:[%s1446 + $0x30] sm:$0xf]
  %v1460 = vld [vmem:[%s1446 + $0x34] sm:$0xf]
  %v1461 = vld [vmem:[%s1446 + $0x38] sm:$0xf]
  %v1462 = vld [vmem:[%s1446 + $0x3c] sm:$0xf]
  %v1479 = vunpack.c.l.b16 %v1447
  %v1480 = vunpack.c.l.b16 %v1448
  %v1481 = vunpack.c.l.b16 %v1449
  %v1482 = vunpack.c.l.b16 %v1450
  %v1483 = vunpack.c.l.b16 %v1451
  %v1484 = vunpack.c.l.b16 %v1452
  %v1485 = vunpack.c.l.b16 %v1453
  %v1486 = vunpack.c.l.b16 %v1454
  %v1487 = vunpack.c.l.b16 %v1455
  %v1488 = vunpack.c.l.b16 %v1456
  %v1489 = vunpack.c.l.b16 %v1457
  %v1490 = vunpack.c.l.b16 %v1458
  %v1491 = vunpack.c.l.b16 %v1459
  %v1492 = vunpack.c.l.b16 %v1460
  %v1493 = vunpack.c.l.b16 %v1461
  %v1494 = vunpack.c.l.b16 %v1462
  %v1495 = vpack.c.b16 %v1480, %v1479
  %v1496 = vpack.c.b16 %v1482, %v1481
  %v1497 = vpack.c.b16 %v1484, %v1483
  %v1498 = vpack.c.b16 %v1486, %v1485
  %v1499 = vpack.c.b16 %v1488, %v1487
  %v1500 = vpack.c.b16 %v1490, %v1489
  %v1501 = vpack.c.b16 %v1492, %v1491
  %v1502 = vpack.c.b16 %v1494, %v1493
  %1511 = vmatpush.bf16.msra.mxu0 %v1502
  %1512 = vmatpush.bf16.msra.mxu0 %v1501
  %1513 = vmatpush.bf16.msra.mxu0 %v1500
  %1514 = vmatpush.bf16.msra.mxu0 %v1499
  %1515 = vmatpush.bf16.msra.mxu0 %v1498
  %1516 = vmatpush.bf16.msra.mxu0 %v1497
  %1517 = vmatpush.bf16.msra.mxu0 %v1496
  %1518 = vmatpush.bf16.msra.mxu0 %v1495
  %1519 = vmatmul.bf16.gmra.mxu0 %v1438
  %v1520 = vpop.f32.mrf.mxu0
  %v1521 = vadd.f32 0.0, %v1520
  %v1522 = vpop.f32.mrf.mxu0
  %v1523 = vadd.f32 0.0, %v1522
  %1524 = vmatmul.bf16.gmra.mxu0 %v1439
  %v1525 = vpop.f32.mrf.mxu0
  %v1526 = vadd.f32 0.0, %v1525
  %v1527 = vpop.f32.mrf.mxu0
  %v1528 = vadd.f32 0.0, %v1527
  %1529 = vmatmul.bf16.gmra.mxu0 %v1440
  %v1530 = vpop.f32.mrf.mxu0
  %v1531 = vadd.f32 0.0, %v1530
  %v1532 = vpop.f32.mrf.mxu0
  %v1533 = vadd.f32 0.0, %v1532
  %1534 = vmatmul.bf16.gmra.mxu0 %v1441
  %v1535 = vpop.f32.mrf.mxu0
  %v1536 = vadd.f32 0.0, %v1535
  %v1537 = vpop.f32.mrf.mxu0
  %v1538 = vadd.f32 0.0, %v1537
  %1539 = vmatmul.bf16.gmra.mxu0 %v1442
  %v1540 = vpop.f32.mrf.mxu0
  %v1541 = vadd.f32 0.0, %v1540
  %v1542 = vpop.f32.mrf.mxu0
  %v1543 = vadd.f32 0.0, %v1542
  %1544 = vmatmul.bf16.gmra.mxu0 %v1443
  %v1545 = vpop.f32.mrf.mxu0
  %v1546 = vadd.f32 0.0, %v1545
  %v1547 = vpop.f32.mrf.mxu0
  %v1548 = vadd.f32 0.0, %v1547
  %1549 = vmatmul.bf16.gmra.mxu0 %v1444
  %v1550 = vpop.f32.mrf.mxu0
  %v1551 = vadd.f32 0.0, %v1550
  %v1552 = vpop.f32.mrf.mxu0
  %v1553 = vadd.f32 0.0, %v1552
  %1554 = vmatmul.bf16.gmra.mxu0 %v1445
  %v1555 = vpop.f32.mrf.mxu0
  %v1556 = vadd.f32 0.0, %v1555
  %v1557 = vpop.f32.mrf.mxu0
  %v1558 = vadd.f32 0.0, %v1557
  %1559 = vdwg.mxu0
  %v1560 = vadd.f32 %v1521, %v1523
  %v1561 = vadd.f32 %v1560, %v1526
  %v1562 = vadd.f32 %v1561, %v1528
  %v1563 = vadd.f32 %v1562, %v1531
  %v1564 = vadd.f32 %v1563, %v1533
  %v1565 = vadd.f32 %v1564, %v1536
  %v1566 = vadd.f32 %v1565, %v1538
  %v1567 = vadd.f32 %v1566, %v1541
  %v1568 = vadd.f32 %v1567, %v1543
  %v1569 = vadd.f32 %v1568, %v1546
  %v1570 = vadd.f32 %v1569, %v1548
  %v1571 = vadd.f32 %v1570, %v1551
  %v1572 = vadd.f32 %v1571, %v1553
  %v1573 = vadd.f32 %v1572, %v1556
  %v1574 = vadd.f32 %v1573, %v1558
  %v1575 = vrot.slane %v1574, 4
  %v1576 = vadd.f32 %v1574, %v1575
  %v1577 = vrot.slane %v1576, 2
  %v1578 = vadd.f32 %v1576, %v1577
  %v1579 = vrot.slane %v1578, 1
  %v1580 = vadd.f32 %v1578, %v1579
  %v1581 = vmul.f32 %v1580, 0.0078125
  %v1582 = vmul.f32 %v1521, %v1521
  %v1583 = vmul.f32 %v1523, %v1523
  %v1584 = vmul.f32 %v1526, %v1526
  %v1585 = vmul.f32 %v1528, %v1528
  %v1586 = vmul.f32 %v1531, %v1531
  %v1587 = vmul.f32 %v1533, %v1533
  %v1588 = vmul.f32 %v1536, %v1536
  %v1589 = vmul.f32 %v1538, %v1538
  %v1590 = vmul.f32 %v1541, %v1541
  %v1591 = vmul.f32 %v1543, %v1543
  %v1592 = vmul.f32 %v1546, %v1546
  %v1593 = vmul.f32 %v1548, %v1548
  %v1594 = vmul.f32 %v1551, %v1551
  %v1595 = vmul.f32 %v1553, %v1553
  %v1596 = vmul.f32 %v1556, %v1556
  %v1597 = vmul.f32 %v1558, %v1558
  %v1598 = vadd.f32 %v1582, %v1583
  %v1599 = vadd.f32 %v1598, %v1584
  %v1600 = vadd.f32 %v1599, %v1585
  %v1601 = vadd.f32 %v1600, %v1586
  %v1602 = vadd.f32 %v1601, %v1587
  %v1603 = vadd.f32 %v1602, %v1588
  %v1604 = vadd.f32 %v1603, %v1589
  %v1605 = vadd.f32 %v1604, %v1590
  %v1606 = vadd.f32 %v1605, %v1591
  %v1607 = vadd.f32 %v1606, %v1592
  %v1608 = vadd.f32 %v1607, %v1593
  %v1609 = vadd.f32 %v1608, %v1594
  %v1610 = vadd.f32 %v1609, %v1595
  %v1611 = vadd.f32 %v1610, %v1596
  %v1612 = vadd.f32 %v1611, %v1597
  %v1613 = vrot.slane %v1612, 4
  %v1614 = vadd.f32 %v1612, %v1613
  %v1615 = vrot.slane %v1614, 2
  %v1616 = vadd.f32 %v1614, %v1615
  %v1617 = vrot.slane %v1616, 1
  %v1618 = vadd.f32 %v1616, %v1617
  %v1619 = vmul.f32 %v1618, 0.0078125
  %v1620 = vmul.f32 %v1581, %v1581
  %v1621 = vsub.f32 %v1619, %v1620
  %v1622 = vmax.f32 %v1621, 0.0
  %s1623 = scalar_lea.vmem %s4, 1
  %v1624 = vld [vmem:[%s1623] sm:$0x1]
  %v1625 = vadd.f32 %v1622, 0.001
  %v1626 = vrsqrt.pop %v1625
  %v1627 = vmul.f32 %v1626, %v1625
  %v1628 = vmul.f32 %v1627, %v1626
  %v1629 = vmul.f32 0.5, %v1628
  %v1630 = vsub.f32 1.5, %v1629
  %v1631 = vmul.f32 %v1626, %v1630
  %vm1632 = vweird.f32 %v1625
  %vm1633 = vweird.f32 %v1626
  %vm1634 = vmor %vm1632, %vm1633
  %v1635 = vsel %vm1634, %v1626, %v1631
  %v1636 = vmul.f32 %v1624, %v1635
  %s1637 = scalar_lea.vmem %s5, 1
  %v1638 = vld [vmem:[%s1637] sm:$0x1]
  %v1639 = vmul.f32 %v1581, %v1636
  %v1640 = vsub.f32 %v1638, %v1639
  %v1642 = vperm.slane %v1636, 0
  %v1644 = vmul.f32 %v1521, %v1642
  %v1645 = vmul.f32 %v1523, %v1642
  %v1646 = vmul.f32 %v1526, %v1642
  %v1647 = vmul.f32 %v1528, %v1642
  %v1648 = vmul.f32 %v1531, %v1642
  %v1649 = vmul.f32 %v1533, %v1642
  %v1650 = vmul.f32 %v1536, %v1642
  %v1651 = vmul.f32 %v1538, %v1642
  %v1652 = vmul.f32 %v1541, %v1642
  %v1653 = vmul.f32 %v1543, %v1642
  %v1654 = vmul.f32 %v1546, %v1642
  %v1655 = vmul.f32 %v1548, %v1642
  %v1656 = vmul.f32 %v1551, %v1642
  %v1657 = vmul.f32 %v1553, %v1642
  %v1658 = vmul.f32 %v1556, %v1642
  %v1659 = vmul.f32 %v1558, %v1642
  %v1661 = vperm.slane %v1640, 0
  %v1663 = vadd.f32 %v1644, %v1661
  %v1664 = vadd.f32 %v1645, %v1661
  %v1665 = vadd.f32 %v1646, %v1661
  %v1666 = vadd.f32 %v1647, %v1661
  %v1667 = vadd.f32 %v1648, %v1661
  %v1668 = vadd.f32 %v1649, %v1661
  %v1669 = vadd.f32 %v1650, %v1661
  %v1670 = vadd.f32 %v1651, %v1661
  %v1671 = vadd.f32 %v1652, %v1661
  %v1672 = vadd.f32 %v1653, %v1661
  %v1673 = vadd.f32 %v1654, %v1661
  %v1674 = vadd.f32 %v1655, %v1661
  %v1675 = vadd.f32 %v1656, %v1661
  %v1676 = vadd.f32 %v1657, %v1661
  %v1677 = vadd.f32 %v1658, %v1661
  %v1678 = vadd.f32 %v1659, %v1661
  %v1679 = vxor.u32 %v1663, 2147483648
  %v1680 = vxor.u32 %v1664, 2147483648
  %v1681 = vxor.u32 %v1665, 2147483648
  %v1682 = vxor.u32 %v1666, 2147483648
  %v1683 = vxor.u32 %v1667, 2147483648
  %v1684 = vxor.u32 %v1668, 2147483648
  %v1685 = vxor.u32 %v1669, 2147483648
  %v1686 = vxor.u32 %v1670, 2147483648
  %v1687 = vxor.u32 %v1671, 2147483648
  %v1688 = vxor.u32 %v1672, 2147483648
  %v1689 = vxor.u32 %v1673, 2147483648
  %v1690 = vxor.u32 %v1674, 2147483648
  %v1691 = vxor.u32 %v1675, 2147483648
  %v1692 = vxor.u32 %v1676, 2147483648
  %v1693 = vxor.u32 %v1677, 2147483648
  %v1694 = vxor.u32 %v1678, 2147483648
  %v1695 = vmul.f32 %v1679, 1.442695
  %v1696 = vpow.pop %v1695
  %v1697 = vmul.f32 %v1680, 1.442695
  %v1698 = vpow.pop %v1697
  %v1699 = vmul.f32 %v1681, 1.442695
  %v1700 = vpow.pop %v1699
  %v1701 = vmul.f32 %v1682, 1.442695
  %v1702 = vpow.pop %v1701
  %v1703 = vmul.f32 %v1683, 1.442695
  %v1704 = vpow.pop %v1703
  %v1705 = vmul.f32 %v1684, 1.442695
  %v1706 = vpow.pop %v1705
  %v1707 = vmul.f32 %v1685, 1.442695
  %v1708 = vpow.pop %v1707
  %v1709 = vmul.f32 %v1686, 1.442695
  %v1710 = vpow.pop %v1709
  %v1711 = vmul.f32 %v1687, 1.442695
  %v1712 = vpow.pop %v1711
  %v1713 = vmul.f32 %v1688, 1.442695
  %v1714 = vpow.pop %v1713
  %v1715 = vmul.f32 %v1689, 1.442695
  %v1716 = vpow.pop %v1715
  %v1717 = vmul.f32 %v1690, 1.442695
  %v1718 = vpow.pop %v1717
  %v1719 = vmul.f32 %v1691, 1.442695
  %v1720 = vpow.pop %v1719
  %v1721 = vmul.f32 %v1692, 1.442695
  %v1722 = vpow.pop %v1721
  %v1723 = vmul.f32 %v1693, 1.442695
  %v1724 = vpow.pop %v1723
  %v1725 = vmul.f32 %v1694, 1.442695
  %v1726 = vpow.pop %v1725
  %v1727 = vadd.f32 %v1696, 1.0
  %v1728 = vadd.f32 %v1698, 1.0
  %v1729 = vadd.f32 %v1700, 1.0
  %v1730 = vadd.f32 %v1702, 1.0
  %v1731 = vadd.f32 %v1704, 1.0
  %v1732 = vadd.f32 %v1706, 1.0
  %v1733 = vadd.f32 %v1708, 1.0
  %v1734 = vadd.f32 %v1710, 1.0
  %v1735 = vadd.f32 %v1712, 1.0
  %v1736 = vadd.f32 %v1714, 1.0
  %v1737 = vadd.f32 %v1716, 1.0
  %v1738 = vadd.f32 %v1718, 1.0
  %v1739 = vadd.f32 %v1720, 1.0
  %v1740 = vadd.f32 %v1722, 1.0
  %v1741 = vadd.f32 %v1724, 1.0
  %v1742 = vadd.f32 %v1726, 1.0
  %v1743 = vrcp.pop %v1727
  %v1744 = vmul.f32 %v1727, %v1743
  %v1745 = vsub.f32 1.0, %v1744
  %v1746 = vmul.f32 %v1743, %v1745
  %v1747 = vadd.f32 %v1743, %v1746
  %vm1748 = vweird.f32 %v1727
  %vm1749 = vweird.f32 %v1743
  %vm1750 = vmor %vm1748, %vm1749
  %v1751 = vsel %vm1750, %v1743, %v1747
  %v1752 = vand.u32 2147483647, %v1727
  %vm1753 = vcmp.eq.f32.partialorder %v1752, 8.507059e+37
  %v1754 = vand.u32 %v1727, 2147483648
  %v1755 = vor.u32 1.1754944e-38, %v1754
  %v1756 = vsel %vm1753, %v1755, %v1751
  %v1757 = vmul.f32 1.0, %v1756
  %v1758 = vrcp.pop %v1728
  %v1759 = vmul.f32 %v1728, %v1758
  %v1760 = vsub.f32 1.0, %v1759
  %v1761 = vmul.f32 %v1758, %v1760
  %v1762 = vadd.f32 %v1758, %v1761
  %vm1763 = vweird.f32 %v1728
  %vm1764 = vweird.f32 %v1758
  %vm1765 = vmor %vm1763, %vm1764
  %v1766 = vsel %vm1765, %v1758, %v1762
  %v1767 = vand.u32 2147483647, %v1728
  %vm1768 = vcmp.eq.f32.partialorder %v1767, 8.507059e+37
  %v1769 = vand.u32 %v1728, 2147483648
  %v1770 = vor.u32 1.1754944e-38, %v1769
  %v1771 = vsel %vm1768, %v1770, %v1766
  %v1772 = vmul.f32 1.0, %v1771
  %v1773 = vrcp.pop %v1729
  %v1774 = vmul.f32 %v1729, %v1773
  %v1775 = vsub.f32 1.0, %v1774
  %v1776 = vmul.f32 %v1773, %v1775
  %v1777 = vadd.f32 %v1773, %v1776
  %vm1778 = vweird.f32 %v1729
  %vm1779 = vweird.f32 %v1773
  %vm1780 = vmor %vm1778, %vm1779
  %v1781 = vsel %vm1780, %v1773, %v1777
  %v1782 = vand.u32 2147483647, %v1729
  %vm1783 = vcmp.eq.f32.partialorder %v1782, 8.507059e+37
  %v1784 = vand.u32 %v1729, 2147483648
  %v1785 = vor.u32 1.1754944e-38, %v1784
  %v1786 = vsel %vm1783, %v1785, %v1781
  %v1787 = vmul.f32 1.0, %v1786
  %v1788 = vrcp.pop %v1730
  %v1789 = vmul.f32 %v1730, %v1788
  %v1790 = vsub.f32 1.0, %v1789
  %v1791 = vmul.f32 %v1788, %v1790
  %v1792 = vadd.f32 %v1788, %v1791
  %vm1793 = vweird.f32 %v1730
  %vm1794 = vweird.f32 %v1788
  %vm1795 = vmor %vm1793, %vm1794
  %v1796 = vsel %vm1795, %v1788, %v1792
  %v1797 = vand.u32 2147483647, %v1730
  %vm1798 = vcmp.eq.f32.partialorder %v1797, 8.507059e+37
  %v1799 = vand.u32 %v1730, 2147483648
  %v1800 = vor.u32 1.1754944e-38, %v1799
  %v1801 = vsel %vm1798, %v1800, %v1796
  %v1802 = vmul.f32 1.0, %v1801
  %v1803 = vrcp.pop %v1731
  %v1804 = vmul.f32 %v1731, %v1803
  %v1805 = vsub.f32 1.0, %v1804
  %v1806 = vmul.f32 %v1803, %v1805
  %v1807 = vadd.f32 %v1803, %v1806
  %vm1808 = vweird.f32 %v1731
  %vm1809 = vweird.f32 %v1803
  %vm1810 = vmor %vm1808, %vm1809
  %v1811 = vsel %vm1810, %v1803, %v1807
  %v1812 = vand.u32 2147483647, %v1731
  %vm1813 = vcmp.eq.f32.partialorder %v1812, 8.507059e+37
  %v1814 = vand.u32 %v1731, 2147483648
  %v1815 = vor.u32 1.1754944e-38, %v1814
  %v1816 = vsel %vm1813, %v1815, %v1811
  %v1817 = vmul.f32 1.0, %v1816
  %v1818 = vrcp.pop %v1732
  %v1819 = vmul.f32 %v1732, %v1818
  %v1820 = vsub.f32 1.0, %v1819
  %v1821 = vmul.f32 %v1818, %v1820
  %v1822 = vadd.f32 %v1818, %v1821
  %vm1823 = vweird.f32 %v1732
  %vm1824 = vweird.f32 %v1818
  %vm1825 = vmor %vm1823, %vm1824
  %v1826 = vsel %vm1825, %v1818, %v1822
  %v1827 = vand.u32 2147483647, %v1732
  %vm1828 = vcmp.eq.f32.partialorder %v1827, 8.507059e+37
  %v1829 = vand.u32 %v1732, 2147483648
  %v1830 = vor.u32 1.1754944e-38, %v1829
  %v1831 = vsel %vm1828, %v1830, %v1826
  %v1832 = vmul.f32 1.0, %v1831
  %v1833 = vrcp.pop %v1733
  %v1834 = vmul.f32 %v1733, %v1833
  %v1835 = vsub.f32 1.0, %v1834
  %v1836 = vmul.f32 %v1833, %v1835
  %v1837 = vadd.f32 %v1833, %v1836
  %vm1838 = vweird.f32 %v1733
  %vm1839 = vweird.f32 %v1833
  %vm1840 = vmor %vm1838, %vm1839
  %v1841 = vsel %vm1840, %v1833, %v1837
  %v1842 = vand.u32 2147483647, %v1733
  %vm1843 = vcmp.eq.f32.partialorder %v1842, 8.507059e+37
  %v1844 = vand.u32 %v1733, 2147483648
  %v1845 = vor.u32 1.1754944e-38, %v1844
  %v1846 = vsel %vm1843, %v1845, %v1841
  %v1847 = vmul.f32 1.0, %v1846
  %v1848 = vrcp.pop %v1734
  %v1849 = vmul.f32 %v1734, %v1848
  %v1850 = vsub.f32 1.0, %v1849
  %v1851 = vmul.f32 %v1848, %v1850
  %v1852 = vadd.f32 %v1848, %v1851
  %vm1853 = vweird.f32 %v1734
  %vm1854 = vweird.f32 %v1848
  %vm1855 = vmor %vm1853, %vm1854
  %v1856 = vsel %vm1855, %v1848, %v1852
  %v1857 = vand.u32 2147483647, %v1734
  %vm1858 = vcmp.eq.f32.partialorder %v1857, 8.507059e+37
  %v1859 = vand.u32 %v1734, 2147483648
  %v1860 = vor.u32 1.1754944e-38, %v1859
  %v1861 = vsel %vm1858, %v1860, %v1856
  %v1862 = vmul.f32 1.0, %v1861
  %v1863 = vrcp.pop %v1735
  %v1864 = vmul.f32 %v1735, %v1863
  %v1865 = vsub.f32 1.0, %v1864
  %v1866 = vmul.f32 %v1863, %v1865
  %v1867 = vadd.f32 %v1863, %v1866
  %vm1868 = vweird.f32 %v1735
  %vm1869 = vweird.f32 %v1863
  %vm1870 = vmor %vm1868, %vm1869
  %v1871 = vsel %vm1870, %v1863, %v1867
  %v1872 = vand.u32 2147483647, %v1735
  %vm1873 = vcmp.eq.f32.partialorder %v1872, 8.507059e+37
  %v1874 = vand.u32 %v1735, 2147483648
  %v1875 = vor.u32 1.1754944e-38, %v1874
  %v1876 = vsel %vm1873, %v1875, %v1871
  %v1877 = vmul.f32 1.0, %v1876
  %v1878 = vrcp.pop %v1736
  %v1879 = vmul.f32 %v1736, %v1878
  %v1880 = vsub.f32 1.0, %v1879
  %v1881 = vmul.f32 %v1878, %v1880
  %v1882 = vadd.f32 %v1878, %v1881
  %vm1883 = vweird.f32 %v1736
  %vm1884 = vweird.f32 %v1878
  %vm1885 = vmor %vm1883, %vm1884
  %v1886 = vsel %vm1885, %v1878, %v1882
  %v1887 = vand.u32 2147483647, %v1736
  %vm1888 = vcmp.eq.f32.partialorder %v1887, 8.507059e+37
  %v1889 = vand.u32 %v1736, 2147483648
  %v1890 = vor.u32 1.1754944e-38, %v1889
  %v1891 = vsel %vm1888, %v1890, %v1886
  %v1892 = vmul.f32 1.0, %v1891
  %v1893 = vrcp.pop %v1737
  %v1894 = vmul.f32 %v1737, %v1893
  %v1895 = vsub.f32 1.0, %v1894
  %v1896 = vmul.f32 %v1893, %v1895
  %v1897 = vadd.f32 %v1893, %v1896
  %vm1898 = vweird.f32 %v1737
  %vm1899 = vweird.f32 %v1893
  %vm1900 = vmor %vm1898, %vm1899
  %v1901 = vsel %vm1900, %v1893, %v1897
  %v1902 = vand.u32 2147483647, %v1737
  %vm1903 = vcmp.eq.f32.partialorder %v1902, 8.507059e+37
  %v1904 = vand.u32 %v1737, 2147483648
  %v1905 = vor.u32 1.1754944e-38, %v1904
  %v1906 = vsel %vm1903, %v1905, %v1901
  %v1907 = vmul.f32 1.0, %v1906
  %v1908 = vrcp.pop %v1738
  %v1909 = vmul.f32 %v1738, %v1908
  %v1910 = vsub.f32 1.0, %v1909
  %v1911 = vmul.f32 %v1908, %v1910
  %v1912 = vadd.f32 %v1908, %v1911
  %vm1913 = vweird.f32 %v1738
  %vm1914 = vweird.f32 %v1908
  %vm1915 = vmor %vm1913, %vm1914
  %v1916 = vsel %vm1915, %v1908, %v1912
  %v1917 = vand.u32 2147483647, %v1738
  %vm1918 = vcmp.eq.f32.partialorder %v1917, 8.507059e+37
  %v1919 = vand.u32 %v1738, 2147483648
  %v1920 = vor.u32 1.1754944e-38, %v1919
  %v1921 = vsel %vm1918, %v1920, %v1916
  %v1922 = vmul.f32 1.0, %v1921
  %v1923 = vrcp.pop %v1739
  %v1924 = vmul.f32 %v1739, %v1923
  %v1925 = vsub.f32 1.0, %v1924
  %v1926 = vmul.f32 %v1923, %v1925
  %v1927 = vadd.f32 %v1923, %v1926
  %vm1928 = vweird.f32 %v1739
  %vm1929 = vweird.f32 %v1923
  %vm1930 = vmor %vm1928, %vm1929
  %v1931 = vsel %vm1930, %v1923, %v1927
  %v1932 = vand.u32 2147483647, %v1739
  %vm1933 = vcmp.eq.f32.partialorder %v1932, 8.507059e+37
  %v1934 = vand.u32 %v1739, 2147483648
  %v1935 = vor.u32 1.1754944e-38, %v1934
  %v1936 = vsel %vm1933, %v1935, %v1931
  %v1937 = vmul.f32 1.0, %v1936
  %v1938 = vrcp.pop %v1740
  %v1939 = vmul.f32 %v1740, %v1938
  %v1940 = vsub.f32 1.0, %v1939
  %v1941 = vmul.f32 %v1938, %v1940
  %v1942 = vadd.f32 %v1938, %v1941
  %vm1943 = vweird.f32 %v1740
  %vm1944 = vweird.f32 %v1938
  %vm1945 = vmor %vm1943, %vm1944
  %v1946 = vsel %vm1945, %v1938, %v1942
  %v1947 = vand.u32 2147483647, %v1740
  %vm1948 = vcmp.eq.f32.partialorder %v1947, 8.507059e+37
  %v1949 = vand.u32 %v1740, 2147483648
  %v1950 = vor.u32 1.1754944e-38, %v1949
  %v1951 = vsel %vm1948, %v1950, %v1946
  %v1952 = vmul.f32 1.0, %v1951
  %v1953 = vrcp.pop %v1741
  %v1954 = vmul.f32 %v1741, %v1953
  %v1955 = vsub.f32 1.0, %v1954
  %v1956 = vmul.f32 %v1953, %v1955
  %v1957 = vadd.f32 %v1953, %v1956
  %vm1958 = vweird.f32 %v1741
  %vm1959 = vweird.f32 %v1953
  %vm1960 = vmor %vm1958, %vm1959
  %v1961 = vsel %vm1960, %v1953, %v1957
  %v1962 = vand.u32 2147483647, %v1741
  %vm1963 = vcmp.eq.f32.partialorder %v1962, 8.507059e+37
  %v1964 = vand.u32 %v1741, 2147483648
  %v1965 = vor.u32 1.1754944e-38, %v1964
  %v1966 = vsel %vm1963, %v1965, %v1961
  %v1967 = vmul.f32 1.0, %v1966
  %v1968 = vrcp.pop %v1742
  %v1969 = vmul.f32 %v1742, %v1968
  %v1970 = vsub.f32 1.0, %v1969
  %v1971 = vmul.f32 %v1968, %v1970
  %v1972 = vadd.f32 %v1968, %v1971
  %vm1973 = vweird.f32 %v1742
  %vm1974 = vweird.f32 %v1968
  %vm1975 = vmor %vm1973, %vm1974
  %v1976 = vsel %vm1975, %v1968, %v1972
  %v1977 = vand.u32 2147483647, %v1742
  %vm1978 = vcmp.eq.f32.partialorder %v1977, 8.507059e+37
  %v1979 = vand.u32 %v1742, 2147483648
  %v1980 = vor.u32 1.1754944e-38, %v1979
  %v1981 = vsel %vm1978, %v1980, %v1976
  %v1982 = vmul.f32 1.0, %v1981
  %v1983 = vmul.f32 %v1663, %v1757
  %v1984 = vmul.f32 %v1664, %v1772
  %v1985 = vmul.f32 %v1665, %v1787
  %v1986 = vmul.f32 %v1666, %v1802
  %v1987 = vmul.f32 %v1667, %v1817
  %v1988 = vmul.f32 %v1668, %v1832
  %v1989 = vmul.f32 %v1669, %v1847
  %v1990 = vmul.f32 %v1670, %v1862
  %v1991 = vmul.f32 %v1671, %v1877
  %v1992 = vmul.f32 %v1672, %v1892
  %v1993 = vmul.f32 %v1673, %v1907
  %v1994 = vmul.f32 %v1674, %v1922
  %v1995 = vmul.f32 %v1675, %v1937
  %v1996 = vmul.f32 %v1676, %v1952
  %v1997 = vmul.f32 %v1677, %v1967
  %v1998 = vmul.f32 %v1678, %v1982
  %1999 = vst [vmem:[%s1076 + $0x8] sm:$0xff] %v1983
  %2000 = vst [vmem:[%s1076 + $0x20] sm:$0xff] %v1984
  %2001 = vst [vmem:[%s1076 + $0x38] sm:$0xff] %v1985
  %2002 = vst [vmem:[%s1076 + $0x50] sm:$0xff] %v1986
  %2003 = vst [vmem:[%s1076 + $0x68] sm:$0xff] %v1987
  %2004 = vst [vmem:[%s1076 + $0x80] sm:$0xff] %v1988
  %2005 = vst [vmem:[%s1076 + $0x98] sm:$0xff] %v1989
  %2006 = vst [vmem:[%s1076 + $0xb0] sm:$0xff] %v1990
  %2007 = vst [vmem:[%s1076 + $0xf8] sm:$0xff] %v1991
  %2008 = vst [vmem:[%s1076 + $0x110] sm:$0xff] %v1992
  %2009 = vst [vmem:[%s1076 + $0x128] sm:$0xff] %v1993
  %2010 = vst [vmem:[%s1076 + $0x140] sm:$0xff] %v1994
  %2011 = vst [vmem:[%s1076 + $0x158] sm:$0xff] %v1995
  %2012 = vst [vmem:[%s1076 + $0x170] sm:$0xff] %v1996
  %2013 = vst [vmem:[%s1076 + $0x188] sm:$0xff] %v1997
  %2014 = vst [vmem:[%s1076 + $0x1a0] sm:$0xff] %v1998
  %s2015 = scalar_lea.vmem %s1, 24
  %v2016 = vld [vmem:[%s2015] sm:$0x7]
  %v2017 = vld [vmem:[%s2015 + $0x4] sm:$0x7]
  %v2018 = vld [vmem:[%s2015 + $0x8] sm:$0x7]
  %v2019 = vld [vmem:[#allocation2 + $0x7] sm:$0xff]
  %v2020 = vld [vmem:[#allocation2 + $0x1f] sm:$0xff]
  %v2021 = vld [vmem:[#allocation2 + $0x37] sm:$0xff]
  %v2022 = vld [vmem:[#allocation2 + $0x4f] sm:$0xff]
  %v2023 = vld [vmem:[#allocation2 + $0x67] sm:$0xff]
  %v2024 = vld [vmem:[#allocation2 + $0x7f] sm:$0xff]
  %v2025 = vld [vmem:[#allocation2 + $0x97] sm:$0xff]
  %v2026 = vld [vmem:[#allocation2 + $0xaf] sm:$0xff]
  %v2027 = vld [vmem:[#allocation2 + $0xc7] sm:$0xff]
  %v2028 = vld [vmem:[#allocation2 + $0xdf] sm:$0xff]
  %v2029 = vld [vmem:[#allocation2 + $0xf7] sm:$0xff]
  %v2030 = vld [vmem:[#allocation2 + $0x10f] sm:$0xff]
  %v2031 = vld [vmem:[#allocation2 + $0x127] sm:$0xff]
  %v2032 = vld [vmem:[#allocation2 + $0x13f] sm:$0xff]
  %v2033 = vld [vmem:[#allocation2 + $0x157] sm:$0xff]
  %v2034 = vld [vmem:[#allocation2 + $0x16f] sm:$0xff]
  %v2035 = vld [vmem:[#allocation2 + $0x187] sm:$0xff]
  %v2036 = vld [vmem:[#allocation2 + $0x19f] sm:$0xff]
  %v2037 = vld [vmem:[#allocation2 + $0x1b7] sm:$0xff]
  %v2038 = vld [vmem:[#allocation2 + $0x1cf] sm:$0xff]
  %v2039 = vld [vmem:[#allocation2 + $0x8] sm:$0xff]
  %v2040 = vld [vmem:[#allocation2 + $0x20] sm:$0xff]
  %v2041 = vld [vmem:[#allocation2 + $0x38] sm:$0xff]
  %v2042 = vld [vmem:[#allocation2 + $0x50] sm:$0xff]
  %v2043 = vld [vmem:[#allocation2 + $0x68] sm:$0xff]
  %v2044 = vld [vmem:[#allocation2 + $0x80] sm:$0xff]
  %v2045 = vld [vmem:[#allocation2 + $0x98] sm:$0xff]
  %v2046 = vld [vmem:[#allocation2 + $0xb0] sm:$0xff]
  %v2047 = vld [vmem:[#allocation2 + $0xc8] sm:$0xff]
  %v2048 = vld [vmem:[#allocation2 + $0xe0] sm:$0xff]
  %v2049 = vld [vmem:[#allocation2 + $0xf8] sm:$0xff]
  %v2050 = vld [vmem:[#allocation2 + $0x110] sm:$0xff]
  %v2051 = vld [vmem:[#allocation2 + $0x128] sm:$0xff]
  %v2052 = vld [vmem:[#allocation2 + $0x140] sm:$0xff]
  %v2053 = vld [vmem:[#allocation2 + $0x158] sm:$0xff]
  %v2054 = vld [vmem:[#allocation2 + $0x170] sm:$0xff]
  %v2055 = vld [vmem:[#allocation2 + $0x188] sm:$0xff]
  %v2056 = vld [vmem:[#allocation2 + $0x1a0] sm:$0xff]
  %v2057 = vld [vmem:[#allocation2 + $0x1b8] sm:$0xff]
  %v2058 = vld [vmem:[#allocation2 + $0x1d0] sm:$0xff]
  %v2059 = vld [vmem:[#allocation2 + $0x9] sm:$0xff]
  %v2060 = vld [vmem:[#allocation2 + $0x21] sm:$0xff]
  %v2061 = vld [vmem:[#allocation2 + $0x39] sm:$0xff]
  %v2062 = vld [vmem:[#allocation2 + $0x51] sm:$0xff]
  %v2063 = vld [vmem:[#allocation2 + $0x69] sm:$0xff]
  %v2064 = vld [vmem:[#allocation2 + $0x81] sm:$0xff]
  %v2065 = vld [vmem:[#allocation2 + $0x99] sm:$0xff]
  %v2066 = vld [vmem:[#allocation2 + $0xb1] sm:$0xff]
  %v2067 = vld [vmem:[#allocation2 + $0xc9] sm:$0xff]
  %v2068 = vld [vmem:[#allocation2 + $0xe1] sm:$0xff]
  %v2069 = vld [vmem:[#allocation2 + $0xf9] sm:$0xff]
  %v2070 = vld [vmem:[#allocation2 + $0x111] sm:$0xff]
  %v2071 = vld [vmem:[#allocation2 + $0x129] sm:$0xff]
  %v2072 = vld [vmem:[#allocation2 + $0x141] sm:$0xff]
  %v2073 = vld [vmem:[#allocation2 + $0x159] sm:$0xff]
  %v2074 = vld [vmem:[#allocation2 + $0x171] sm:$0xff]
  %v2075 = vld [vmem:[#allocation2 + $0x189] sm:$0xff]
  %v2076 = vld [vmem:[#allocation2 + $0x1a1] sm:$0xff]
  %v2077 = vld [vmem:[#allocation2 + $0x1b9] sm:$0xff]
  %v2078 = vld [vmem:[#allocation2 + $0x1d1] sm:$0xff]
  %v2079 = vperm.slane %v2016, 0
  %v2080 = vmul.f32 %v2019, %v2079
  %v2081 = vmul.f32 %v2020, %v2079
  %v2082 = vmul.f32 %v2021, %v2079
  %v2083 = vmul.f32 %v2022, %v2079
  %v2084 = vmul.f32 %v2023, %v2079
  %v2085 = vmul.f32 %v2024, %v2079
  %v2086 = vmul.f32 %v2025, %v2079
  %v2087 = vmul.f32 %v2026, %v2079
  %v2088 = vmul.f32 %v2029, %v2079
  %v2089 = vmul.f32 %v2030, %v2079
  %v2090 = vmul.f32 %v2031, %v2079
  %v2091 = vmul.f32 %v2032, %v2079
  %v2092 = vmul.f32 %v2033, %v2079
  %v2093 = vmul.f32 %v2034, %v2079
  %v2094 = vmul.f32 %v2035, %v2079
  %v2095 = vmul.f32 %v2036, %v2079
  %v2096 = vperm.slane %v2016, 1
  %v2097 = vmul.f32 %v2039, %v2096
  %v2098 = vmul.f32 %v2040, %v2096
  %v2099 = vmul.f32 %v2041, %v2096
  %v2100 = vmul.f32 %v2042, %v2096
  %v2101 = vmul.f32 %v2043, %v2096
  %v2102 = vmul.f32 %v2044, %v2096
  %v2103 = vmul.f32 %v2045, %v2096
  %v2104 = vmul.f32 %v2046, %v2096
  %v2105 = vmul.f32 %v2049, %v2096
  %v2106 = vmul.f32 %v2050, %v2096
  %v2107 = vmul.f32 %v2051, %v2096
  %v2108 = vmul.f32 %v2052, %v2096
  %v2109 = vmul.f32 %v2053, %v2096
  %v2110 = vmul.f32 %v2054, %v2096
  %v2111 = vmul.f32 %v2055, %v2096
  %v2112 = vmul.f32 %v2056, %v2096
  %v2113 = vadd.f32 %v2080, %v2097
  %v2114 = vadd.f32 %v2081, %v2098
  %v2115 = vadd.f32 %v2082, %v2099
  %v2116 = vadd.f32 %v2083, %v2100
  %v2117 = vadd.f32 %v2084, %v2101
  %v2118 = vadd.f32 %v2085, %v2102
  %v2119 = vadd.f32 %v2086, %v2103
  %v2120 = vadd.f32 %v2087, %v2104
  %v2121 = vadd.f32 %v2088, %v2105
  %v2122 = vadd.f32 %v2089, %v2106
  %v2123 = vadd.f32 %v2090, %v2107
  %v2124 = vadd.f32 %v2091, %v2108
  %v2125 = vadd.f32 %v2092, %v2109
  %v2126 = vadd.f32 %v2093, %v2110
  %v2127 = vadd.f32 %v2094, %v2111
  %v2128 = vadd.f32 %v2095, %v2112
  %v2129 = vperm.slane %v2016, 2
  %v2130 = vmul.f32 %v2059, %v2129
  %v2131 = vmul.f32 %v2060, %v2129
  %v2132 = vmul.f32 %v2061, %v2129
  %v2133 = vmul.f32 %v2062, %v2129
  %v2134 = vmul.f32 %v2063, %v2129
  %v2135 = vmul.f32 %v2064, %v2129
  %v2136 = vmul.f32 %v2065, %v2129
  %v2137 = vmul.f32 %v2066, %v2129
  %v2138 = vmul.f32 %v2069, %v2129
  %v2139 = vmul.f32 %v2070, %v2129
  %v2140 = vmul.f32 %v2071, %v2129
  %v2141 = vmul.f32 %v2072, %v2129
  %v2142 = vmul.f32 %v2073, %v2129
  %v2143 = vmul.f32 %v2074, %v2129
  %v2144 = vmul.f32 %v2075, %v2129
  %v2145 = vmul.f32 %v2076, %v2129
  %v2146 = vadd.f32 %v2113, %v2130
  %v2147 = vadd.f32 %v2114, %v2131
  %v2148 = vadd.f32 %v2115, %v2132
  %v2149 = vadd.f32 %v2116, %v2133
  %v2150 = vadd.f32 %v2117, %v2134
  %v2151 = vadd.f32 %v2118, %v2135
  %v2152 = vadd.f32 %v2119, %v2136
  %v2153 = vadd.f32 %v2120, %v2137
  %v2154 = vadd.f32 %v2121, %v2138
  %v2155 = vadd.f32 %v2122, %v2139
  %v2156 = vadd.f32 %v2123, %v2140
  %v2157 = vadd.f32 %v2124, %v2141
  %v2158 = vadd.f32 %v2125, %v2142
  %v2159 = vadd.f32 %v2126, %v2143
  %v2160 = vadd.f32 %v2127, %v2144
  %v2161 = vadd.f32 %v2128, %v2145
  %v2162 = vperm.slane %v2017, 0
  %v2163 = vmul.f32 %v2020, %v2162
  %v2164 = vmul.f32 %v2021, %v2162
  %v2165 = vmul.f32 %v2022, %v2162
  %v2166 = vmul.f32 %v2023, %v2162
  %v2167 = vmul.f32 %v2024, %v2162
  %v2168 = vmul.f32 %v2025, %v2162
  %v2169 = vmul.f32 %v2026, %v2162
  %v2170 = vmul.f32 %v2027, %v2162
  %v2171 = vmul.f32 %v2030, %v2162
  %v2172 = vmul.f32 %v2031, %v2162
  %v2173 = vmul.f32 %v2032, %v2162
  %v2174 = vmul.f32 %v2033, %v2162
  %v2175 = vmul.f32 %v2034, %v2162
  %v2176 = vmul.f32 %v2035, %v2162
  %v2177 = vmul.f32 %v2036, %v2162
  %v2178 = vmul.f32 %v2037, %v2162
  %v2179 = vadd.f32 %v2146, %v2163
  %v2180 = vadd.f32 %v2147, %v2164
  %v2181 = vadd.f32 %v2148, %v2165
  %v2182 = vadd.f32 %v2149, %v2166
  %v2183 = vadd.f32 %v2150, %v2167
  %v2184 = vadd.f32 %v2151, %v2168
  %v2185 = vadd.f32 %v2152, %v2169
  %v2186 = vadd.f32 %v2153, %v2170
  %v2187 = vadd.f32 %v2154, %v2171
  %v2188 = vadd.f32 %v2155, %v2172
  %v2189 = vadd.f32 %v2156, %v2173
  %v2190 = vadd.f32 %v2157, %v2174
  %v2191 = vadd.f32 %v2158, %v2175
  %v2192 = vadd.f32 %v2159, %v2176
  %v2193 = vadd.f32 %v2160, %v2177
  %v2194 = vadd.f32 %v2161, %v2178
  %v2195 = vperm.slane %v2017, 1
  %v2196 = vmul.f32 %v2040, %v2195
  %v2197 = vmul.f32 %v2041, %v2195
  %v2198 = vmul.f32 %v2042, %v2195
  %v2199 = vmul.f32 %v2043, %v2195
  %v2200 = vmul.f32 %v2044, %v2195
  %v2201 = vmul.f32 %v2045, %v2195
  %v2202 = vmul.f32 %v2046, %v2195
  %v2203 = vmul.f32 %v2047, %v2195
  %v2204 = vmul.f32 %v2050, %v2195
  %v2205 = vmul.f32 %v2051, %v2195
  %v2206 = vmul.f32 %v2052, %v2195
  %v2207 = vmul.f32 %v2053, %v2195
  %v2208 = vmul.f32 %v2054, %v2195
  %v2209 = vmul.f32 %v2055, %v2195
  %v2210 = vmul.f32 %v2056, %v2195
  %v2211 = vmul.f32 %v2057, %v2195
  %v2212 = vadd.f32 %v2179, %v2196
  %v2213 = vadd.f32 %v2180, %v2197
  %v2214 = vadd.f32 %v2181, %v2198
  %v2215 = vadd.f32 %v2182, %v2199
  %v2216 = vadd.f32 %v2183, %v2200
  %v2217 = vadd.f32 %v2184, %v2201
  %v2218 = vadd.f32 %v2185, %v2202
  %v2219 = vadd.f32 %v2186, %v2203
  %v2220 = vadd.f32 %v2187, %v2204
  %v2221 = vadd.f32 %v2188, %v2205
  %v2222 = vadd.f32 %v2189, %v2206
  %v2223 = vadd.f32 %v2190, %v2207
  %v2224 = vadd.f32 %v2191, %v2208
  %v2225 = vadd.f32 %v2192, %v2209
  %v2226 = vadd.f32 %v2193, %v2210
  %v2227 = vadd.f32 %v2194, %v2211
  %v2228 = vperm.slane %v2017, 2
  %v2229 = vmul.f32 %v2060, %v2228
  %v2230 = vmul.f32 %v2061, %v2228
  %v2231 = vmul.f32 %v2062, %v2228
  %v2232 = vmul.f32 %v2063, %v2228
  %v2233 = vmul.f32 %v2064, %v2228
  %v2234 = vmul.f32 %v2065, %v2228
  %v2235 = vmul.f32 %v2066, %v2228
  %v2236 = vmul.f32 %v2067, %v2228
  %v2237 = vmul.f32 %v2070, %v2228
  %v2238 = vmul.f32 %v2071, %v2228
  %v2239 = vmul.f32 %v2072, %v2228
  %v2240 = vmul.f32 %v2073, %v2228
  %v2241 = vmul.f32 %v2074, %v2228
  %v2242 = vmul.f32 %v2075, %v2228
  %v2243 = vmul.f32 %v2076, %v2228
  %v2244 = vmul.f32 %v2077, %v2228
  %v2245 = vadd.f32 %v2212, %v2229
  %v2246 = vadd.f32 %v2213, %v2230
  %v2247 = vadd.f32 %v2214, %v2231
  %v2248 = vadd.f32 %v2215, %v2232
  %v2249 = vadd.f32 %v2216, %v2233
  %v2250 = vadd.f32 %v2217, %v2234
  %v2251 = vadd.f32 %v2218, %v2235
  %v2252 = vadd.f32 %v2219, %v2236
  %v2253 = vadd.f32 %v2220, %v2237
  %v2254 = vadd.f32 %v2221, %v2238
  %v2255 = vadd.f32 %v2222, %v2239
  %v2256 = vadd.f32 %v2223, %v2240
  %v2257 = vadd.f32 %v2224, %v2241
  %v2258 = vadd.f32 %v2225, %v2242
  %v2259 = vadd.f32 %v2226, %v2243
  %v2260 = vadd.f32 %v2227, %v2244
  %v2261 = vperm.slane %v2018, 0
  %v2262 = vmul.f32 %v2021, %v2261
  %v2263 = vmul.f32 %v2022, %v2261
  %v2264 = vmul.f32 %v2023, %v2261
  %v2265 = vmul.f32 %v2024, %v2261
  %v2266 = vmul.f32 %v2025, %v2261
  %v2267 = vmul.f32 %v2026, %v2261
  %v2268 = vmul.f32 %v2027, %v2261
  %v2269 = vmul.f32 %v2028, %v2261
  %v2270 = vmul.f32 %v2031, %v2261
  %v2271 = vmul.f32 %v2032, %v2261
  %v2272 = vmul.f32 %v2033, %v2261
  %v2273 = vmul.f32 %v2034, %v2261
  %v2274 = vmul.f32 %v2035, %v2261
  %v2275 = vmul.f32 %v2036, %v2261
  %v2276 = vmul.f32 %v2037, %v2261
  %v2277 = vmul.f32 %v2038, %v2261
  %v2278 = vadd.f32 %v2245, %v2262
  %v2279 = vadd.f32 %v2246, %v2263
  %v2280 = vadd.f32 %v2247, %v2264
  %v2281 = vadd.f32 %v2248, %v2265
  %v2282 = vadd.f32 %v2249, %v2266
  %v2283 = vadd.f32 %v2250, %v2267
  %v2284 = vadd.f32 %v2251, %v2268
  %v2285 = vadd.f32 %v2252, %v2269
  %v2286 = vadd.f32 %v2253, %v2270
  %v2287 = vadd.f32 %v2254, %v2271
  %v2288 = vadd.f32 %v2255, %v2272
  %v2289 = vadd.f32 %v2256, %v2273
  %v2290 = vadd.f32 %v2257, %v2274
  %v2291 = vadd.f32 %v2258, %v2275
  %v2292 = vadd.f32 %v2259, %v2276
  %v2293 = vadd.f32 %v2260, %v2277
  %v2294 = vperm.slane %v2018, 1
  %v2295 = vmul.f32 %v2041, %v2294
  %v2296 = vmul.f32 %v2042, %v2294
  %v2297 = vmul.f32 %v2043, %v2294
  %v2298 = vmul.f32 %v2044, %v2294
  %v2299 = vmul.f32 %v2045, %v2294
  %v2300 = vmul.f32 %v2046, %v2294
  %v2301 = vmul.f32 %v2047, %v2294
  %v2302 = vmul.f32 %v2048, %v2294
  %v2303 = vmul.f32 %v2051, %v2294
  %v2304 = vmul.f32 %v2052, %v2294
  %v2305 = vmul.f32 %v2053, %v2294
  %v2306 = vmul.f32 %v2054, %v2294
  %v2307 = vmul.f32 %v2055, %v2294
  %v2308 = vmul.f32 %v2056, %v2294
  %v2309 = vmul.f32 %v2057, %v2294
  %v2310 = vmul.f32 %v2058, %v2294
  %v2311 = vadd.f32 %v2278, %v2295
  %v2312 = vadd.f32 %v2279, %v2296
  %v2313 = vadd.f32 %v2280, %v2297
  %v2314 = vadd.f32 %v2281, %v2298
  %v2315 = vadd.f32 %v2282, %v2299
  %v2316 = vadd.f32 %v2283, %v2300
  %v2317 = vadd.f32 %v2284, %v2301
  %v2318 = vadd.f32 %v2285, %v2302
  %v2319 = vadd.f32 %v2286, %v2303
  %v2320 = vadd.f32 %v2287, %v2304
  %v2321 = vadd.f32 %v2288, %v2305
  %v2322 = vadd.f32 %v2289, %v2306
  %v2323 = vadd.f32 %v2290, %v2307
  %v2324 = vadd.f32 %v2291, %v2308
  %v2325 = vadd.f32 %v2292, %v2309
  %v2326 = vadd.f32 %v2293, %v2310
  %v2327 = vperm.slane %v2018, 2
  %v2328 = vmul.f32 %v2061, %v2327
  %v2329 = vmul.f32 %v2062, %v2327
  %v2330 = vmul.f32 %v2063, %v2327
  %v2331 = vmul.f32 %v2064, %v2327
  %v2332 = vmul.f32 %v2065, %v2327
  %v2333 = vmul.f32 %v2066, %v2327
  %v2334 = vmul.f32 %v2067, %v2327
  %v2335 = vmul.f32 %v2068, %v2327
  %v2336 = vmul.f32 %v2071, %v2327
  %v2337 = vmul.f32 %v2072, %v2327
  %v2338 = vmul.f32 %v2073, %v2327
  %v2339 = vmul.f32 %v2074, %v2327
  %v2340 = vmul.f32 %v2075, %v2327
  %v2341 = vmul.f32 %v2076, %v2327
  %v2342 = vmul.f32 %v2077, %v2327
  %v2343 = vmul.f32 %v2078, %v2327
  %v2344 = vadd.f32 %v2311, %v2328
  %v2345 = vadd.f32 %v2312, %v2329
  %v2346 = vadd.f32 %v2313, %v2330
  %v2347 = vadd.f32 %v2314, %v2331
  %v2348 = vadd.f32 %v2315, %v2332
  %v2349 = vadd.f32 %v2316, %v2333
  %v2350 = vadd.f32 %v2317, %v2334
  %v2351 = vadd.f32 %v2318, %v2335
  %v2352 = vadd.f32 %v2319, %v2336
  %v2353 = vadd.f32 %v2320, %v2337
  %v2354 = vadd.f32 %v2321, %v2338
  %v2355 = vadd.f32 %v2322, %v2339
  %v2356 = vadd.f32 %v2323, %v2340
  %v2357 = vadd.f32 %v2324, %v2341
  %v2358 = vadd.f32 %v2325, %v2342
  %v2359 = vadd.f32 %v2326, %v2343
  %v2360 = vpack.c.bf16 %v2345, %v2344
  %v2361 = vpack.c.bf16 %v2347, %v2346
  %v2362 = vpack.c.bf16 %v2349, %v2348
  %v2363 = vpack.c.bf16 %v2351, %v2350
  %v2364 = vpack.c.bf16 %v2353, %v2352
  %v2365 = vpack.c.bf16 %v2355, %v2354
  %v2366 = vpack.c.bf16 %v2357, %v2356
  %v2367 = vpack.c.bf16 %v2359, %v2358
  %s2368 = scalar_lea.vmem %s2, 128
  %v2369 = vld [vmem:[%s2368] sm:$0xf]
  %v2370 = vld [vmem:[%s2368 + $0x4] sm:$0xf]
  %v2371 = vld [vmem:[%s2368 + $0x8] sm:$0xf]
  %v2372 = vld [vmem:[%s2368 + $0xc] sm:$0xf]
  %v2373 = vld [vmem:[%s2368 + $0x10] sm:$0xf]
  %v2374 = vld [vmem:[%s2368 + $0x14] sm:$0xf]
  %v2375 = vld [vmem:[%s2368 + $0x18] sm:$0xf]
  %v2376 = vld [vmem:[%s2368 + $0x1c] sm:$0xf]
  %v2377 = vld [vmem:[%s2368 + $0x20] sm:$0xf]
  %v2378 = vld [vmem:[%s2368 + $0x24] sm:$0xf]
  %v2379 = vld [vmem:[%s2368 + $0x28] sm:$0xf]
  %v2380 = vld [vmem:[%s2368 + $0x2c] sm:$0xf]
  %v2381 = vld [vmem:[%s2368 + $0x30] sm:$0xf]
  %v2382 = vld [vmem:[%s2368 + $0x34] sm:$0xf]
  %v2383 = vld [vmem:[%s2368 + $0x38] sm:$0xf]
  %v2384 = vld [vmem:[%s2368 + $0x3c] sm:$0xf]
  %v2385 = vld [vmem:[%s3] sm:$0x1]
  %v2387 = vperm.slane %v2385, 0
  %v2405 = vunpack.c.l.b16 %v2369
  %v2406 = vunpack.c.l.b16 %v2370
  %v2407 = vunpack.c.l.b16 %v2371
  %v2408 = vunpack.c.l.b16 %v2372
  %v2409 = vunpack.c.l.b16 %v2373
  %v2410 = vunpack.c.l.b16 %v2374
  %v2411 = vunpack.c.l.b16 %v2375
  %v2412 = vunpack.c.l.b16 %v2376
  %v2413 = vunpack.c.l.b16 %v2377
  %v2414 = vunpack.c.l.b16 %v2378
  %v2415 = vunpack.c.l.b16 %v2379
  %v2416 = vunpack.c.l.b16 %v2380
  %v2417 = vunpack.c.l.b16 %v2381
  %v2418 = vunpack.c.l.b16 %v2382
  %v2419 = vunpack.c.l.b16 %v2383
  %v2420 = vunpack.c.l.b16 %v2384
  %v2421 = vpack.c.b16 %v2406, %v2405
  %v2422 = vpack.c.b16 %v2408, %v2407
  %v2423 = vpack.c.b16 %v2410, %v2409
  %v2424 = vpack.c.b16 %v2412, %v2411
  %v2425 = vpack.c.b16 %v2414, %v2413
  %v2426 = vpack.c.b16 %v2416, %v2415
  %v2427 = vpack.c.b16 %v2418, %v2417
  %v2428 = vpack.c.b16 %v2420, %v2419
  %2437 = vmatpush.bf16.msra.mxu0 %v2428
  %2438 = vmatpush.bf16.msra.mxu0 %v2427
  %2439 = vmatpush.bf16.msra.mxu0 %v2426
  %2440 = vmatpush.bf16.msra.mxu0 %v2425
  %2441 = vmatpush.bf16.msra.mxu0 %v2424
  %2442 = vmatpush.bf16.msra.mxu0 %v2423
  %2443 = vmatpush.bf16.msra.mxu0 %v2422
  %2444 = vmatpush.bf16.msra.mxu0 %v2421
  %2445 = vmatmul.bf16.gmra.mxu0 %v2360
  %v2446 = vpop.f32.mrf.mxu0
  %v2447 = vadd.f32 %v2387, %v2446
  %v2448 = vpop.f32.mrf.mxu0
  %v2449 = vadd.f32 %v2387, %v2448
  %2450 = vmatmul.bf16.gmra.mxu0 %v2361
  %v2451 = vpop.f32.mrf.mxu0
  %v2452 = vadd.f32 %v2387, %v2451
  %v2453 = vpop.f32.mrf.mxu0
  %v2454 = vadd.f32 %v2387, %v2453
  %2455 = vmatmul.bf16.gmra.mxu0 %v2362
  %v2456 = vpop.f32.mrf.mxu0
  %v2457 = vadd.f32 %v2387, %v2456
  %v2458 = vpop.f32.mrf.mxu0
  %v2459 = vadd.f32 %v2387, %v2458
  %2460 = vmatmul.bf16.gmra.mxu0 %v2363
  %v2461 = vpop.f32.mrf.mxu0
  %v2462 = vadd.f32 %v2387, %v2461
  %v2463 = vpop.f32.mrf.mxu0
  %v2464 = vadd.f32 %v2387, %v2463
  %2465 = vmatmul.bf16.gmra.mxu0 %v2364
  %v2466 = vpop.f32.mrf.mxu0
  %v2467 = vadd.f32 %v2387, %v2466
  %v2468 = vpop.f32.mrf.mxu0
  %v2469 = vadd.f32 %v2387, %v2468
  %2470 = vmatmul.bf16.gmra.mxu0 %v2365
  %v2471 = vpop.f32.mrf.mxu0
  %v2472 = vadd.f32 %v2387, %v2471
  %v2473 = vpop.f32.mrf.mxu0
  %v2474 = vadd.f32 %v2387, %v2473
  %2475 = vmatmul.bf16.gmra.mxu0 %v2366
  %v2476 = vpop.f32.mrf.mxu0
  %v2477 = vadd.f32 %v2387, %v2476
  %v2478 = vpop.f32.mrf.mxu0
  %v2479 = vadd.f32 %v2387, %v2478
  %2480 = vmatmul.bf16.gmra.mxu0 %v2367
  %v2481 = vpop.f32.mrf.mxu0
  %v2482 = vadd.f32 %v2387, %v2481
  %v2483 = vpop.f32.mrf.mxu0
  %v2484 = vadd.f32 %v2387, %v2483
  %2485 = vdwg.mxu0
  %v2486 = vpack.c.bf16 %v2447, %v2447
  %v2487 = vpack.c.bf16 %v2449, %v2449
  %v2488 = vpack.c.bf16 %v2452, %v2452
  %v2489 = vpack.c.bf16 %v2454, %v2454
  %v2490 = vpack.c.bf16 %v2457, %v2457
  %v2491 = vpack.c.bf16 %v2459, %v2459
  %v2492 = vpack.c.bf16 %v2462, %v2462
  %v2493 = vpack.c.bf16 %v2464, %v2464
  %v2494 = vpack.c.bf16 %v2467, %v2467
  %v2495 = vpack.c.bf16 %v2469, %v2469
  %v2496 = vpack.c.bf16 %v2472, %v2472
  %v2497 = vpack.c.bf16 %v2474, %v2474
  %v2498 = vpack.c.bf16 %v2477, %v2477
  %v2499 = vpack.c.bf16 %v2479, %v2479
  %v2500 = vpack.c.bf16 %v2482, %v2482
  %v2501 = vpack.c.bf16 %v2484, %v2484
  %2502 = vst [vmem:[%s6] sm:$0xf] %v2486
  %2503 = vst [vmem:[%s6 + $0x4] sm:$0xf] %v2487
  %2504 = vst [vmem:[%s6 + $0x8] sm:$0xf] %v2488
  %2505 = vst [vmem:[%s6 + $0xc] sm:$0xf] %v2489
  %2506 = vst [vmem:[%s6 + $0x10] sm:$0xf] %v2490
  %2507 = vst [vmem:[%s6 + $0x14] sm:$0xf] %v2491
  %2508 = vst [vmem:[%s6 + $0x18] sm:$0xf] %v2492
  %2509 = vst [vmem:[%s6 + $0x1c] sm:$0xf] %v2493
  %2510 = vst [vmem:[%s6 + $0x20] sm:$0xf] %v2494
  %2511 = vst [vmem:[%s6 + $0x24] sm:$0xf] %v2495
  %2512 = vst [vmem:[%s6 + $0x28] sm:$0xf] %v2496
  %2513 = vst [vmem:[%s6 + $0x2c] sm:$0xf] %v2497
  %2514 = vst [vmem:[%s6 + $0x30] sm:$0xf] %v2498
  %2515 = vst [vmem:[%s6 + $0x34] sm:$0xf] %v2499
  %2516 = vst [vmem:[%s6 + $0x38] sm:$0xf] %v2500
  %2517 = vst [vmem:[%s6 + $0x3c] sm:$0xf] %v2501
  // Predicated region
  $region56: #{_lambda_.1} parent=0 // pred_check
    _
  $region57: #{_lambda_.1} parent=0 // pred_check_branch
    %2519 = sbr.rel (0) target = $region59
  $region58: #{_lambda_.1} parent=0 // pred_region
    _
  $region59: #{_lambda_.1} parent=0 // pred_fallthru
    _
  // Predicated region
  $region60: #{_lambda_.1} parent=0 // pred_check
    _
  $region61: #{_lambda_.1} parent=0 // pred_check_branch
    %2521 = sbr.rel (0) target = $region63
  $region62: #{_lambda_.1} parent=0 // pred_region
    _
  $region63: #{_lambda_.1} parent=0 // pred_fallthru
    _
  %2522 = vsyncmov [#allocation3]
  %s2523 = vpop.sfrf %2522
  %p2524 = scmp.eq.s32.totalorder %s2523, 0
  %p2525 = pneg %p2524
  %2527 = shalt.err (%p2525)

</llo_original>
